<compile_context>
chip_gen: v5e
topology: v5e:2x2
jax: 0.10.0
libtpu: 0.0.40
codegen_flags: <defaults>
</compile_context>

<pallas_src>
import functools

import numpy as np
import jax
import jax.numpy as jnp
from jax.experimental import pallas as pl
from jax.experimental.pallas import tpu as pltpu


# ----------------------------------------------------------------------------
# Pallas kernels
# ----------------------------------------------------------------------------
def _pw_kernel(x_ref, w_ref, s_ref, b_ref, o_ref):
    """1x1 conv as a row-tiled matmul (bf16 x bf16 -> f32) + folded BN + ReLU."""
    y = jnp.dot(x_ref[...], w_ref[...], preferred_element_type=jnp.float32)
    y = y * s_ref[...] + b_ref[...]
    o_ref[...] = jnp.maximum(y, 0.0).astype(o_ref.dtype)


def _gconv_se_kernel(ph_ref, w_ref, s_ref, b_ref, o_ref, sum_ref,
                     *, stride, hph, ho, wo):
    """3x3 grouped conv (with stride) + folded BN + ReLU; one image per step.

    ph_ref : (1, s*s*Hph, Wph, Cb)  stride-phase-decomposed, zero-padded
                                    activation (bf16).  Taps are unit-stride
                                    slices of this block.
    w_ref  : (9, Cb, Cb)            per-tap block-diagonal weights (bf16).
    Also emits the per-image channel sum of the activation (SE squeeze) so the
    SE pooling never re-reads the activation from HBM.
    """
    m = ho * wo
    cb = o_ref.shape[-1]
    acc = jnp.zeros((m, cb), jnp.float32)
    for kh in range(3):
        for kw in range(3):
            pi, oi = kh % stride, kh // stride
            pj, oj = kw % stride, kw // stride
            r0 = (pi * stride + pj) * hph + oi
            tap = ph_ref[0, r0:r0 + ho, oj:oj + wo, :]          # (ho, wo, Cb)
            tap = tap.reshape(m, cb)
            acc = acc + jnp.dot(tap, w_ref[kh * 3 + kw],
                                preferred_element_type=jnp.float32)
    y = jnp.maximum(acc * s_ref[...] + b_ref[...], 0.0)          # f32
    o_ref[0] = y.astype(o_ref.dtype)
    sum_ref[0] = jnp.sum(y, axis=0, keepdims=True)


def _se_gate_kernel(sum_ref, w1_ref, b1_ref, w2_ref, b2_ref, gate_ref, *, inv_hw):
    """SE excitation: pooled mean -> FC -> ReLU -> FC -> sigmoid gate (tiny)."""
    m = sum_ref[:, 0, :] * inv_hw                                # (N, Cb) f32
    h = jnp.dot(m, w1_ref[...], preferred_element_type=jnp.float32) + b1_ref[...]
    h = jnp.maximum(h, 0.0)
    z = jnp.dot(h, w2_ref[...], preferred_element_type=jnp.float32) + b2_ref[...]
    gate = pl.reciprocal(1.0 + jnp.exp(-z), approx=True)         # sigmoid via EUP
    gate_ref[...] = gate.reshape(gate_ref.shape)


def _final_proj_kernel(b_ref, g_ref, xs_ref, wc_ref, sc_ref, bc_ref,
                       wp_ref, sp_ref, bp_ref, o_ref):
    """SE-gate * (1x1 conv c + BN) + projection shortcut (conv+BN) + add + ReLU."""
    xb = (b_ref[0].astype(jnp.float32) * g_ref[0]).astype(jnp.bfloat16)
    y = jnp.dot(xb, wc_ref[...], preferred_element_type=jnp.float32)
    y = y * sc_ref[...] + bc_ref[...]
    sh = jnp.dot(xs_ref[0], wp_ref[...], preferred_element_type=jnp.float32)
    sh = sh * sp_ref[...] + bp_ref[...]
    o_ref[0] = jnp.maximum(y + sh, 0.0)


def _final_id_kernel(b_ref, g_ref, xs_ref, wc_ref, sc_ref, bc_ref, o_ref):
    """SE-gate * (1x1 conv c + BN) + identity shortcut + add + ReLU."""
    xb = (b_ref[0].astype(jnp.float32) * g_ref[0]).astype(jnp.bfloat16)
    y = jnp.dot(xb, wc_ref[...], preferred_element_type=jnp.float32)
    y = y * sc_ref[...] + bc_ref[...]
    o_ref[0] = jnp.maximum(y + xs_ref[0].astype(jnp.float32), 0.0)


# ----------------------------------------------------------------------------
# spec helpers
# ----------------------------------------------------------------------------
def _const(shape):
    """Weight/scale/bias spec: whole array, resident across the grid."""
    n = len(shape)
    return pl.BlockSpec(shape, lambda *_, _n=n: (0,) * _n)


# Rows per block for the 1x1-conv row tiling.  256 so the small self-test
# exercises multi-block pipelining; use 512-1024 for production-sized shapes
# (and shrink / raise vmem_limit_bytes on v7x's 64 MiB VMEM).
_ROW_TILE = 256


# ----------------------------------------------------------------------------
# ResBottleneckBlock forward
# ----------------------------------------------------------------------------
def res_bottleneck_block(x_nchw, p, *, stride, groups, gw, proj_block, use_se):
    f32, bf16 = jnp.float32, jnp.bfloat16
    x = jnp.transpose(x_nchw, (0, 2, 3, 1)).astype(f32)          # NCHW -> NHWC
    N, H, W, Cin = x.shape
    w_b = p["wa"].shape[1]
    w_out = p["wc"].shape[1]
    Ho = (H + 2 - 3) // stride + 1
    Wo = (W + 2 - 3) // stride + 1
    HoWo = Ho * Wo

    # ---- a: 1x1 conv + BN + ReLU (row-tiled matmul) ------------------------
    Mx = N * H * W
    tma = min(_ROW_TILE, Mx)
    a2 = pl.pallas_call(
        _pw_kernel,
        out_shape=jax.ShapeDtypeStruct((Mx, w_b), bf16),
        grid=(pl.cdiv(Mx, tma),),
        in_specs=[pl.BlockSpec((tma, Cin), lambda i: (i, 0)),
                  _const((Cin, w_b)), _const((1, w_b)), _const((1, w_b))],
        out_specs=pl.BlockSpec((tma, w_b), lambda i: (i, 0)),
        compiler_params=pltpu.CompilerParams(dimension_semantics=("parallel",)),
    )(x.astype(bf16).reshape(Mx, Cin), p["wa"].astype(bf16), p["sa"], p["ba"])

    # ---- b: 3x3 grouped conv + BN + ReLU, fused SE squeeze -----------------
    # Stride-phase decomposition of the zero-padded activation (single XLA
    # rearrangement pass; taps become unit-stride in-kernel slices).
    a4 = a2.reshape(N, H, W, w_b)
    a_pad = jnp.pad(a4, ((0, 0), (1, 1), (1, 1), (0, 0)))
    Hp = H + 2 + (-(H + 2)) % stride
    Wp = W + 2 + (-(W + 2)) % stride
    a_pad = jnp.pad(a_pad, ((0, 0), (0, Hp - (H + 2)), (0, Wp - (W + 2)), (0, 0)))
    Hph, Wph = Hp // stride, Wp // stride
    phases = a_pad.reshape(N, Hph, stride, Wph, stride, w_b)
    phases = phases.transpose(0, 2, 4, 1, 3, 5)
    phases = phases.reshape(N, stride * stride * Hph, Wph, w_b)

    # Per-tap block-diagonal weights -> one lane-dense MXU matmul per tap.
    wbf = p["wb"].reshape(9, groups, gw, gw)
    wbd = jnp.zeros((9, w_b, w_b), f32)
    for g in range(groups):
        wbd = wbd.at[:, g * gw:(g + 1) * gw, g * gw:(g + 1) * gw].set(wbf[:, g])
    wbd = wbd.astype(bf16)

    # TODO(synk): for very large H*W, tile output rows with a manual halo DMA
    #             (pl.ANY + make_async_copy) instead of one image per step.
    gk = functools.partial(_gconv_se_kernel, stride=stride, hph=Hph, ho=Ho, wo=Wo)
    b3, bsum = pl.pallas_call(
        gk,
        out_shape=(jax.ShapeDtypeStruct((N, HoWo, w_b), bf16),
                   jax.ShapeDtypeStruct((N, 1, w_b), f32)),
        grid=(N,),
        in_specs=[pl.BlockSpec((1, stride * stride * Hph, Wph, w_b),
                               lambda n: (n, 0, 0, 0)),
                  _const((9, w_b, w_b)), _const((1, w_b)), _const((1, w_b))],
        out_specs=(pl.BlockSpec((1, HoWo, w_b), lambda n: (n, 0, 0)),
                   pl.BlockSpec((1, 1, w_b), lambda n: (n, 0, 0))),
        compiler_params=pltpu.CompilerParams(dimension_semantics=("parallel",)),
    )(phases, wbd, p["sb"], p["bb"])

    # ---- SE gate (tiny; only the per-image gate, applied in the final kernel)
    if use_se:
        w_se = p["w1"].shape[1]
        gate = pl.pallas_call(
            functools.partial(_se_gate_kernel, inv_hw=1.0 / HoWo),
            out_shape=jax.ShapeDtypeStruct((N, 1, w_b), f32),
            grid=(1,),
            in_specs=[_const((N, 1, w_b)), _const((w_b, w_se)), _const((1, w_se)),
                      _const((w_se, w_b)), _const((1, w_b))],
            out_specs=_const((N, 1, w_b)),
        )(bsum, p["w1"], p["b1"], p["w2"], p["b2"])
    else:
        gate = jnp.ones((N, 1, w_b), f32)

    # ---- c: gate * (1x1 conv + BN) + shortcut + residual add + ReLU --------
    tmf = min(512, HoWo)
    T = pl.cdiv(HoWo, tmf)
    if proj_block:
        xs = x[:, ::stride, ::stride, :].reshape(N, HoWo, Cin).astype(bf16)
        kern = _final_proj_kernel
        extra_args = (p["wp"].astype(bf16), p["sp"], p["bp"])
        extra_specs = [_const((Cin, w_out)), _const((1, w_out)), _const((1, w_out))]
        cxs = Cin
    else:
        if stride != 1 or Cin != w_out:
            raise ValueError("identity shortcut requires stride==1 and w_in==w_out")
        xs = x.reshape(N, HoWo, w_out).astype(bf16)
        kern = _final_id_kernel
        extra_args, extra_specs = (), []
        cxs = w_out

    y3 = pl.pallas_call(
        kern,
        out_shape=jax.ShapeDtypeStruct((N, HoWo, w_out), f32),
        grid=(N, T),
        in_specs=[pl.BlockSpec((1, tmf, w_b), lambda n, t: (n, t, 0)),
                  pl.BlockSpec((1, 1, w_b), lambda n, t: (n, 0, 0)),
                  pl.BlockSpec((1, tmf, cxs), lambda n, t: (n, t, 0)),
                  _const((w_b, w_out)), _const((1, w_out)), _const((1, w_out)),
                  *extra_specs],
        out_specs=pl.BlockSpec((1, tmf, w_out), lambda n, t: (n, t, 0)),
        compiler_params=pltpu.CompilerParams(
            dimension_semantics=("parallel", "parallel")),
    )(b3, gate, xs, p["wc"].astype(bf16), p["sc"], p["bc"], *extra_args)

    y = y3.reshape(N, Ho, Wo, w_out)
    return jnp.transpose(y, (0, 3, 1, 2))                        # NHWC -> NCHW


# ----------------------------------------------------------------------------
# Deterministic parameter initialization (BN folded to eval-mode scale/bias)
# ----------------------------------------------------------------------------
def make_params(key, w_in, w_out, bm, gw, se_r, eps=1e-5):
    w_b = int(round(w_out * bm))
    groups = w_b // gw
    w_se = int(round(w_in * se_r)) if se_r else 0
    ks = list(jax.random.split(key, 32))

    def conv_w(k, cin, cout):
        return jax.random.normal(k, (cin, cout), jnp.float32) / np.sqrt(cin)

    def bn_fold(kg, kb, km, kv, c):
        gamma = 1.0 + 0.1 * jax.random.normal(kg, (1, c), jnp.float32)
        beta = 0.1 * jax.random.normal(kb, (1, c), jnp.float32)
        mean = 0.1 * jax.random.normal(km, (1, c), jnp.float32)
        var = jnp.abs(jax.random.normal(kv, (1, c), jnp.float32)) + 0.5
        scale = gamma / jnp.sqrt(var + eps)
        return scale, beta - mean * scale

    p = {}
    p["wa"] = conv_w(ks[0], w_in, w_b)
    p["sa"], p["ba"] = bn_fold(ks[1], ks[2], ks[3], ks[4], w_b)
    p["wb"] = jax.random.normal(ks[5], (3, 3, groups, gw, gw), jnp.float32) / np.sqrt(9 * gw)
    p["sb"], p["bb"] = bn_fold(ks[6], ks[7], ks[8], ks[9], w_b)
    if se_r:
        p["w1"] = conv_w(ks[10], w_b, w_se)
        p["b1"] = 0.1 * jax.random.normal(ks[11], (1, w_se), jnp.float32)
        p["w2"] = conv_w(ks[12], w_se, w_b)
        p["b2"] = 0.1 * jax.random.normal(ks[13], (1, w_b), jnp.float32)
    p["wc"] = conv_w(ks[14], w_b, w_out)
    p["sc"], p["bc"] = bn_fold(ks[15], ks[16], ks[17], ks[18], w_out)
    p["wp"] = conv_w(ks[19], w_in, w_out)
    p["sp"], p["bp"] = bn_fold(ks[20], ks[21], ks[22], ks[23], w_out)
    return p, w_b, groups


# ----------------------------------------------------------------------------
# Reference forward (mirrors the kernel's bf16 matmul / f32 epilogue numerics)
# ----------------------------------------------------------------------------
def ref_forward(x_nchw, p, *, stride, groups, gw, proj_block, use_se):
    f32, bf16 = jnp.float32, jnp.bfloat16
    x = jnp.transpose(x_nchw, (0, 2, 3, 1)).astype(f32)
    a = jnp.einsum("nhwc,cd->nhwd", x.astype(bf16), p["wa"].astype(bf16),
                   preferred_element_type=f32)
    a = jnp.maximum(a * p["sa"] + p["ba"], 0.0).astype(bf16)
    rhs = jnp.transpose(p["wb"], (0, 1, 3, 2, 4)).reshape(3, 3, gw, groups * gw)
    b = jax.lax.conv_general_dilated(
        a, rhs.astype(bf16), window_strides=(stride, stride),
        padding=((1, 1), (1, 1)),
        dimension_numbers=("NHWC", "HWIO", "NHWC"),
        feature_group_count=groups, preferred_element_type=f32)
    b = jnp.maximum(b * p["sb"] + p["bb"], 0.0)                  # f32
    if use_se:
        m = jnp.mean(b, axis=(1, 2))
        h = jnp.maximum(m @ p["w1"] + p["b1"], 0.0)
        gate = jax.nn.sigmoid(h @ p["w2"] + p["b2"])
    else:
        gate = jnp.ones((b.shape[0], b.shape[-1]), f32)
    bb = (b.astype(bf16).astype(f32) * gate[:, None, None, :]).astype(bf16)
    c = jnp.einsum("nhwc,cd->nhwd", bb, p["wc"].astype(bf16),
                   preferred_element_type=f32) * p["sc"] + p["bc"]
    if proj_block:
        xs = x[:, ::stride, ::stride, :].astype(bf16)
        short = (jnp.einsum("nhwc,cd->nhwd", xs, p["wp"].astype(bf16),
                            preferred_element_type=f32) * p["sp"] + p["bp"])
    else:
        short = x.astype(bf16).astype(f32)
    y = jnp.maximum(c + short, 0.0)
    return jnp.transpose(y, (0, 3, 1, 2))


# ----------------------------------------------------------------------------
if __name__ == "__main__":
    # ResBottleneckBlock(w_in=32, w_out=64, stride=2, bm=1.0, gw=16, se_r=0.25)
    N, w_in, H, W = 2, 32, 16, 16
    w_out, stride, bm, gw, se_r = 64, 2, 1.0, 16, 0.25
    proj_block = (w_in != w_out) or (stride != 1)

    key = jax.random.PRNGKey(0)
    kx, kp = jax.random.split(key)
    x = jax.random.normal(kx, (N, w_in, H, W), jnp.float32)      # NCHW like PyTorch
    params, w_b, groups = make_params(kp, w_in, w_out, bm, gw, se_r)

    fwd = jax.jit(functools.partial(
        res_bottleneck_block, stride=stride, groups=groups, gw=gw,
        proj_block=proj_block, use_se=bool(se_r)))
    y = jax.block_until_ready(fwd(x, params))

    y_ref = ref_forward(x, params, stride=stride, groups=groups, gw=gw,
                        proj_block=proj_block, use_se=bool(se_r))
    np.testing.assert_allclose(np.asarray(y), np.asarray(y_ref),
                               rtol=2e-2, atol=2e-2)

    print("KERNEL_OK")
</pallas_src>

<mosaic_0001>
module attributes {stable_mosaic.version = 11 : i64} {
  func.func @_pw_kernel(%arg0: i32, %arg1: memref<256x32xbf16, #tpu.memory_space<vmem>>, %arg2: memref<32x64xbf16, #tpu.memory_space<vmem>>, %arg3: memref<1x64xf32, #tpu.memory_space<vmem>>, %arg4: memref<1x64xf32, #tpu.memory_space<vmem>>, %arg5: memref<256x64xbf16, #tpu.memory_space<vmem>>) attributes {dimension_semantics = [#tpu.dimension_semantics<parallel>], iteration_bounds = array<i64: 2>, scalar_prefetch = 0 : i64, scratch_operands = 0 : i64, tpu.core_type = #tpu.core_type<tc>, window_params = [{transform_indices = @transform_0, window_bounds = array<i64: 256, 32>}, {pipeline_mode = #tpu.pipeline_mode<synchronous>, transform_indices = @transform_1, window_bounds = array<i64: 32, 64>}, {pipeline_mode = #tpu.pipeline_mode<synchronous>, transform_indices = @transform_2, window_bounds = array<i64: 1, 64>}, {pipeline_mode = #tpu.pipeline_mode<synchronous>, transform_indices = @transform_3, window_bounds = array<i64: 1, 64>}, {transform_indices = @transform_4, window_bounds = array<i64: 256, 64>}]} {
    %c0 = arith.constant 0 : index
    %c0_0 = arith.constant 0 : index
    %0 = vector.load %arg1[%c0, %c0_0] : memref<256x32xbf16, #tpu.memory_space<vmem>>, vector<256x32xbf16>
    %c0_1 = arith.constant 0 : index
    %c0_2 = arith.constant 0 : index
    %1 = vector.load %arg2[%c0_1, %c0_2] : memref<32x64xbf16, #tpu.memory_space<vmem>>, vector<32x64xbf16>
    %cst = arith.constant dense<0.000000e+00> : vector<256x64xf32>
    %2 = tpu.matmul %0, %1, %cst {dimension_numbers = #tpu.dot_dimension_numbers<[1], [0], [0], [1], [0, 0, 1, 1], [], []>} : vector<256x32xbf16>, vector<32x64xbf16>, vector<256x64xf32> -> vector<256x64xf32>
    %c0_3 = arith.constant 0 : index
    %c0_4 = arith.constant 0 : index
    %3 = vector.load %arg3[%c0_3, %c0_4] : memref<1x64xf32, #tpu.memory_space<vmem>>, vector<1x64xf32>
    %4 = vector.broadcast %3 : vector<1x64xf32> to vector<256x64xf32>
    %5 = arith.mulf %2, %4 : vector<256x64xf32>
    %c0_5 = arith.constant 0 : index
    %c0_6 = arith.constant 0 : index
    %6 = vector.load %arg4[%c0_5, %c0_6] : memref<1x64xf32, #tpu.memory_space<vmem>>, vector<1x64xf32>
    %7 = vector.broadcast %6 : vector<1x64xf32> to vector<256x64xf32>
    %8 = arith.addf %5, %7 : vector<256x64xf32>
    %cst_7 = arith.constant 0.000000e+00 : f32
    %9 = vector.broadcast %cst_7 : f32 to vector<256x64xf32>
    %10 = arith.maximumf %8, %9 : vector<256x64xf32>
    %11 = arith.truncf %10 : vector<256x64xf32> to vector<256x64xbf16>
    %c0_8 = arith.constant 0 : index
    %c0_9 = arith.constant 0 : index
    %12 = vector.load %arg5[%c0_8, %c0_9] : memref<256x64xbf16, #tpu.memory_space<vmem>>, vector<256x64xbf16>
    tpu.vector_store %arg5[%c0_8, %c0_9], %11 {strides = array<i32>} : memref<256x64xbf16, #tpu.memory_space<vmem>>, vector<256x64xbf16>,
    return
  }
  func.func @transform_0(%arg0: i32) -> (i32, i32) {
    %c0_i32 = arith.constant 0 : i32
    %c0_i32_0 = arith.constant 0 : i32
    return %arg0, %c0_i32 : i32, i32
  }
  func.func @transform_1(%arg0: i32) -> (i32, i32) {
    %c0_i32 = arith.constant 0 : i32
    %c0_i32_0 = arith.constant 0 : i32
    %c0_i32_1 = arith.constant 0 : i32
    return %c0_i32, %c0_i32_0 : i32, i32
  }
  func.func @transform_2(%arg0: i32) -> (i32, i32) {
    %c0_i32 = arith.constant 0 : i32
    %c0_i32_0 = arith.constant 0 : i32
    %c0_i32_1 = arith.constant 0 : i32
    return %c0_i32, %c0_i32_0 : i32, i32
  }
  func.func @transform_3(%arg0: i32) -> (i32, i32) {
    %c0_i32 = arith.constant 0 : i32
    %c0_i32_0 = arith.constant 0 : i32
    %c0_i32_1 = arith.constant 0 : i32
    return %c0_i32, %c0_i32_0 : i32, i32
  }
  func.func @transform_4(%arg0: i32) -> (i32, i32) {
    %c0_i32 = arith.constant 0 : i32
    %c0_i32_0 = arith.constant 0 : i32
    return %arg0, %c0_i32 : i32, i32
  }
}

module attributes {stable_mosaic.version = 11 : i64} {
  func.func @_gconv_se_kernel(%arg0: i32, %arg1: memref<1x36x9x64xbf16, #tpu.memory_space<vmem>>, %arg2: memref<9x64x64xbf16, #tpu.memory_space<vmem>>, %arg3: memref<1x64xf32, #tpu.memory_space<vmem>>, %arg4: memref<1x64xf32, #tpu.memory_space<vmem>>, %arg5: memref<1x64x64xbf16, #tpu.memory_space<vmem>>, %arg6: memref<1x1x64xf32, #tpu.memory_space<vmem>>) attributes {dimension_semantics = [#tpu.dimension_semantics<parallel>], iteration_bounds = array<i64: 2>, scalar_prefetch = 0 : i64, scratch_operands = 0 : i64, tpu.core_type = #tpu.core_type<tc>, window_params = [{transform_indices = @transform_0, window_bounds = array<i64: 1, 36, 9, 64>}, {pipeline_mode = #tpu.pipeline_mode<synchronous>, transform_indices = @transform_1, window_bounds = array<i64: 9, 64, 64>}, {pipeline_mode = #tpu.pipeline_mode<synchronous>, transform_indices = @transform_2, window_bounds = array<i64: 1, 64>}, {pipeline_mode = #tpu.pipeline_mode<synchronous>, transform_indices = @transform_3, window_bounds = array<i64: 1, 64>}, {transform_indices = @transform_4, window_bounds = array<i64: 1, 64, 64>}, {transform_indices = @transform_5, window_bounds = array<i64: 1, 1, 64>}]} {
    %cst = arith.constant 0.000000e+00 : f32
    %0 = vector.broadcast %cst : f32 to vector<64x64xf32>
    %c0 = arith.constant 0 : index
    %c0_0 = arith.constant 0 : index
    %c0_1 = arith.constant 0 : index
    %c0_2 = arith.constant 0 : index
    %1 = vector.load %arg1[%c0, %c0_0, %c0_1, %c0_2] : memref<1x36x9x64xbf16, #tpu.memory_space<vmem>>, vector<1x8x8x64xbf16>
    %2 = vector.shape_cast %1 : vector<1x8x8x64xbf16> to vector<8x8x64xbf16>
    %3 = vector.shape_cast %2 : vector<8x8x64xbf16> to vector<64x64xbf16>
    %c0_3 = arith.constant 0 : index
    %c0_4 = arith.constant 0 : index
    %c0_5 = arith.constant 0 : index
    %4 = vector.load %arg2[%c0_3, %c0_4, %c0_5] : memref<9x64x64xbf16, #tpu.memory_space<vmem>>, vector<1x64x64xbf16>
    %5 = vector.shape_cast %4 : vector<1x64x64xbf16> to vector<64x64xbf16>
    %cst_6 = arith.constant dense<0.000000e+00> : vector<64x64xf32>
    %6 = tpu.matmul %3, %5, %cst_6 {dimension_numbers = #tpu.dot_dimension_numbers<[1], [0], [0], [1], [0, 0, 1, 1], [], []>} : vector<64x64xbf16>, vector<64x64xbf16>, vector<64x64xf32> -> vector<64x64xf32>
    %7 = arith.addf %0, %6 : vector<64x64xf32>
    %c0_7 = arith.constant 0 : index
    %c9 = arith.constant 9 : index
    %c0_8 = arith.constant 0 : index
    %c0_9 = arith.constant 0 : index
    %8 = vector.load %arg1[%c0_7, %c9, %c0_8, %c0_9] : memref<1x36x9x64xbf16, #tpu.memory_space<vmem>>, vector<1x8x8x64xbf16>
    %9 = vector.shape_cast %8 : vector<1x8x8x64xbf16> to vector<8x8x64xbf16>
    %10 = vector.shape_cast %9 : vector<8x8x64xbf16> to vector<64x64xbf16>
    %c1 = arith.constant 1 : index
    %c0_10 = arith.constant 0 : index
    %c0_11 = arith.constant 0 : index
    %11 = vector.load %arg2[%c1, %c0_10, %c0_11] : memref<9x64x64xbf16, #tpu.memory_space<vmem>>, vector<1x64x64xbf16>
    %12 = vector.shape_cast %11 : vector<1x64x64xbf16> to vector<64x64xbf16>
    %cst_12 = arith.constant dense<0.000000e+00> : vector<64x64xf32>
    %13 = tpu.matmul %10, %12, %cst_12 {dimension_numbers = #tpu.dot_dimension_numbers<[1], [0], [0], [1], [0, 0, 1, 1], [], []>} : vector<64x64xbf16>, vector<64x64xbf16>, vector<64x64xf32> -> vector<64x64xf32>
    %14 = arith.addf %7, %13 : vector<64x64xf32>
    %c0_13 = arith.constant 0 : index
    %c0_14 = arith.constant 0 : index
    %c1_15 = arith.constant 1 : index
    %c0_16 = arith.constant 0 : index
    %15 = vector.load %arg1[%c0_13, %c0_14, %c1_15, %c0_16] : memref<1x36x9x64xbf16, #tpu.memory_space<vmem>>, vector<1x8x8x64xbf16>
    %16 = vector.shape_cast %15 : vector<1x8x8x64xbf16> to vector<8x8x64xbf16>
    %17 = vector.shape_cast %16 : vector<8x8x64xbf16> to vector<64x64xbf16>
    %c2 = arith.constant 2 : index
    %c0_17 = arith.constant 0 : index
    %c0_18 = arith.constant 0 : index
    %18 = vector.load %arg2[%c2, %c0_17, %c0_18] : memref<9x64x64xbf16, #tpu.memory_space<vmem>>, vector<1x64x64xbf16>
    %19 = vector.shape_cast %18 : vector<1x64x64xbf16> to vector<64x64xbf16>
    %cst_19 = arith.constant dense<0.000000e+00> : vector<64x64xf32>
    %20 = tpu.matmul %17, %19, %cst_19 {dimension_numbers = #tpu.dot_dimension_numbers<[1], [0], [0], [1], [0, 0, 1, 1], [], []>} : vector<64x64xbf16>, vector<64x64xbf16>, vector<64x64xf32> -> vector<64x64xf32>
    %21 = arith.addf %14, %20 : vector<64x64xf32>
    %c0_20 = arith.constant 0 : index
    %c18 = arith.constant 18 : index
    %c0_21 = arith.constant 0 : index
    %c0_22 = arith.constant 0 : index
    %22 = vector.load %arg1[%c0_20, %c18, %c0_21, %c0_22] : memref<1x36x9x64xbf16, #tpu.memory_space<vmem>>, vector<1x8x8x64xbf16>
    %23 = vector.shape_cast %22 : vector<1x8x8x64xbf16> to vector<8x8x64xbf16>
    %24 = vector.shape_cast %23 : vector<8x8x64xbf16> to vector<64x64xbf16>
    %c3 = arith.constant 3 : index
    %c0_23 = arith.constant 0 : index
    %c0_24 = arith.constant 0 : index
    %25 = vector.load %arg2[%c3, %c0_23, %c0_24] : memref<9x64x64xbf16, #tpu.memory_space<vmem>>, vector<1x64x64xbf16>
    %26 = vector.shape_cast %25 : vector<1x64x64xbf16> to vector<64x64xbf16>
    %cst_25 = arith.constant dense<0.000000e+00> : vector<64x64xf32>
    %27 = tpu.matmul %24, %26, %cst_25 {dimension_numbers = #tpu.dot_dimension_numbers<[1], [0], [0], [1], [0, 0, 1, 1], [], []>} : vector<64x64xbf16>, vector<64x64xbf16>, vector<64x64xf32> -> vector<64x64xf32>
    %28 = arith.addf %21, %27 : vector<64x64xf32>
    %c0_26 = arith.constant 0 : index
    %c27 = arith.constant 27 : index
    %c0_27 = arith.constant 0 : index
    %c0_28 = arith.constant 0 : index
    %29 = vector.load %arg1[%c0_26, %c27, %c0_27, %c0_28] : memref<1x36x9x64xbf16, #tpu.memory_space<vmem>>, vector<1x8x8x64xbf16>
    %30 = vector.shape_cast %29 : vector<1x8x8x64xbf16> to vector<8x8x64xbf16>
    %31 = vector.shape_cast %30 : vector<8x8x64xbf16> to vector<64x64xbf16>
    %c4 = arith.constant 4 : index
    %c0_29 = arith.constant 0 : index
    %c0_30 = arith.constant 0 : index
    %32 = vector.load %arg2[%c4, %c0_29, %c0_30] : memref<9x64x64xbf16, #tpu.memory_space<vmem>>, vector<1x64x64xbf16>
    %33 = vector.shape_cast %32 : vector<1x64x64xbf16> to vector<64x64xbf16>
    %cst_31 = arith.constant dense<0.000000e+00> : vector<64x64xf32>
    %34 = tpu.matmul %31, %33, %cst_31 {dimension_numbers = #tpu.dot_dimension_numbers<[1], [0], [0], [1], [0, 0, 1, 1], [], []>} : vector<64x64xbf16>, vector<64x64xbf16>, vector<64x64xf32> -> vector<64x64xf32>
    %35 = arith.addf %28, %34 : vector<64x64xf32>
    %c0_32 = arith.constant 0 : index
    %c18_33 = arith.constant 18 : index
    %c1_34 = arith.constant 1 : index
    %c0_35 = arith.constant 0 : index
    %36 = vector.load %arg1[%c0_32, %c18_33, %c1_34, %c0_35] : memref<1x36x9x64xbf16, #tpu.memory_space<vmem>>, vector<1x8x8x64xbf16>
    %37 = vector.shape_cast %36 : vector<1x8x8x64xbf16> to vector<8x8x64xbf16>
    %38 = vector.shape_cast %37 : vector<8x8x64xbf16> to vector<64x64xbf16>
    %c5 = arith.constant 5 : index
    %c0_36 = arith.constant 0 : index
    %c0_37 = arith.constant 0 : index
    %39 = vector.load %arg2[%c5, %c0_36, %c0_37] : memref<9x64x64xbf16, #tpu.memory_space<vmem>>, vector<1x64x64xbf16>
    %40 = vector.shape_cast %39 : vector<1x64x64xbf16> to vector<64x64xbf16>
    %cst_38 = arith.constant dense<0.000000e+00> : vector<64x64xf32>
    %41 = tpu.matmul %38, %40, %cst_38 {dimension_numbers = #tpu.dot_dimension_numbers<[1], [0], [0], [1], [0, 0, 1, 1], [], []>} : vector<64x64xbf16>, vector<64x64xbf16>, vector<64x64xf32> -> vector<64x64xf32>
    %42 = arith.addf %35, %41 : vector<64x64xf32>
    %c0_39 = arith.constant 0 : index
    %c1_40 = arith.constant 1 : index
    %c0_41 = arith.constant 0 : index
    %c0_42 = arith.constant 0 : index
    %43 = vector.load %arg1[%c0_39, %c1_40, %c0_41, %c0_42] : memref<1x36x9x64xbf16, #tpu.memory_space<vmem>>, vector<1x8x8x64xbf16>
    %44 = vector.shape_cast %43 : vector<1x8x8x64xbf16> to vector<8x8x64xbf16>
    %45 = vector.shape_cast %44 : vector<8x8x64xbf16> to vector<64x64xbf16>
    %c6 = arith.constant 6 : index
    %c0_43 = arith.constant 0 : index
    %c0_44 = arith.constant 0 : index
    %46 = vector.load %arg2[%c6, %c0_43, %c0_44] : memref<9x64x64xbf16, #tpu.memory_space<vmem>>, vector<1x64x64xbf16>
    %47 = vector.shape_cast %46 : vector<1x64x64xbf16> to vector<64x64xbf16>
    %cst_45 = arith.constant dense<0.000000e+00> : vector<64x64xf32>
    %48 = tpu.matmul %45, %47, %cst_45 {dimension_numbers = #tpu.dot_dimension_numbers<[1], [0], [0], [1], [0, 0, 1, 1], [], []>} : vector<64x64xbf16>, vector<64x64xbf16>, vector<64x64xf32> -> vector<64x64xf32>
    %49 = arith.addf %42, %48 : vector<64x64xf32>
    %c0_46 = arith.constant 0 : index
    %c10 = arith.constant 10 : index
    %c0_47 = arith.constant 0 : index
    %c0_48 = arith.constant 0 : index
    %50 = vector.load %arg1[%c0_46, %c10, %c0_47, %c0_48] : memref<1x36x9x64xbf16, #tpu.memory_space<vmem>>, vector<1x8x8x64xbf16>
    %51 = vector.shape_cast %50 : vector<1x8x8x64xbf16> to vector<8x8x64xbf16>
    %52 = vector.shape_cast %51 : vector<8x8x64xbf16> to vector<64x64xbf16>
    %c7 = arith.constant 7 : index
    %c0_49 = arith.constant 0 : index
    %c0_50 = arith.constant 0 : index
    %53 = vector.load %arg2[%c7, %c0_49, %c0_50] : memref<9x64x64xbf16, #tpu.memory_space<vmem>>, vector<1x64x64xbf16>
    %54 = vector.shape_cast %53 : vector<1x64x64xbf16> to vector<64x64xbf16>
    %cst_51 = arith.constant dense<0.000000e+00> : vector<64x64xf32>
    %55 = tpu.matmul %52, %54, %cst_51 {dimension_numbers = #tpu.dot_dimension_numbers<[1], [0], [0], [1], [0, 0, 1, 1], [], []>} : vector<64x64xbf16>, vector<64x64xbf16>, vector<64x64xf32> -> vector<64x64xf32>
    %56 = arith.addf %49, %55 : vector<64x64xf32>
    %c0_52 = arith.constant 0 : index
    %c1_53 = arith.constant 1 : index
    %c1_54 = arith.constant 1 : index
    %c0_55 = arith.constant 0 : index
    %57 = vector.load %arg1[%c0_52, %c1_53, %c1_54, %c0_55] : memref<1x36x9x64xbf16, #tpu.memory_space<vmem>>, vector<1x8x8x64xbf16>
    %58 = vector.shape_cast %57 : vector<1x8x8x64xbf16> to vector<8x8x64xbf16>
    %59 = vector.shape_cast %58 : vector<8x8x64xbf16> to vector<64x64xbf16>
    %c8 = arith.constant 8 : index
    %c0_56 = arith.constant 0 : index
    %c0_57 = arith.constant 0 : index
    %60 = vector.load %arg2[%c8, %c0_56, %c0_57] : memref<9x64x64xbf16, #tpu.memory_space<vmem>>, vector<1x64x64xbf16>
    %61 = vector.shape_cast %60 : vector<1x64x64xbf16> to vector<64x64xbf16>
    %cst_58 = arith.constant dense<0.000000e+00> : vector<64x64xf32>
    %62 = tpu.matmul %59, %61, %cst_58 {dimension_numbers = #tpu.dot_dimension_numbers<[1], [0], [0], [1], [0, 0, 1, 1], [], []>} : vector<64x64xbf16>, vector<64x64xbf16>, vector<64x64xf32> -> vector<64x64xf32>
    %63 = arith.addf %56, %62 : vector<64x64xf32>
    %c0_59 = arith.constant 0 : index
    %c0_60 = arith.constant 0 : index
    %64 = vector.load %arg3[%c0_59, %c0_60] : memref<1x64xf32, #tpu.memory_space<vmem>>, vector<1x64xf32>
    %65 = vector.broadcast %64 : vector<1x64xf32> to vector<64x64xf32>
    %66 = arith.mulf %63, %65 : vector<64x64xf32>
    %c0_61 = arith.constant 0 : index
    %c0_62 = arith.constant 0 : index
    %67 = vector.load %arg4[%c0_61, %c0_62] : memref<1x64xf32, #tpu.memory_space<vmem>>, vector<1x64xf32>
    %68 = vector.broadcast %67 : vector<1x64xf32> to vector<64x64xf32>
    %69 = arith.addf %66, %68 : vector<64x64xf32>
    %cst_63 = arith.constant 0.000000e+00 : f32
    %70 = vector.broadcast %cst_63 : f32 to vector<64x64xf32>
    %71 = arith.maximumf %69, %70 : vector<64x64xf32>
    %72 = arith.truncf %71 : vector<64x64xf32> to vector<64x64xbf16>
    %c0_64 = arith.constant 0 : index
    %c0_65 = arith.constant 0 : index
    %c0_66 = arith.constant 0 : index
    %73 = vector.load %arg5[%c0_64, %c0_65, %c0_66] : memref<1x64x64xbf16, #tpu.memory_space<vmem>>, vector<1x64x64xbf16>
    %74 = vector.shape_cast %73 : vector<1x64x64xbf16> to vector<64x64xbf16>
    %75 = vector.shape_cast %72 : vector<64x64xbf16> to vector<1x64x64xbf16>
    tpu.vector_store %arg5[%c0_64, %c0_65, %c0_66], %75 {strides = array<i32>} : memref<1x64x64xbf16, #tpu.memory_space<vmem>>, vector<1x64x64xbf16>,
    %cst_67 = arith.constant dense<0.000000e+00> : vector<64xf32>
    %76 = vector.multi_reduction <add>, %71, %cst_67 [0] : vector<64x64xf32> to vector<64xf32>
    %77 = vector.shape_cast %76 : vector<64xf32> to vector<1x64xf32>
    %c0_68 = arith.constant 0 : index
    %c0_69 = arith.constant 0 : index
    %c0_70 = arith.constant 0 : index
    %78 = vector.load %arg6[%c0_68, %c0_69, %c0_70] : memref<1x1x64xf32, #tpu.memory_space<vmem>>, vector<1x1x64xf32>
    %79 = vector.shape_cast %78 : vector<1x1x64xf32> to vector<1x64xf32>
    %80 = vector.shape_cast %77 : vector<1x64xf32> to vector<1x1x64xf32>
    tpu.vector_store %arg6[%c0_68, %c0_69, %c0_70], %80 {strides = array<i32>} : memref<1x1x64xf32, #tpu.memory_space<vmem>>, vector<1x1x64xf32>,
    return
  }
  func.func @transform_0(%arg0: i32) -> (i32, i32, i32, i32) {
    %c0_i32 = arith.constant 0 : i32
    %c0_i32_0 = arith.constant 0 : i32
    %c0_i32_1 = arith.constant 0 : i32
    %c0_i32_2 = arith.constant 0 : i32
    return %arg0, %c0_i32, %c0_i32_0, %c0_i32_1 : i32, i32, i32, i32
  }
  func.func @transform_1(%arg0: i32) -> (i32, i32, i32) {
    %c0_i32 = arith.constant 0 : i32
    %c0_i32_0 = arith.constant 0 : i32
    %c0_i32_1 = arith.constant 0 : i32
    %c0_i32_2 = arith.constant 0 : i32
    return %c0_i32, %c0_i32_0, %c0_i32_1 : i32, i32, i32
  }
  func.func @transform_2(%arg0: i32) -> (i32, i32) {
    %c0_i32 = arith.constant 0 : i32
    %c0_i32_0 = arith.constant 0 : i32
    %c0_i32_1 = arith.constant 0 : i32
    return %c0_i32, %c0_i32_0 : i32, i32
  }
  func.func @transform_3(%arg0: i32) -> (i32, i32) {
    %c0_i32 = arith.constant 0 : i32
    %c0_i32_0 = arith.constant 0 : i32
    %c0_i32_1 = arith.constant 0 : i32
    return %c0_i32, %c0_i32_0 : i32, i32
  }
  func.func @transform_4(%arg0: i32) -> (i32, i32, i32) {
    %c0_i32 = arith.constant 0 : i32
    %c0_i32_0 = arith.constant 0 : i32
    %c0_i32_1 = arith.constant 0 : i32
    return %arg0, %c0_i32, %c0_i32_0 : i32, i32, i32
  }
  func.func @transform_5(%arg0: i32) -> (i32, i32, i32) {
    %c0_i32 = arith.constant 0 : i32
    %c0_i32_0 = arith.constant 0 : i32
    %c0_i32_1 = arith.constant 0 : i32
    return %arg0, %c0_i32, %c0_i32_0 : i32, i32, i32
  }
}

module attributes {stable_mosaic.version = 11 : i64} {
  func.func @_se_gate_kernel(%arg0: i32, %arg1: memref<2x1x64xf32, #tpu.memory_space<vmem>>, %arg2: memref<64x8xf32, #tpu.memory_space<vmem>>, %arg3: memref<1x8xf32, #tpu.memory_space<vmem>>, %arg4: memref<8x64xf32, #tpu.memory_space<vmem>>, %arg5: memref<1x64xf32, #tpu.memory_space<vmem>>, %arg6: memref<2x1x64xf32, #tpu.memory_space<vmem>>) attributes {dimension_semantics = [#tpu.dimension_semantics<arbitrary>], iteration_bounds = array<i64: 1>, scalar_prefetch = 0 : i64, scratch_operands = 0 : i64, tpu.core_type = #tpu.core_type<tc>, window_params = [{pipeline_mode = #tpu.pipeline_mode<synchronous>, transform_indices = @transform_0, window_bounds = array<i64: 2, 1, 64>}, {pipeline_mode = #tpu.pipeline_mode<synchronous>, transform_indices = @transform_1, window_bounds = array<i64: 64, 8>}, {pipeline_mode = #tpu.pipeline_mode<synchronous>, transform_indices = @transform_2, window_bounds = array<i64: 1, 8>}, {pipeline_mode = #tpu.pipeline_mode<synchronous>, transform_indices = @transform_3, window_bounds = array<i64: 8, 64>}, {pipeline_mode = #tpu.pipeline_mode<synchronous>, transform_indices = @transform_4, window_bounds = array<i64: 1, 64>}, {pipeline_mode = #tpu.pipeline_mode<synchronous>, transform_indices = @transform_5, window_bounds = array<i64: 2, 1, 64>}]} {
    %c0 = arith.constant 0 : index
    %c0_0 = arith.constant 0 : index
    %c0_1 = arith.constant 0 : index
    %0 = vector.load %arg1[%c0, %c0_0, %c0_1] : memref<2x1x64xf32, #tpu.memory_space<vmem>>, vector<2x1x64xf32>
    %1 = vector.shape_cast %0 : vector<2x1x64xf32> to vector<2x64xf32>
    %cst = arith.constant 1.562500e-02 : f32
    %2 = vector.broadcast %cst : f32 to vector<2x64xf32>
    %3 = arith.mulf %1, %2 : vector<2x64xf32>
    %c0_2 = arith.constant 0 : index
    %c0_3 = arith.constant 0 : index
    %4 = vector.load %arg2[%c0_2, %c0_3] : memref<64x8xf32, #tpu.memory_space<vmem>>, vector<64x8xf32>
    %cst_4 = arith.constant dense<0.000000e+00> : vector<2x8xf32>
    %5 = tpu.matmul %3, %4, %cst_4 {dimension_numbers = #tpu.dot_dimension_numbers<[1], [0], [0], [1], [0, 0, 1, 1], [], []>} : vector<2x64xf32>, vector<64x8xf32>, vector<2x8xf32> -> vector<2x8xf32>
    %c0_5 = arith.constant 0 : index
    %c0_6 = arith.constant 0 : index
    %6 = vector.load %arg3[%c0_5, %c0_6] : memref<1x8xf32, #tpu.memory_space<vmem>>, vector<1x8xf32>
    %7 = vector.broadcast %6 : vector<1x8xf32> to vector<2x8xf32>
    %8 = arith.addf %5, %7 : vector<2x8xf32>
    %cst_7 = arith.constant 0.000000e+00 : f32
    %9 = vector.broadcast %cst_7 : f32 to vector<2x8xf32>
    %10 = arith.maximumf %8, %9 : vector<2x8xf32>
    %c0_8 = arith.constant 0 : index
    %c0_9 = arith.constant 0 : index
    %11 = vector.load %arg4[%c0_8, %c0_9] : memref<8x64xf32, #tpu.memory_space<vmem>>, vector<8x64xf32>
    %cst_10 = arith.constant dense<0.000000e+00> : vector<2x64xf32>
    %12 = tpu.matmul %10, %11, %cst_10 {dimension_numbers = #tpu.dot_dimension_numbers<[1], [0], [0], [1], [0, 0, 1, 1], [], []>} : vector<2x8xf32>, vector<8x64xf32>, vector<2x64xf32> -> vector<2x64xf32>
    %c0_11 = arith.constant 0 : index
    %c0_12 = arith.constant 0 : index
    %13 = vector.load %arg5[%c0_11, %c0_12] : memref<1x64xf32, #tpu.memory_space<vmem>>, vector<1x64xf32>
    %14 = vector.broadcast %13 : vector<1x64xf32> to vector<2x64xf32>
    %15 = arith.addf %12, %14 : vector<2x64xf32>
    %cst_13 = arith.constant 0.000000e+00 : f32
    %16 = vector.broadcast %cst_13 : f32 to vector<2x64xf32>
    %17 = arith.subf %16, %15 : vector<2x64xf32>
    %18 = math.exp %17 : vector<2x64xf32>
    %cst_14 = arith.constant 1.000000e+00 : f32
    %19 = vector.broadcast %cst_14 : f32 to vector<2x64xf32>
    %20 = arith.addf %19, %18 : vector<2x64xf32>
    %21 = tpu.reciprocal %20 {approx = true} : vector<2x64xf32> -> vector<2x64xf32>
    %22 = vector.shape_cast %21 : vector<2x64xf32> to vector<2x1x64xf32>
    %c0_15 = arith.constant 0 : index
    %c0_16 = arith.constant 0 : index
    %c0_17 = arith.constant 0 : index
    %23 = vector.load %arg6[%c0_15, %c0_16, %c0_17] : memref<2x1x64xf32, #tpu.memory_space<vmem>>, vector<2x1x64xf32>
    tpu.vector_store %arg6[%c0_15, %c0_16, %c0_17], %22 {strides = array<i32>} : memref<2x1x64xf32, #tpu.memory_space<vmem>>, vector<2x1x64xf32>,
    return
  }
  func.func @transform_0(%arg0: i32) -> (i32, i32, i32) {
    %c0_i32 = arith.constant 0 : i32
    %c0_i32_0 = arith.constant 0 : i32
    %c0_i32_1 = arith.constant 0 : i32
    %c0_i32_2 = arith.constant 0 : i32
    return %c0_i32, %c0_i32_0, %c0_i32_1 : i32, i32, i32
  }
  func.func @transform_1(%arg0: i32) -> (i32, i32) {
    %c0_i32 = arith.constant 0 : i32
    %c0_i32_0 = arith.constant 0 : i32
    %c0_i32_1 = arith.constant 0 : i32
    return %c0_i32, %c0_i32_0 : i32, i32
  }
  func.func @transform_2(%arg0: i32) -> (i32, i32) {
    %c0_i32 = arith.constant 0 : i32
    %c0_i32_0 = arith.constant 0 : i32
    %c0_i32_1 = arith.constant 0 : i32
    return %c0_i32, %c0_i32_0 : i32, i32
  }
  func.func @transform_3(%arg0: i32) -> (i32, i32) {
    %c0_i32 = arith.constant 0 : i32
    %c0_i32_0 = arith.constant 0 : i32
    %c0_i32_1 = arith.constant 0 : i32
    return %c0_i32, %c0_i32_0 : i32, i32
  }
  func.func @transform_4(%arg0: i32) -> (i32, i32) {
    %c0_i32 = arith.constant 0 : i32
    %c0_i32_0 = arith.constant 0 : i32
    %c0_i32_1 = arith.constant 0 : i32
    return %c0_i32, %c0_i32_0 : i32, i32
  }
  func.func @transform_5(%arg0: i32) -> (i32, i32, i32) {
    %c0_i32 = arith.constant 0 : i32
    %c0_i32_0 = arith.constant 0 : i32
    %c0_i32_1 = arith.constant 0 : i32
    %c0_i32_2 = arith.constant 0 : i32
    return %c0_i32, %c0_i32_0, %c0_i32_1 : i32, i32, i32
  }
}

module attributes {stable_mosaic.version = 11 : i64} {
  func.func @_final_proj_kernel(%arg0: i32, %arg1: i32, %arg2: memref<1x64x64xbf16, #tpu.memory_space<vmem>>, %arg3: memref<1x1x64xf32, #tpu.memory_space<vmem>>, %arg4: memref<1x64x32xbf16, #tpu.memory_space<vmem>>, %arg5: memref<64x64xbf16, #tpu.memory_space<vmem>>, %arg6: memref<1x64xf32, #tpu.memory_space<vmem>>, %arg7: memref<1x64xf32, #tpu.memory_space<vmem>>, %arg8: memref<32x64xbf16, #tpu.memory_space<vmem>>, %arg9: memref<1x64xf32, #tpu.memory_space<vmem>>, %arg10: memref<1x64xf32, #tpu.memory_space<vmem>>, %arg11: memref<1x64x64xf32, #tpu.memory_space<vmem>>) attributes {dimension_semantics = [#tpu.dimension_semantics<parallel>, #tpu.dimension_semantics<parallel>], iteration_bounds = array<i64: 2, 1>, scalar_prefetch = 0 : i64, scratch_operands = 0 : i64, tpu.core_type = #tpu.core_type<tc>, window_params = [{transform_indices = @transform_0, window_bounds = array<i64: 1, 64, 64>}, {transform_indices = @transform_1, window_bounds = array<i64: 1, 1, 64>}, {transform_indices = @transform_2, window_bounds = array<i64: 1, 64, 32>}, {pipeline_mode = #tpu.pipeline_mode<synchronous>, transform_indices = @transform_3, window_bounds = array<i64: 64, 64>}, {pipeline_mode = #tpu.pipeline_mode<synchronous>, transform_indices = @transform_4, window_bounds = array<i64: 1, 64>}, {pipeline_mode = #tpu.pipeline_mode<synchronous>, transform_indices = @transform_5, window_bounds = array<i64: 1, 64>}, {pipeline_mode = #tpu.pipeline_mode<synchronous>, transform_indices = @transform_6, window_bounds = array<i64: 32, 64>}, {pipeline_mode = #tpu.pipeline_mode<synchronous>, transform_indices = @transform_7, window_bounds = array<i64: 1, 64>}, {pipeline_mode = #tpu.pipeline_mode<synchronous>, transform_indices = @transform_8, window_bounds = array<i64: 1, 64>}, {transform_indices = @transform_9, window_bounds = array<i64: 1, 64, 64>}]} {
    %c0 = arith.constant 0 : index
    %c0_0 = arith.constant 0 : index
    %c0_1 = arith.constant 0 : index
    %0 = vector.load %arg2[%c0, %c0_0, %c0_1] : memref<1x64x64xbf16, #tpu.memory_space<vmem>>, vector<1x64x64xbf16>
    %1 = vector.shape_cast %0 : vector<1x64x64xbf16> to vector<64x64xbf16>
    %2 = arith.extf %1 : vector<64x64xbf16> to vector<64x64xf32>
    %c0_2 = arith.constant 0 : index
    %c0_3 = arith.constant 0 : index
    %c0_4 = arith.constant 0 : index
    %3 = vector.load %arg3[%c0_2, %c0_3, %c0_4] : memref<1x1x64xf32, #tpu.memory_space<vmem>>, vector<1x1x64xf32>
    %4 = vector.shape_cast %3 : vector<1x1x64xf32> to vector<1x64xf32>
    %5 = vector.broadcast %4 : vector<1x64xf32> to vector<64x64xf32>
    %6 = arith.mulf %2, %5 : vector<64x64xf32>
    %7 = arith.truncf %6 : vector<64x64xf32> to vector<64x64xbf16>
    %c0_5 = arith.constant 0 : index
    %c0_6 = arith.constant 0 : index
    %8 = vector.load %arg5[%c0_5, %c0_6] : memref<64x64xbf16, #tpu.memory_space<vmem>>, vector<64x64xbf16>
    %cst = arith.constant dense<0.000000e+00> : vector<64x64xf32>
    %9 = tpu.matmul %7, %8, %cst {dimension_numbers = #tpu.dot_dimension_numbers<[1], [0], [0], [1], [0, 0, 1, 1], [], []>} : vector<64x64xbf16>, vector<64x64xbf16>, vector<64x64xf32> -> vector<64x64xf32>
    %c0_7 = arith.constant 0 : index
    %c0_8 = arith.constant 0 : index
    %10 = vector.load %arg6[%c0_7, %c0_8] : memref<1x64xf32, #tpu.memory_space<vmem>>, vector<1x64xf32>
    %11 = vector.broadcast %10 : vector<1x64xf32> to vector<64x64xf32>
    %12 = arith.mulf %9, %11 : vector<64x64xf32>
    %c0_9 = arith.constant 0 : index
    %c0_10 = arith.constant 0 : index
    %13 = vector.load %arg7[%c0_9, %c0_10] : memref<1x64xf32, #tpu.memory_space<vmem>>, vector<1x64xf32>
    %14 = vector.broadcast %13 : vector<1x64xf32> to vector<64x64xf32>
    %15 = arith.addf %12, %14 : vector<64x64xf32>
    %c0_11 = arith.constant 0 : index
    %c0_12 = arith.constant 0 : index
    %c0_13 = arith.constant 0 : index
    %16 = vector.load %arg4[%c0_11, %c0_12, %c0_13] : memref<1x64x32xbf16, #tpu.memory_space<vmem>>, vector<1x64x32xbf16>
    %17 = vector.shape_cast %16 : vector<1x64x32xbf16> to vector<64x32xbf16>
    %c0_14 = arith.constant 0 : index
    %c0_15 = arith.constant 0 : index
    %18 = vector.load %arg8[%c0_14, %c0_15] : memref<32x64xbf16, #tpu.memory_space<vmem>>, vector<32x64xbf16>
    %cst_16 = arith.constant dense<0.000000e+00> : vector<64x64xf32>
    %19 = tpu.matmul %17, %18, %cst_16 {dimension_numbers = #tpu.dot_dimension_numbers<[1], [0], [0], [1], [0, 0, 1, 1], [], []>} : vector<64x32xbf16>, vector<32x64xbf16>, vector<64x64xf32> -> vector<64x64xf32>
    %c0_17 = arith.constant 0 : index
    %c0_18 = arith.constant 0 : index
    %20 = vector.load %arg9[%c0_17, %c0_18] : memref<1x64xf32, #tpu.memory_space<vmem>>, vector<1x64xf32>
    %21 = vector.broadcast %20 : vector<1x64xf32> to vector<64x64xf32>
    %22 = arith.mulf %19, %21 : vector<64x64xf32>
    %c0_19 = arith.constant 0 : index
    %c0_20 = arith.constant 0 : index
    %23 = vector.load %arg10[%c0_19, %c0_20] : memref<1x64xf32, #tpu.memory_space<vmem>>, vector<1x64xf32>
    %24 = vector.broadcast %23 : vector<1x64xf32> to vector<64x64xf32>
    %25 = arith.addf %22, %24 : vector<64x64xf32>
    %26 = arith.addf %15, %25 : vector<64x64xf32>
    %cst_21 = arith.constant 0.000000e+00 : f32
    %27 = vector.broadcast %cst_21 : f32 to vector<64x64xf32>
    %28 = arith.maximumf %26, %27 : vector<64x64xf32>
    %c0_22 = arith.constant 0 : index
    %c0_23 = arith.constant 0 : index
    %c0_24 = arith.constant 0 : index
    %29 = vector.load %arg11[%c0_22, %c0_23, %c0_24] : memref<1x64x64xf32, #tpu.memory_space<vmem>>, vector<1x64x64xf32>
    %30 = vector.shape_cast %29 : vector<1x64x64xf32> to vector<64x64xf32>
    %31 = vector.shape_cast %28 : vector<64x64xf32> to vector<1x64x64xf32>
    tpu.vector_store %arg11[%c0_22, %c0_23, %c0_24], %31 {strides = array<i32>} : memref<1x64x64xf32, #tpu.memory_space<vmem>>, vector<1x64x64xf32>,
    return
  }
  func.func @transform_0(%arg0: i32, %arg1: i32) -> (i32, i32, i32) {
    %c0_i32 = arith.constant 0 : i32
    %c0_i32_0 = arith.constant 0 : i32
    return %arg0, %arg1, %c0_i32 : i32, i32, i32
  }
  func.func @transform_1(%arg0: i32, %arg1: i32) -> (i32, i32, i32) {
    %c0_i32 = arith.constant 0 : i32
    %c0_i32_0 = arith.constant 0 : i32
    %c0_i32_1 = arith.constant 0 : i32
    return %arg0, %c0_i32, %c0_i32_0 : i32, i32, i32
  }
  func.func @transform_2(%arg0: i32, %arg1: i32) -> (i32, i32, i32) {
    %c0_i32 = arith.constant 0 : i32
    %c0_i32_0 = arith.constant 0 : i32
    return %arg0, %arg1, %c0_i32 : i32, i32, i32
  }
  func.func @transform_3(%arg0: i32, %arg1: i32) -> (i32, i32) {
    %c0_i32 = arith.constant 0 : i32
    %c0_i32_0 = arith.constant 0 : i32
    %c0_i32_1 = arith.constant 0 : i32
    return %c0_i32, %c0_i32_0 : i32, i32
  }
  func.func @transform_4(%arg0: i32, %arg1: i32) -> (i32, i32) {
    %c0_i32 = arith.constant 0 : i32
    %c0_i32_0 = arith.constant 0 : i32
    %c0_i32_1 = arith.constant 0 : i32
    return %c0_i32, %c0_i32_0 : i32, i32
  }
  func.func @transform_5(%arg0: i32, %arg1: i32) -> (i32, i32) {
    %c0_i32 = arith.constant 0 : i32
    %c0_i32_0 = arith.constant 0 : i32
    %c0_i32_1 = arith.constant 0 : i32
    return %c0_i32, %c0_i32_0 : i32, i32
  }
  func.func @transform_6(%arg0: i32, %arg1: i32) -> (i32, i32) {
    %c0_i32 = arith.constant 0 : i32
    %c0_i32_0 = arith.constant 0 : i32
    %c0_i32_1 = arith.constant 0 : i32
    return %c0_i32, %c0_i32_0 : i32, i32
  }
  func.func @transform_7(%arg0: i32, %arg1: i32) -> (i32, i32) {
    %c0_i32 = arith.constant 0 : i32
    %c0_i32_0 = arith.constant 0 : i32
    %c0_i32_1 = arith.constant 0 : i32
    return %c0_i32, %c0_i32_0 : i32, i32
  }
  func.func @transform_8(%arg0: i32, %arg1: i32) -> (i32, i32) {
    %c0_i32 = arith.constant 0 : i32
    %c0_i32_0 = arith.constant 0 : i32
    %c0_i32_1 = arith.constant 0 : i32
    return %c0_i32, %c0_i32_0 : i32, i32
  }
  func.func @transform_9(%arg0: i32, %arg1: i32) -> (i32, i32, i32) {
    %c0_i32 = arith.constant 0 : i32
    %c0_i32_0 = arith.constant 0 : i32
    return %arg0, %arg1, %c0_i32 : i32, i32, i32
  }
}

</mosaic_0001>

<llo_original>
// kernel: res_bottleneck_block.4
$region0: #{res_bottleneck_block.4}
  #allocation0 [shape = 'u32[]', space=smem, size = 0x4, offset = 0x4, fixed_abs, tag = 'smem constant byte address 0x4 - core index']
  #allocation1 [shape = 'u32[72,128]{1,0:T(1,128)}', space=vmem, size = 0x9000, scoped, tag = 'internal scratch']
  %s0 = inlined_call_operand.vmem [shape: bf16[512,32], index: 0, kind: input, shape index: {}]
  %s1 = inlined_call_operand.vmem [shape: bf16[32,64], index: 1, kind: input, shape index: {}]
  %s2 = inlined_call_operand.vmem [shape: f32[1,64], index: 2, kind: input, shape index: {}]
  %s3 = inlined_call_operand.vmem [shape: f32[1,64], index: 3, kind: input, shape index: {}]
  %s4 = inlined_call_operand.vmem [shape: bf16[512,64], index: 4, kind: output, shape index: {}]
  %s5 = sld [smem:[#allocation0]]
  $region49: #{res_bottleneck_block.4} parent=0
    _
  %s7 = ssub.s32 1, %s5
  %s8 = scalar_select 0, %s7, %s5
  loop: start=0, step=1, limit=4
  $region2: #{res_bottleneck_block.4} parent=0 // loop_pre_header
    _
  $region3: #{res_bottleneck_block.4} parent=0 // loop_header
    %s10 = sphi 0, %s14
    %p11 = scmp.ge.s32.totalorder %s10, 4
    %s20 = sphi 0, %s22
    %s23 = sphi 0, %s20
    %s24 = sphi 0, %s23
    %s40 = sphi 0, %s24
    %s44 = sphi 0, %s44
    %s46 = sphi 0, %s44
    %s47 = sphi 0, %s46
    %s61 = sphi 0, %s47
    %s65 = sphi 0, %s65
    %s67 = sphi 0, %s65
    %s68 = sphi 0, %s67
    %s82 = sphi 0, %s68
    %s86 = sphi 0, %s86
    %s88 = sphi 0, %s86
    %s89 = sphi 0, %s88
    %s103 = sphi 0, %s89
    %s109 = sphi 0, %s111
    %s112 = sphi 0, %s109
    %s113 = sphi 0, %s112
    %s129 = sphi 0, %s113
  $region4: #{res_bottleneck_block.4} parent=0 // loop_header_branch
    %13 = sbr.rel (%p11) target = $region8
  $region5: #{res_bottleneck_block.4} parent=0 // loop_body
    %s15 = ssub.s32 %s10, 1
    %s16 = ssub.s32 %s10, 2
    %s17 = sadd.s32 %s10, 1
    %s18 = ssub.s32 %s10, %s17
    %p19 = scmp.eq.s32.totalorder %s18, 0
    %s21 = sadd.s32 %s20, 1
    %s22 = scalar_select %p19, %s20, %s21
    %p25 = pneg %p19
    %p26 = scmp.eq.s32.totalorder %s10, 1
    %p27 = por %p25, %p26
    %p28 = scmp.ne.s32.totalorder %s20, %s23
    %p29 = scmp.eq.s32.totalorder %s10, 0
    %p30 = por %p28, %p29
    %p31 = scmp.ne.s32.totalorder %s20, %s23
    %p32 = scmp.eq.s32.totalorder %s15, 1
    %p33 = por %p31, %p32
    %p34 = scmp.ne.s32.totalorder %s23, %s24
    %p35 = scmp.eq.s32.totalorder %s15, 0
    %p36 = por %p34, %p35
    %p37 = scmp.ne.s32.totalorder %s23, %s24
    %p38 = scmp.eq.s32.totalorder %s16, 1
    %p39 = por %p37, %p38
    %p41 = scmp.ne.s32.totalorder %s24, %s40
    %p42 = scmp.eq.s32.totalorder %s16, 0
    %p43 = por %p41, %p42
    %s45 = sadd.s32 %s44, 1
    %p48 = scmp.eq.s32.totalorder %s10, 1
    %p49 = scmp.ne.s32.totalorder %s44, %s46
    %p50 = scmp.eq.s32.totalorder %s10, 0
    %p51 = por %p49, %p50
    %p52 = scmp.ne.s32.totalorder %s44, %s46
    %p53 = scmp.eq.s32.totalorder %s15, 1
    %p54 = por %p52, %p53
    %p55 = scmp.ne.s32.totalorder %s46, %s47
    %p56 = scmp.eq.s32.totalorder %s15, 0
    %p57 = por %p55, %p56
    %p58 = scmp.ne.s32.totalorder %s46, %s47
    %p59 = scmp.eq.s32.totalorder %s16, 1
    %p60 = por %p58, %p59
    %p62 = scmp.ne.s32.totalorder %s47, %s61
    %p63 = scmp.eq.s32.totalorder %s16, 0
    %p64 = por %p62, %p63
    %s66 = sadd.s32 %s65, 1
    %p69 = scmp.eq.s32.totalorder %s10, 1
    %p70 = scmp.ne.s32.totalorder %s65, %s67
    %p71 = scmp.eq.s32.totalorder %s10, 0
    %p72 = por %p70, %p71
    %p73 = scmp.ne.s32.totalorder %s65, %s67
    %p74 = scmp.eq.s32.totalorder %s15, 1
    %p75 = por %p73, %p74
    %p76 = scmp.ne.s32.totalorder %s67, %s68
    %p77 = scmp.eq.s32.totalorder %s15, 0
    %p78 = por %p76, %p77
    %p79 = scmp.ne.s32.totalorder %s67, %s68
    %p80 = scmp.eq.s32.totalorder %s16, 1
    %p81 = por %p79, %p80
    %p83 = scmp.ne.s32.totalorder %s68, %s82
    %p84 = scmp.eq.s32.totalorder %s16, 0
    %p85 = por %p83, %p84
    %s87 = sadd.s32 %s86, 1
    %p90 = scmp.eq.s32.totalorder %s10, 1
    %p91 = scmp.ne.s32.totalorder %s86, %s88
    %p92 = scmp.eq.s32.totalorder %s10, 0
    %p93 = por %p91, %p92
    %p94 = scmp.ne.s32.totalorder %s86, %s88
    %p95 = scmp.eq.s32.totalorder %s15, 1
    %p96 = por %p94, %p95
    %p97 = scmp.ne.s32.totalorder %s88, %s89
    %p98 = scmp.eq.s32.totalorder %s15, 0
    %p99 = por %p97, %p98
    %p100 = scmp.ne.s32.totalorder %s88, %s89
    %p101 = scmp.eq.s32.totalorder %s16, 1
    %p102 = por %p100, %p101
    %p104 = scmp.ne.s32.totalorder %s89, %s103
    %p105 = scmp.eq.s32.totalorder %s16, 0
    %p106 = por %p104, %p105
    %s107 = ssub.s32 %s10, %s17
    %p108 = scmp.eq.s32.totalorder %s107, 0
    %s110 = sadd.s32 %s109, 1
    %s111 = scalar_select %p108, %s109, %s110
    %p114 = pneg %p108
    %p115 = scmp.eq.s32.totalorder %s10, 1
    %p116 = por %p114, %p115
    %p117 = scmp.ne.s32.totalorder %s109, %s112
    %p118 = scmp.eq.s32.totalorder %s10, 0
    %p119 = por %p117, %p118
    %p120 = scmp.ne.s32.totalorder %s109, %s112
    %p121 = scmp.eq.s32.totalorder %s15, 1
    %p122 = por %p120, %p121
    %p123 = scmp.ne.s32.totalorder %s112, %s113
    %p124 = scmp.eq.s32.totalorder %s15, 0
    %p125 = por %p123, %p124
    %p126 = scmp.ne.s32.totalorder %s112, %s113
    %p127 = scmp.eq.s32.totalorder %s16, 1
    %p128 = por %p126, %p127
    %p130 = scmp.ne.s32.totalorder %s113, %s129
    %p131 = scmp.eq.s32.totalorder %s16, 0
    %p132 = por %p130, %p131
    %p133 = scmp.le.s32.totalorder 1, %s10
    %p134 = scmp.lt.s32.totalorder %s10, 3
    %p135 = pnand %p133, %p134
    %p136 = pneg %p135
    // Predicated region
    $region9: #{res_bottleneck_block.4} parent=5 // pred_check
      _
    $region10: #{res_bottleneck_block.4} parent=5 // pred_check_branch
      %138 = sbr.rel (%p135) target = $region12
    $region11: #{res_bottleneck_block.4} parent=5 // pred_region
      %s139 = ssub.s32 %s10, 1
      // Predicated region
      $region13: #{res_bottleneck_block.4} parent=11 // pred_check
        %p140 = pneg %p57
      $region14: #{res_bottleneck_block.4} parent=11 // pred_check_branch
        %142 = sbr.rel (%p140) target = $region16
      $region15: #{res_bottleneck_block.4} parent=11 // pred_region
        _
      $region16: #{res_bottleneck_block.4} parent=11 // pred_fallthru
        _
      // Predicated region
      $region17: #{res_bottleneck_block.4} parent=11 // pred_check
        %p143 = pneg %p78
      $region18: #{res_bottleneck_block.4} parent=11 // pred_check_branch
        %145 = sbr.rel (%p143) target = $region20
      $region19: #{res_bottleneck_block.4} parent=11 // pred_region
        _
      $region20: #{res_bottleneck_block.4} parent=11 // pred_fallthru
        _
      // Predicated region
      $region21: #{res_bottleneck_block.4} parent=11 // pred_check
        %p146 = pneg %p99
      $region22: #{res_bottleneck_block.4} parent=11 // pred_check_branch
        %148 = sbr.rel (%p146) target = $region24
      $region23: #{res_bottleneck_block.4} parent=11 // pred_region
        _
      $region24: #{res_bottleneck_block.4} parent=11 // pred_fallthru
        _
    $region12: #{res_bottleneck_block.4} parent=5 // pred_fallthru
      _
    %p149 = scmp.lt.s32.totalorder %s10, 2
    // Predicated region
    $region25: #{res_bottleneck_block.4} parent=5 // pred_check
      %p150 = pneg %p149
    $region26: #{res_bottleneck_block.4} parent=5 // pred_check_branch
      %152 = sbr.rel (%p150) target = $region28
    $region27: #{res_bottleneck_block.4} parent=5 // pred_region
      // Predicated region
      $region29: #{res_bottleneck_block.4} parent=27 // pred_check
        %p153 = pneg %p30
      $region30: #{res_bottleneck_block.4} parent=27 // pred_check_branch
        %155 = sbr.rel (%p153) target = $region32
      $region31: #{res_bottleneck_block.4} parent=27 // pred_region
        %s156 = smul.u32 32, %s10
        %p157 = scmp.lt.s32.totalorder %s156, 63
        %s158 = scalar_select %p157, %s156, 63
        %s159 = smul.addr %s158, 4
        %s160 = scalar_lea.vmem %s0, %s159
        %s161 = smul.u32 32, %s10
      $region32: #{res_bottleneck_block.4} parent=27 // pred_fallthru
        _
    $region28: #{res_bottleneck_block.4} parent=5 // pred_fallthru
      _
    %p162 = scmp.le.s32.totalorder 1, %s10
    %p163 = scmp.lt.s32.totalorder %s10, 3
    %p164 = pnand %p162, %p163
    %p165 = pneg %p164
    // Predicated region
    $region33: #{res_bottleneck_block.4} parent=5 // pred_check
      _
    $region34: #{res_bottleneck_block.4} parent=5 // pred_check_branch
      %167 = sbr.rel (%p164) target = $region36
    $region35: #{res_bottleneck_block.4} parent=5 // pred_region
      %s168 = ssub.s32 %s10, 1
      %s169 = smul.u32 32, %s15
      %p170 = scmp.lt.s32.totalorder %s169, 63
      %s171 = scalar_select %p170, %s169, 63
      %s172 = smul.addr %s171, 4
      %s173 = scalar_lea.vmem %s0, %s172
      %p174 = pneg %p36
      %p175 = pneg %p33
      %p176 = pneg %p57
      %p177 = pneg %p54
      %p178 = pneg %p78
      %p179 = pneg %p75
      %p180 = pneg %p99
      %p181 = pneg %p96
      %p182 = pneg %p125
      %p183 = pneg %p122
      %s184 = smul.u32 32, %s15
      %p185 = scmp.lt.s32.totalorder %s184, 63
      %s186 = scalar_select %p185, %s184, 63
      %s187 = smul.addr %s186, 4
      %s188 = scalar_lea.vmem %s4, %s187
      %s189 = smul.u32 32, %s15
      %p190 = scmp.lt.s32.totalorder %s189, 63
      %s191 = scalar_select %p190, %s189, 63
      %s192 = smul.addr %s191, 4
      %s193 = scalar_lea.vmem %s0, %s192
      %s194 = smul.u32 32, %s15
      %s195 = smul.u32 32, %s15
      %p196 = scmp.lt.s32.totalorder %s195, 63
      %s197 = scalar_select %p196, %s195, 63
      %s198 = smul.addr %s197, 4
      %s199 = scalar_lea.vmem %s4, %s198
      %s200 = smul.u32 32, %s15
      %v202 = vld [vmem:[%s193] sm:$0xf]
      %v203 = vld [vmem:[%s193 + $0x4] sm:$0xf]
      %v204 = vld [vmem:[%s193 + $0x8] sm:$0xf]
      %v205 = vld [vmem:[%s193 + $0xc] sm:$0xf]
      %v206 = vld [vmem:[%s193 + $0x10] sm:$0xf]
      %v207 = vld [vmem:[%s193 + $0x14] sm:$0xf]
      %v208 = vld [vmem:[%s193 + $0x18] sm:$0xf]
      %v209 = vld [vmem:[%s193 + $0x1c] sm:$0xf]
      %v210 = vld [vmem:[%s193 + $0x20] sm:$0xf]
      %v211 = vld [vmem:[%s193 + $0x24] sm:$0xf]
      %v212 = vld [vmem:[%s193 + $0x28] sm:$0xf]
      %v213 = vld [vmem:[%s193 + $0x2c] sm:$0xf]
      %v214 = vld [vmem:[%s193 + $0x30] sm:$0xf]
      %v215 = vld [vmem:[%s193 + $0x34] sm:$0xf]
      %v216 = vld [vmem:[%s193 + $0x38] sm:$0xf]
      %v217 = vld [vmem:[%s193 + $0x3c] sm:$0xf]
      %v218 = vld [vmem:[%s193 + $0x40] sm:$0xf]
      %v219 = vld [vmem:[%s193 + $0x44] sm:$0xf]
      %v220 = vld [vmem:[%s193 + $0x48] sm:$0xf]
      %v221 = vld [vmem:[%s193 + $0x4c] sm:$0xf]
      %v222 = vld [vmem:[%s193 + $0x50] sm:$0xf]
      %v223 = vld [vmem:[%s193 + $0x54] sm:$0xf]
      %v224 = vld [vmem:[%s193 + $0x58] sm:$0xf]
      %v225 = vld [vmem:[%s193 + $0x5c] sm:$0xf]
      %v226 = vld [vmem:[%s193 + $0x60] sm:$0xf]
      %v227 = vld [vmem:[%s193 + $0x64] sm:$0xf]
      %v228 = vld [vmem:[%s193 + $0x68] sm:$0xf]
      %v229 = vld [vmem:[%s193 + $0x6c] sm:$0xf]
      %v230 = vld [vmem:[%s193 + $0x70] sm:$0xf]
      %v231 = vld [vmem:[%s193 + $0x74] sm:$0xf]
      %v232 = vld [vmem:[%s193 + $0x78] sm:$0xf]
      %v233 = vld [vmem:[%s193 + $0x7c] sm:$0xf]
      %v234 = vld [vmem:[%s1] sm:$0xf]
      %v235 = vld [vmem:[%s1 + $0x4] sm:$0xf]
      %v236 = vld [vmem:[%s1 + $0x8] sm:$0xf]
      %v237 = vld [vmem:[%s1 + $0xc] sm:$0xf]
      %v270 = vunpack.c.l.b16 %v202
      %v271 = vunpack.c.l.b16 %v203
      %v272 = vunpack.c.l.b16 %v204
      %v273 = vunpack.c.l.b16 %v205
      %v274 = vunpack.c.l.b16 %v206
      %v275 = vunpack.c.l.b16 %v207
      %v276 = vunpack.c.l.b16 %v208
      %v277 = vunpack.c.l.b16 %v209
      %v278 = vunpack.c.l.b16 %v210
      %v279 = vunpack.c.l.b16 %v211
      %v280 = vunpack.c.l.b16 %v212
      %v281 = vunpack.c.l.b16 %v213
      %v282 = vunpack.c.l.b16 %v214
      %v283 = vunpack.c.l.b16 %v215
      %v284 = vunpack.c.l.b16 %v216
      %v285 = vunpack.c.l.b16 %v217
      %v286 = vunpack.c.l.b16 %v218
      %v287 = vunpack.c.l.b16 %v219
      %v288 = vunpack.c.l.b16 %v220
      %v289 = vunpack.c.l.b16 %v221
      %v290 = vunpack.c.l.b16 %v222
      %v291 = vunpack.c.l.b16 %v223
      %v292 = vunpack.c.l.b16 %v224
      %v293 = vunpack.c.l.b16 %v225
      %v294 = vunpack.c.l.b16 %v226
      %v295 = vunpack.c.l.b16 %v227
      %v296 = vunpack.c.l.b16 %v228
      %v297 = vunpack.c.l.b16 %v229
      %v298 = vunpack.c.l.b16 %v230
      %v299 = vunpack.c.l.b16 %v231
      %v300 = vunpack.c.l.b16 %v232
      %v301 = vunpack.c.l.b16 %v233
      %v302 = vpack.c.b16 %v271, %v270
      %v303 = vpack.c.b16 %v273, %v272
      %v304 = vpack.c.b16 %v275, %v274
      %v305 = vpack.c.b16 %v277, %v276
      %v306 = vpack.c.b16 %v279, %v278
      %v307 = vpack.c.b16 %v281, %v280
      %v308 = vpack.c.b16 %v283, %v282
      %v309 = vpack.c.b16 %v285, %v284
      %v310 = vpack.c.b16 %v287, %v286
      %v311 = vpack.c.b16 %v289, %v288
      %v312 = vpack.c.b16 %v291, %v290
      %v313 = vpack.c.b16 %v293, %v292
      %v314 = vpack.c.b16 %v295, %v294
      %v315 = vpack.c.b16 %v297, %v296
      %v316 = vpack.c.b16 %v299, %v298
      %v317 = vpack.c.b16 %v301, %v300
      %v322 = vunpack.c.l.b16 %v234
      %v323 = vunpack.c.l.b16 %v235
      %v324 = vunpack.c.l.b16 %v236
      %v325 = vunpack.c.l.b16 %v237
      %v326 = vpack.c.b16 %v323, %v322
      %v327 = vpack.c.b16 %v325, %v324
      %vm330 = vcmask 261120
      %v332 = vsel %vm330, %v302, 0
      %v335 = vsel %vm330, %v303, 0
      %v338 = vsel %vm330, %v304, 0
      %v341 = vsel %vm330, %v305, 0
      %v344 = vsel %vm330, %v306, 0
      %v347 = vsel %vm330, %v307, 0
      %v350 = vsel %vm330, %v308, 0
      %v353 = vsel %vm330, %v309, 0
      %v356 = vsel %vm330, %v310, 0
      %v359 = vsel %vm330, %v311, 0
      %v362 = vsel %vm330, %v312, 0
      %v365 = vsel %vm330, %v313, 0
      %v368 = vsel %vm330, %v314, 0
      %v371 = vsel %vm330, %v315, 0
      %v374 = vsel %vm330, %v316, 0
      %v377 = vsel %vm330, %v317, 0
      %379 = vmatpush.bf16.msra.mxu0 0
      %380 = vmatpush.bf16.msra.mxu0 0
      %381 = vmatpush.bf16.msra.mxu0 0
      %382 = vmatpush.bf16.msra.mxu0 0
      %383 = vmatpush.bf16.msra.mxu0 0
      %384 = vmatpush.bf16.msra.mxu0 0
      %385 = vmatpush.bf16.msra.mxu0 %v327
      %386 = vmatpush.bf16.msra.mxu0 %v326
      %387 = vmatmul.bf16.gmra.mxu0 %v332
      %v388 = vpop.f32.mrf.mxu0
      %v389 = vadd.f32 0.0, %v388
      %v390 = vpop.f32.mrf.mxu0
      %v391 = vadd.f32 0.0, %v390
      %392 = vmatmul.bf16.gmra.mxu0 %v335
      %v393 = vpop.f32.mrf.mxu0
      %v394 = vadd.f32 0.0, %v393
      %v395 = vpop.f32.mrf.mxu0
      %v396 = vadd.f32 0.0, %v395
      %397 = vmatmul.bf16.gmra.mxu0 %v338
      %v398 = vpop.f32.mrf.mxu0
      %v399 = vadd.f32 0.0, %v398
      %v400 = vpop.f32.mrf.mxu0
      %v401 = vadd.f32 0.0, %v400
      %402 = vmatmul.bf16.gmra.mxu0 %v341
      %v403 = vpop.f32.mrf.mxu0
      %v404 = vadd.f32 0.0, %v403
      %v405 = vpop.f32.mrf.mxu0
      %v406 = vadd.f32 0.0, %v405
      %407 = vmatmul.bf16.gmra.mxu0 %v344
      %v408 = vpop.f32.mrf.mxu0
      %v409 = vadd.f32 0.0, %v408
      %v410 = vpop.f32.mrf.mxu0
      %v411 = vadd.f32 0.0, %v410
      %412 = vmatmul.bf16.gmra.mxu0 %v347
      %v413 = vpop.f32.mrf.mxu0
      %v414 = vadd.f32 0.0, %v413
      %v415 = vpop.f32.mrf.mxu0
      %v416 = vadd.f32 0.0, %v415
      %417 = vmatmul.bf16.gmra.mxu0 %v350
      %v418 = vpop.f32.mrf.mxu0
      %v419 = vadd.f32 0.0, %v418
      %v420 = vpop.f32.mrf.mxu0
      %v421 = vadd.f32 0.0, %v420
      %422 = vmatmul.bf16.gmra.mxu0 %v353
      %v423 = vpop.f32.mrf.mxu0
      %v424 = vadd.f32 0.0, %v423
      %v425 = vpop.f32.mrf.mxu0
      %v426 = vadd.f32 0.0, %v425
      %427 = vmatmul.bf16.gmra.mxu0 %v356
      %v428 = vpop.f32.mrf.mxu0
      %v429 = vadd.f32 0.0, %v428
      %v430 = vpop.f32.mrf.mxu0
      %v431 = vadd.f32 0.0, %v430
      %432 = vmatmul.bf16.gmra.mxu0 %v359
      %v433 = vpop.f32.mrf.mxu0
      %v434 = vadd.f32 0.0, %v433
      %v435 = vpop.f32.mrf.mxu0
      %v436 = vadd.f32 0.0, %v435
      %437 = vmatmul.bf16.gmra.mxu0 %v362
      %v438 = vpop.f32.mrf.mxu0
      %v439 = vadd.f32 0.0, %v438
      %v440 = vpop.f32.mrf.mxu0
      %v441 = vadd.f32 0.0, %v440
      %442 = vmatmul.bf16.gmra.mxu0 %v365
      %v443 = vpop.f32.mrf.mxu0
      %v444 = vadd.f32 0.0, %v443
      %v445 = vpop.f32.mrf.mxu0
      %v446 = vadd.f32 0.0, %v445
      %447 = vmatmul.bf16.gmra.mxu0 %v368
      %v448 = vpop.f32.mrf.mxu0
      %v449 = vadd.f32 0.0, %v448
      %v450 = vpop.f32.mrf.mxu0
      %v451 = vadd.f32 0.0, %v450
      %452 = vmatmul.bf16.gmra.mxu0 %v371
      %v453 = vpop.f32.mrf.mxu0
      %v454 = vadd.f32 0.0, %v453
      %v455 = vpop.f32.mrf.mxu0
      %v456 = vadd.f32 0.0, %v455
      %457 = vmatmul.bf16.gmra.mxu0 %v374
      %v458 = vpop.f32.mrf.mxu0
      %v459 = vadd.f32 0.0, %v458
      %v460 = vpop.f32.mrf.mxu0
      %v461 = vadd.f32 0.0, %v460
      %462 = vmatmul.bf16.gmra.mxu0 %v377
      %v463 = vpop.f32.mrf.mxu0
      %v464 = vadd.f32 0.0, %v463
      %v465 = vpop.f32.mrf.mxu0
      %v466 = vadd.f32 0.0, %v465
      %467 = vdwg.mxu0
      %v468 = vld [vmem:[%s2] sm:$0x1]
      %v470 = vperm.slane %v468, 0
      %v472 = vmul.f32 %v389, %v470
      %v473 = vmul.f32 %v391, %v470
      %v474 = vmul.f32 %v394, %v470
      %v475 = vmul.f32 %v396, %v470
      %v476 = vmul.f32 %v399, %v470
      %v477 = vmul.f32 %v401, %v470
      %v478 = vmul.f32 %v404, %v470
      %v479 = vmul.f32 %v406, %v470
      %v480 = vmul.f32 %v409, %v470
      %v481 = vmul.f32 %v411, %v470
      %v482 = vmul.f32 %v414, %v470
      %v483 = vmul.f32 %v416, %v470
      %v484 = vmul.f32 %v419, %v470
      %v485 = vmul.f32 %v421, %v470
      %v486 = vmul.f32 %v424, %v470
      %v487 = vmul.f32 %v426, %v470
      %v488 = vmul.f32 %v429, %v470
      %v489 = vmul.f32 %v431, %v470
      %v490 = vmul.f32 %v434, %v470
      %v491 = vmul.f32 %v436, %v470
      %v492 = vmul.f32 %v439, %v470
      %v493 = vmul.f32 %v441, %v470
      %v494 = vmul.f32 %v444, %v470
      %v495 = vmul.f32 %v446, %v470
      %v496 = vmul.f32 %v449, %v470
      %v497 = vmul.f32 %v451, %v470
      %v498 = vmul.f32 %v454, %v470
      %v499 = vmul.f32 %v456, %v470
      %v500 = vmul.f32 %v459, %v470
      %v501 = vmul.f32 %v461, %v470
      %v502 = vmul.f32 %v464, %v470
      %v503 = vmul.f32 %v466, %v470
      %v504 = vld [vmem:[%s3] sm:$0x1]
      %v506 = vperm.slane %v504, 0
      %v508 = vadd.f32 %v472, %v506
      %v509 = vadd.f32 %v473, %v506
      %v510 = vadd.f32 %v474, %v506
      %v511 = vadd.f32 %v475, %v506
      %v512 = vadd.f32 %v476, %v506
      %v513 = vadd.f32 %v477, %v506
      %v514 = vadd.f32 %v478, %v506
      %v515 = vadd.f32 %v479, %v506
      %v516 = vadd.f32 %v480, %v506
      %v517 = vadd.f32 %v481, %v506
      %v518 = vadd.f32 %v482, %v506
      %v519 = vadd.f32 %v483, %v506
      %v520 = vadd.f32 %v484, %v506
      %v521 = vadd.f32 %v485, %v506
      %v522 = vadd.f32 %v486, %v506
      %v523 = vadd.f32 %v487, %v506
      %v524 = vadd.f32 %v488, %v506
      %v525 = vadd.f32 %v489, %v506
      %v526 = vadd.f32 %v490, %v506
      %v527 = vadd.f32 %v491, %v506
      %v528 = vadd.f32 %v492, %v506
      %v529 = vadd.f32 %v493, %v506
      %v530 = vadd.f32 %v494, %v506
      %v531 = vadd.f32 %v495, %v506
      %v532 = vadd.f32 %v496, %v506
      %v533 = vadd.f32 %v497, %v506
      %v534 = vadd.f32 %v498, %v506
      %v535 = vadd.f32 %v499, %v506
      %v536 = vadd.f32 %v500, %v506
      %v537 = vadd.f32 %v501, %v506
      %v538 = vadd.f32 %v502, %v506
      %v539 = vadd.f32 %v503, %v506
      %v540 = vmax.f32 %v508, 0.0
      %v541 = vmax.f32 %v509, 0.0
      %v542 = vmax.f32 %v510, 0.0
      %v543 = vmax.f32 %v511, 0.0
      %v544 = vmax.f32 %v512, 0.0
      %v545 = vmax.f32 %v513, 0.0
      %v546 = vmax.f32 %v514, 0.0
      %v547 = vmax.f32 %v515, 0.0
      %v548 = vmax.f32 %v516, 0.0
      %v549 = vmax.f32 %v517, 0.0
      %v550 = vmax.f32 %v518, 0.0
      %v551 = vmax.f32 %v519, 0.0
      %v552 = vmax.f32 %v520, 0.0
      %v553 = vmax.f32 %v521, 0.0
      %v554 = vmax.f32 %v522, 0.0
      %v555 = vmax.f32 %v523, 0.0
      %v556 = vmax.f32 %v524, 0.0
      %v557 = vmax.f32 %v525, 0.0
      %v558 = vmax.f32 %v526, 0.0
      %v559 = vmax.f32 %v527, 0.0
      %v560 = vmax.f32 %v528, 0.0
      %v561 = vmax.f32 %v529, 0.0
      %v562 = vmax.f32 %v530, 0.0
      %v563 = vmax.f32 %v531, 0.0
      %v564 = vmax.f32 %v532, 0.0
      %v565 = vmax.f32 %v533, 0.0
      %v566 = vmax.f32 %v534, 0.0
      %v567 = vmax.f32 %v535, 0.0
      %v568 = vmax.f32 %v536, 0.0
      %v569 = vmax.f32 %v537, 0.0
      %v570 = vmax.f32 %v538, 0.0
      %v571 = vmax.f32 %v539, 0.0
      %v572 = vpack.c.bf16 %v540, %v540
      %v573 = vpack.c.bf16 %v541, %v541
      %v574 = vpack.c.bf16 %v542, %v542
      %v575 = vpack.c.bf16 %v543, %v543
      %v576 = vpack.c.bf16 %v544, %v544
      %v577 = vpack.c.bf16 %v545, %v545
      %v578 = vpack.c.bf16 %v546, %v546
      %v579 = vpack.c.bf16 %v547, %v547
      %v580 = vpack.c.bf16 %v548, %v548
      %v581 = vpack.c.bf16 %v549, %v549
      %v582 = vpack.c.bf16 %v550, %v550
      %v583 = vpack.c.bf16 %v551, %v551
      %v584 = vpack.c.bf16 %v552, %v552
      %v585 = vpack.c.bf16 %v553, %v553
      %v586 = vpack.c.bf16 %v554, %v554
      %v587 = vpack.c.bf16 %v555, %v555
      %v588 = vpack.c.bf16 %v556, %v556
      %v589 = vpack.c.bf16 %v557, %v557
      %v590 = vpack.c.bf16 %v558, %v558
      %v591 = vpack.c.bf16 %v559, %v559
      %v592 = vpack.c.bf16 %v560, %v560
      %v593 = vpack.c.bf16 %v561, %v561
      %v594 = vpack.c.bf16 %v562, %v562
      %v595 = vpack.c.bf16 %v563, %v563
      %v596 = vpack.c.bf16 %v564, %v564
      %v597 = vpack.c.bf16 %v565, %v565
      %v598 = vpack.c.bf16 %v566, %v566
      %v599 = vpack.c.bf16 %v567, %v567
      %v600 = vpack.c.bf16 %v568, %v568
      %v601 = vpack.c.bf16 %v569, %v569
      %v602 = vpack.c.bf16 %v570, %v570
      %v603 = vpack.c.bf16 %v571, %v571
      %vm604 = vcmask 519168
      %605 = vst.msk [vmem:[%s199] sm:$0xf] %vm604, %v572
      %606 = vst.msk [vmem:[%s199 + $0x4] sm:$0xf] %vm604, %v573
      %607 = vst.msk [vmem:[%s199 + $0x8] sm:$0xf] %vm604, %v574
      %608 = vst.msk [vmem:[%s199 + $0xc] sm:$0xf] %vm604, %v575
      %609 = vst.msk [vmem:[%s199 + $0x10] sm:$0xf] %vm604, %v576
      %610 = vst.msk [vmem:[%s199 + $0x14] sm:$0xf] %vm604, %v577
      %611 = vst.msk [vmem:[%s199 + $0x18] sm:$0xf] %vm604, %v578
      %612 = vst.msk [vmem:[%s199 + $0x1c] sm:$0xf] %vm604, %v579
      %613 = vst.msk [vmem:[%s199 + $0x20] sm:$0xf] %vm604, %v580
      %614 = vst.msk [vmem:[%s199 + $0x24] sm:$0xf] %vm604, %v581
      %615 = vst.msk [vmem:[%s199 + $0x28] sm:$0xf] %vm604, %v582
      %616 = vst.msk [vmem:[%s199 + $0x2c] sm:$0xf] %vm604, %v583
      %617 = vst.msk [vmem:[%s199 + $0x30] sm:$0xf] %vm604, %v584
      %618 = vst.msk [vmem:[%s199 + $0x34] sm:$0xf] %vm604, %v585
      %619 = vst.msk [vmem:[%s199 + $0x38] sm:$0xf] %vm604, %v586
      %620 = vst.msk [vmem:[%s199 + $0x3c] sm:$0xf] %vm604, %v587
      %621 = vst.msk [vmem:[%s199 + $0x40] sm:$0xf] %vm604, %v588
      %622 = vst.msk [vmem:[%s199 + $0x44] sm:$0xf] %vm604, %v589
      %623 = vst.msk [vmem:[%s199 + $0x48] sm:$0xf] %vm604, %v590
      %624 = vst.msk [vmem:[%s199 + $0x4c] sm:$0xf] %vm604, %v591
      %625 = vst.msk [vmem:[%s199 + $0x50] sm:$0xf] %vm604, %v592
      %626 = vst.msk [vmem:[%s199 + $0x54] sm:$0xf] %vm604, %v593
      %627 = vst.msk [vmem:[%s199 + $0x58] sm:$0xf] %vm604, %v594
      %628 = vst.msk [vmem:[%s199 + $0x5c] sm:$0xf] %vm604, %v595
      %629 = vst.msk [vmem:[%s199 + $0x60] sm:$0xf] %vm604, %v596
      %630 = vst.msk [vmem:[%s199 + $0x64] sm:$0xf] %vm604, %v597
      %631 = vst.msk [vmem:[%s199 + $0x68] sm:$0xf] %vm604, %v598
      %632 = vst.msk [vmem:[%s199 + $0x6c] sm:$0xf] %vm604, %v599
      %633 = vst.msk [vmem:[%s199 + $0x70] sm:$0xf] %vm604, %v600
      %634 = vst.msk [vmem:[%s199 + $0x74] sm:$0xf] %vm604, %v601
      %635 = vst.msk [vmem:[%s199 + $0x78] sm:$0xf] %vm604, %v602
      %636 = vst.msk [vmem:[%s199 + $0x7c] sm:$0xf] %vm604, %v603
      %s637 = smul.u32 32, %s15
      %p638 = scmp.lt.s32.totalorder %s637, 63
      %s639 = scalar_select %p638, %s637, 63
      %s640 = smul.addr %s639, 4
      %s641 = scalar_lea.vmem %s4, %s640
      // Predicated region
      $region37: #{res_bottleneck_block.4} parent=35 // pred_check
        %p642 = pneg %p122
      $region38: #{res_bottleneck_block.4} parent=35 // pred_check_branch
        %644 = sbr.rel (%p642) target = $region40
      $region39: #{res_bottleneck_block.4} parent=35 // pred_region
        %s645 = smul.u32 32, %s15
      $region40: #{res_bottleneck_block.4} parent=35 // pred_fallthru
        _
    $region36: #{res_bottleneck_block.4} parent=5 // pred_fallthru
      _
    %p646 = scmp.le.s32.totalorder 2, %s10
    // Predicated region
    $region41: #{res_bottleneck_block.4} parent=5 // pred_check
      %p647 = pneg %p646
    $region42: #{res_bottleneck_block.4} parent=5 // pred_check_branch
      %649 = sbr.rel (%p647) target = $region44
    $region43: #{res_bottleneck_block.4} parent=5 // pred_region
      %s650 = ssub.s32 %s10, 2
      // Predicated region
      $region45: #{res_bottleneck_block.4} parent=43 // pred_check
        %p651 = pneg %p128
      $region46: #{res_bottleneck_block.4} parent=43 // pred_check_branch
        %653 = sbr.rel (%p651) target = $region48
      $region47: #{res_bottleneck_block.4} parent=43 // pred_region
        %s654 = smul.u32 32, %s16
        %p655 = scmp.lt.s32.totalorder %s654, 63
        %s656 = scalar_select %p655, %s654, 63
        %s657 = smul.addr %s656, 4
        %s658 = scalar_lea.vmem %s4, %s657
      $region48: #{res_bottleneck_block.4} parent=43 // pred_fallthru
        _
    $region44: #{res_bottleneck_block.4} parent=5 // pred_fallthru
      _
  $region6: #{res_bottleneck_block.4} parent=0 // loop_footer
    %s14 = sadd.s32 1, %s10
  $region7: #{res_bottleneck_block.4} parent=0 // loop_footer_branch
    %9 = sbr.rel target = $region3
  $region8: #{res_bottleneck_block.4} parent=0 // loop_exit
    _

// kernel: res_bottleneck_block.6
$region0: #{res_bottleneck_block.6}
  #allocation0 [shape = 'u32[]', space=smem, size = 0x4, offset = 0x4, fixed_abs, tag = 'smem constant byte address 0x4 - core index']
  #allocation1 [shape = 'u32[72,128]{1,0:T(1,128)}', space=vmem, size = 0x9000, scoped, tag = 'internal scratch']
  %s0 = inlined_call_operand.vmem [shape: f32[2,1,64], index: 0, kind: input, shape index: {}]
  %s1 = inlined_call_operand.vmem [shape: f32[64,8], index: 1, kind: input, shape index: {}]
  %s2 = inlined_call_operand.vmem [shape: f32[1,8], index: 2, kind: input, shape index: {}]
  %s3 = inlined_call_operand.vmem [shape: f32[8,64], index: 3, kind: input, shape index: {}]
  %s4 = inlined_call_operand.vmem [shape: f32[1,64], index: 4, kind: input, shape index: {}]
  %s5 = inlined_call_operand.vmem [shape: f32[2,1,64], index: 5, kind: output, shape index: {}]
  %s6 = sld [smem:[#allocation0]]
  $region30: #{res_bottleneck_block.6} parent=0
    _
  %s8 = ssub.s32 1, %s6
  %s9 = scalar_select 0, %s8, %s6
  // Predicated region
  $region2: #{res_bottleneck_block.6} parent=0 // pred_check
    _
  $region3: #{res_bottleneck_block.6} parent=0 // pred_check_branch
    %11 = sbr.rel (0) target = $region5
  $region4: #{res_bottleneck_block.6} parent=0 // pred_region
    _
  $region5: #{res_bottleneck_block.6} parent=0 // pred_fallthru
    _
  // Predicated region
  $region6: #{res_bottleneck_block.6} parent=0 // pred_check
    _
  $region7: #{res_bottleneck_block.6} parent=0 // pred_check_branch
    %13 = sbr.rel (0) target = $region9
  $region8: #{res_bottleneck_block.6} parent=0 // pred_region
    _
  $region9: #{res_bottleneck_block.6} parent=0 // pred_fallthru
    _
  // Predicated region
  $region10: #{res_bottleneck_block.6} parent=0 // pred_check
    _
  $region11: #{res_bottleneck_block.6} parent=0 // pred_check_branch
    %15 = sbr.rel (0) target = $region13
  $region12: #{res_bottleneck_block.6} parent=0 // pred_region
    _
  $region13: #{res_bottleneck_block.6} parent=0 // pred_fallthru
    _
  // Predicated region
  $region14: #{res_bottleneck_block.6} parent=0 // pred_check
    _
  $region15: #{res_bottleneck_block.6} parent=0 // pred_check_branch
    %17 = sbr.rel (0) target = $region17
  $region16: #{res_bottleneck_block.6} parent=0 // pred_region
    _
  $region17: #{res_bottleneck_block.6} parent=0 // pred_fallthru
    _
  // Predicated region
  $region18: #{res_bottleneck_block.6} parent=0 // pred_check
    _
  $region19: #{res_bottleneck_block.6} parent=0 // pred_check_branch
    %19 = sbr.rel (0) target = $region21
  $region20: #{res_bottleneck_block.6} parent=0 // pred_region
    _
  $region21: #{res_bottleneck_block.6} parent=0 // pred_fallthru
    _
  %v20 = vld [vmem:[%s0] sm:$0x1]
  %v21 = vld [vmem:[%s0 + $0x1] sm:$0x1]
  %v22 = vmul.f32 %v20, 0.015625
  %v23 = vmul.f32 %v21, 0.015625
  %v24 = vld [vmem:[%s1] sm:$0xff]
  %v25 = vld [vmem:[%s1 + $0x8] sm:$0xff]
  %v26 = vld [vmem:[%s1 + $0x10] sm:$0xff]
  %v27 = vld [vmem:[%s1 + $0x18] sm:$0xff]
  %v28 = vld [vmem:[%s1 + $0x20] sm:$0xff]
  %v29 = vld [vmem:[%s1 + $0x28] sm:$0xff]
  %v30 = vld [vmem:[%s1 + $0x30] sm:$0xff]
  %v31 = vld [vmem:[%s1 + $0x38] sm:$0xff]
  %v32 = vld [vmem:[%s2] sm:$0x1]
  %v34 = vperm.slane %v32, 0
  %38 = vst [vmem:[#allocation1] ss:$9 sm:$0xff] %v22
  %s39 = scalar_lea.vmem [#allocation1], 1
  %40 = vst [vmem:[%s39] ss:$9 sm:$0xff] %v23
  %v41 = vld [vmem:[#allocation1] sm:$0xff]
  %vm42 = vcmask 523264
  %v43 = vsel %vm42, %v41, 0
  %45 = vmatpush.msra.mxu0 0.0
  %46 = vmatpush.msra.mxu0 0.0
  %47 = vmatpush.msra.mxu0 0.0
  %48 = vmatpush.msra.mxu0 0.0
  %49 = vmatpush.msra.mxu0 0.0
  %50 = vmatpush.msra.mxu0 0.0
  %51 = vmatpush.msra.mxu0 0.0
  %52 = vmatpush.msra.mxu0 0.0
  %53 = vmatpush.msra.mxu0 %v31
  %54 = vmatpush.msra.mxu0 %v30
  %55 = vmatpush.msra.mxu0 %v29
  %56 = vmatpush.msra.mxu0 %v28
  %57 = vmatpush.msra.mxu0 %v27
  %58 = vmatpush.msra.mxu0 %v26
  %59 = vmatpush.msra.mxu0 %v25
  %60 = vmatpush.msra.mxu0 %v24
  %61 = vmatmul.f32.gmra.mxu0 %v43
  %v62 = vpop.f32.mrf.mxu0
  %v63 = vadd.f32 %v34, %v62
  %64 = vdwg.mxu0
  %v65 = vmax.f32 %v63, 0.0
  %v66 = vld [vmem:[%s3] sm:$0xff]
  %v67 = vld [vmem:[%s4] sm:$0x1]
  %v69 = vperm.slane %v67, 0
  %vm71 = vcmask 64512
  %v73 = vsel %vm71, %v65, 0
  %75 = vmatpush.msra.mxu0 0.0
  %76 = vmatpush.msra.mxu0 0.0
  %77 = vmatpush.msra.mxu0 0.0
  %78 = vmatpush.msra.mxu0 0.0
  %79 = vmatpush.msra.mxu0 0.0
  %80 = vmatpush.msra.mxu0 0.0
  %81 = vmatpush.msra.mxu0 0.0
  %82 = vmatpush.msra.mxu0 0.0
  %83 = vmatpush.msra.mxu0 0.0
  %84 = vmatpush.msra.mxu0 0.0
  %85 = vmatpush.msra.mxu0 0.0
  %86 = vmatpush.msra.mxu0 0.0
  %87 = vmatpush.msra.mxu0 0.0
  %88 = vmatpush.msra.mxu0 0.0
  %89 = vmatpush.msra.mxu0 0.0
  %90 = vmatpush.msra.mxu0 %v66
  %91 = vmatmul.f32.gmra.mxu0 %v73
  %v92 = vpop.f32.mrf.mxu0
  %v93 = vadd.f32 %v69, %v92
  %94 = vdwg.mxu0
  %v95 = vsub.f32 0.0, %v93
  %v96 = vmul.f32 %v95, 1.442695
  %v97 = vpow.pop %v96
  %v98 = vadd.f32 %v97, 1.0
  %v99 = vrcp.pop %v98
  %v101 = vrot.slane %v99, 1
  %vm103 = vcmask 516096
  %104 = vst.msk [vmem:[%s5] sm:$0x1] %vm103, %v99
  %105 = vst.msk [vmem:[%s5 + $0x1] sm:$0x1] %vm103, %v101
  // Predicated region
  $region22: #{res_bottleneck_block.6} parent=0 // pred_check
    _
  $region23: #{res_bottleneck_block.6} parent=0 // pred_check_branch
    %107 = sbr.rel (0) target = $region25
  $region24: #{res_bottleneck_block.6} parent=0 // pred_region
    _
  $region25: #{res_bottleneck_block.6} parent=0 // pred_fallthru
    _
  // Predicated region
  $region26: #{res_bottleneck_block.6} parent=0 // pred_check
    _
  $region27: #{res_bottleneck_block.6} parent=0 // pred_check_branch
    %109 = sbr.rel (0) target = $region29
  $region28: #{res_bottleneck_block.6} parent=0 // pred_region
    _
  $region29: #{res_bottleneck_block.6} parent=0 // pred_fallthru
    _

// kernel: res_bottleneck_block.7
$region0: #{res_bottleneck_block.7}
  #allocation0 [shape = 'u32[]', space=smem, size = 0x4, offset = 0x4, fixed_abs, tag = 'smem constant byte address 0x4 - core index']
  #allocation1 [shape = 'u32[72,128]{1,0:T(1,128)}', space=vmem, size = 0x9000, scoped, tag = 'internal scratch']
  %s0 = inlined_call_operand.vmem [shape: bf16[2,64,64], index: 0, kind: input, shape index: {}]
  %s1 = inlined_call_operand.vmem [shape: f32[2,1,64], index: 1, kind: input, shape index: {}]
  %s2 = inlined_call_operand.vmem [shape: bf16[2,64,32], index: 2, kind: input, shape index: {}]
  %s3 = inlined_call_operand.vmem [shape: bf16[64,64], index: 3, kind: input, shape index: {}]
  %s4 = inlined_call_operand.vmem [shape: f32[1,64], index: 4, kind: input, shape index: {}]
  %s5 = inlined_call_operand.vmem [shape: f32[1,64], index: 5, kind: input, shape index: {}]
  %s6 = inlined_call_operand.vmem [shape: bf16[32,64], index: 6, kind: input, shape index: {}]
  %s7 = inlined_call_operand.vmem [shape: f32[1,64], index: 7, kind: input, shape index: {}]
  %s8 = inlined_call_operand.vmem [shape: f32[1,64], index: 8, kind: input, shape index: {}]
  %s9 = inlined_call_operand.hbm [shape: f32[2,64,64], index: 9, kind: output, shape index: {}]
  %s10 = sld [smem:[#allocation0]]
  $region69: #{res_bottleneck_block.7} parent=0
    _
  %s12 = ssub.s32 1, %s10
  %s13 = scalar_select 0, %s12, %s10
  $region1: #{res_bottleneck_block.7} parent=0
    #allocation2 [shape = 'u8[65536]{0}', space=vmem, size = 0x10000, scoped, tag = 'output window, operand 0']
    #allocation3 [shape = 's32[2]{0}', space=sflag, size = 0x8, scoped, tag = 'scoped memory for res_bottleneck_block.7']
    %14 = vsyncpa [#allocation3], 0
    %s15 = scalar_lea.sflag [#allocation3], 1
    %16 = vsyncpa %s15, 0
    loop: start=0, step=1, limit=4
    $region2: #{res_bottleneck_block.7} parent=1 // loop_pre_header
      _
    $region3: #{res_bottleneck_block.7} parent=1 // loop_header
      %s18 = sphi 0, %s22
      %p19 = scmp.ge.s32.totalorder %s18, 4
      %s25 = sphi 0, %s37
      %s26 = sphi 0, %s33
      %s27 = sphi 0, %s25
      %s28 = sphi 0, %s26
      %s29 = sphi 0, %s27
      %s30 = sphi 0, %s28
      %s42 = sphi 0, %s44
      %s45 = sphi 0, %s42
      %s46 = sphi 0, %s45
      %s62 = sphi 0, %s46
      %s68 = sphi 0, %s70
      %s71 = sphi 0, %s68
      %s72 = sphi 0, %s71
      %s88 = sphi 0, %s72
      %s96 = sphi 0, %s98
      %s99 = sphi 0, %s96
      %s100 = sphi 0, %s99
      %s116 = sphi 0, %s100
      %s120 = sphi 0, %s120
      %s122 = sphi 0, %s120
      %s123 = sphi 0, %s122
      %s137 = sphi 0, %s123
      %s141 = sphi 0, %s141
      %s143 = sphi 0, %s141
      %s144 = sphi 0, %s143
      %s158 = sphi 0, %s144
      %s162 = sphi 0, %s162
      %s164 = sphi 0, %s162
      %s165 = sphi 0, %s164
      %s179 = sphi 0, %s165
      %s183 = sphi 0, %s183
      %s185 = sphi 0, %s183
      %s186 = sphi 0, %s185
      %s200 = sphi 0, %s186
      %s204 = sphi 0, %s204
      %s206 = sphi 0, %s204
      %s207 = sphi 0, %s206
      %s221 = sphi 0, %s207
      %s225 = sphi 0, %s225
      %s227 = sphi 0, %s225
      %s228 = sphi 0, %s227
      %s242 = sphi 0, %s228
      %s250 = sphi 0, %s252
      %s253 = sphi 0, %s250
      %s254 = sphi 0, %s253
      %s270 = sphi 0, %s254
    $region4: #{res_bottleneck_block.7} parent=1 // loop_header_branch
      %21 = sbr.rel (%p19) target = $region8
    $region5: #{res_bottleneck_block.7} parent=1 // loop_body
      %s23 = ssub.s32 %s18, 1
      %s24 = ssub.s32 %s18, 2
      %s31 = sadd.s32 1, %s26
      %p32 = scmp.ge.s32.totalorder %s31, 1
      %s33 = scalar_select %p32, 0, %s31
      %s34 = sadd.s32 1, %s25
      %s35 = scalar_select %p32, %s34, %s25
      %p36 = scmp.ge.s32.totalorder %s35, 2
      %s37 = scalar_select %p36, 0, %s35
      %s38 = ssub.s32 %s25, %s37
      %s39 = ssub.s32 %s26, %s33
      %s40 = sor.u32 %s38, %s39
      %p41 = scmp.eq.s32.totalorder %s40, 0
      %s43 = sadd.s32 %s42, 1
      %s44 = scalar_select %p41, %s42, %s43
      %p47 = pneg %p41
      %p48 = scmp.eq.s32.totalorder %s18, 1
      %p49 = por %p47, %p48
      %p50 = scmp.ne.s32.totalorder %s42, %s45
      %p51 = scmp.eq.s32.totalorder %s18, 0
      %p52 = por %p50, %p51
      %p53 = scmp.ne.s32.totalorder %s42, %s45
      %p54 = scmp.eq.s32.totalorder %s23, 1
      %p55 = por %p53, %p54
      %p56 = scmp.ne.s32.totalorder %s45, %s46
      %p57 = scmp.eq.s32.totalorder %s23, 0
      %p58 = por %p56, %p57
      %p59 = scmp.ne.s32.totalorder %s45, %s46
      %p60 = scmp.eq.s32.totalorder %s24, 1
      %p61 = por %p59, %p60
      %p63 = scmp.ne.s32.totalorder %s46, %s62
      %p64 = scmp.eq.s32.totalorder %s24, 0
      %p65 = por %p63, %p64
      %s66 = ssub.s32 %s25, %s37
      %p67 = scmp.eq.s32.totalorder %s66, 0
      %s69 = sadd.s32 %s68, 1
      %s70 = scalar_select %p67, %s68, %s69
      %p73 = pneg %p67
      %p74 = scmp.eq.s32.totalorder %s18, 1
      %p75 = por %p73, %p74
      %p76 = scmp.ne.s32.totalorder %s68, %s71
      %p77 = scmp.eq.s32.totalorder %s18, 0
      %p78 = por %p76, %p77
      %p79 = scmp.ne.s32.totalorder %s68, %s71
      %p80 = scmp.eq.s32.totalorder %s23, 1
      %p81 = por %p79, %p80
      %p82 = scmp.ne.s32.totalorder %s71, %s72
      %p83 = scmp.eq.s32.totalorder %s23, 0
      %p84 = por %p82, %p83
      %p85 = scmp.ne.s32.totalorder %s71, %s72
      %p86 = scmp.eq.s32.totalorder %s24, 1
      %p87 = por %p85, %p86
      %p89 = scmp.ne.s32.totalorder %s72, %s88
      %p90 = scmp.eq.s32.totalorder %s24, 0
      %p91 = por %p89, %p90
      %s92 = ssub.s32 %s25, %s37
      %s93 = ssub.s32 %s26, %s33
      %s94 = sor.u32 %s92, %s93
      %p95 = scmp.eq.s32.totalorder %s94, 0
      %s97 = sadd.s32 %s96, 1
      %s98 = scalar_select %p95, %s96, %s97
      %p101 = pneg %p95
      %p102 = scmp.eq.s32.totalorder %s18, 1
      %p103 = por %p101, %p102
      %p104 = scmp.ne.s32.totalorder %s96, %s99
      %p105 = scmp.eq.s32.totalorder %s18, 0
      %p106 = por %p104, %p105
      %p107 = scmp.ne.s32.totalorder %s96, %s99
      %p108 = scmp.eq.s32.totalorder %s23, 1
      %p109 = por %p107, %p108
      %p110 = scmp.ne.s32.totalorder %s99, %s100
      %p111 = scmp.eq.s32.totalorder %s23, 0
      %p112 = por %p110, %p111
      %p113 = scmp.ne.s32.totalorder %s99, %s100
      %p114 = scmp.eq.s32.totalorder %s24, 1
      %p115 = por %p113, %p114
      %p117 = scmp.ne.s32.totalorder %s100, %s116
      %p118 = scmp.eq.s32.totalorder %s24, 0
      %p119 = por %p117, %p118
      %s121 = sadd.s32 %s120, 1
      %p124 = scmp.eq.s32.totalorder %s18, 1
      %p125 = scmp.ne.s32.totalorder %s120, %s122
      %p126 = scmp.eq.s32.totalorder %s18, 0
      %p127 = por %p125, %p126
      %p128 = scmp.ne.s32.totalorder %s120, %s122
      %p129 = scmp.eq.s32.totalorder %s23, 1
      %p130 = por %p128, %p129
      %p131 = scmp.ne.s32.totalorder %s122, %s123
      %p132 = scmp.eq.s32.totalorder %s23, 0
      %p133 = por %p131, %p132
      %p134 = scmp.ne.s32.totalorder %s122, %s123
      %p135 = scmp.eq.s32.totalorder %s24, 1
      %p136 = por %p134, %p135
      %p138 = scmp.ne.s32.totalorder %s123, %s137
      %p139 = scmp.eq.s32.totalorder %s24, 0
      %p140 = por %p138, %p139
      %s142 = sadd.s32 %s141, 1
      %p145 = scmp.eq.s32.totalorder %s18, 1
      %p146 = scmp.ne.s32.totalorder %s141, %s143
      %p147 = scmp.eq.s32.totalorder %s18, 0
      %p148 = por %p146, %p147
      %p149 = scmp.ne.s32.totalorder %s141, %s143
      %p150 = scmp.eq.s32.totalorder %s23, 1
      %p151 = por %p149, %p150
      %p152 = scmp.ne.s32.totalorder %s143, %s144
      %p153 = scmp.eq.s32.totalorder %s23, 0
      %p154 = por %p152, %p153
      %p155 = scmp.ne.s32.totalorder %s143, %s144
      %p156 = scmp.eq.s32.totalorder %s24, 1
      %p157 = por %p155, %p156
      %p159 = scmp.ne.s32.totalorder %s144, %s158
      %p160 = scmp.eq.s32.totalorder %s24, 0
      %p161 = por %p159, %p160
      %s163 = sadd.s32 %s162, 1
      %p166 = scmp.eq.s32.totalorder %s18, 1
      %p167 = scmp.ne.s32.totalorder %s162, %s164
      %p168 = scmp.eq.s32.totalorder %s18, 0
      %p169 = por %p167, %p168
      %p170 = scmp.ne.s32.totalorder %s162, %s164
      %p171 = scmp.eq.s32.totalorder %s23, 1
      %p172 = por %p170, %p171
      %p173 = scmp.ne.s32.totalorder %s164, %s165
      %p174 = scmp.eq.s32.totalorder %s23, 0
      %p175 = por %p173, %p174
      %p176 = scmp.ne.s32.totalorder %s164, %s165
      %p177 = scmp.eq.s32.totalorder %s24, 1
      %p178 = por %p176, %p177
      %p180 = scmp.ne.s32.totalorder %s165, %s179
      %p181 = scmp.eq.s32.totalorder %s24, 0
      %p182 = por %p180, %p181
      %s184 = sadd.s32 %s183, 1
      %p187 = scmp.eq.s32.totalorder %s18, 1
      %p188 = scmp.ne.s32.totalorder %s183, %s185
      %p189 = scmp.eq.s32.totalorder %s18, 0
      %p190 = por %p188, %p189
      %p191 = scmp.ne.s32.totalorder %s183, %s185
      %p192 = scmp.eq.s32.totalorder %s23, 1
      %p193 = por %p191, %p192
      %p194 = scmp.ne.s32.totalorder %s185, %s186
      %p195 = scmp.eq.s32.totalorder %s23, 0
      %p196 = por %p194, %p195
      %p197 = scmp.ne.s32.totalorder %s185, %s186
      %p198 = scmp.eq.s32.totalorder %s24, 1
      %p199 = por %p197, %p198
      %p201 = scmp.ne.s32.totalorder %s186, %s200
      %p202 = scmp.eq.s32.totalorder %s24, 0
      %p203 = por %p201, %p202
      %s205 = sadd.s32 %s204, 1
      %p208 = scmp.eq.s32.totalorder %s18, 1
      %p209 = scmp.ne.s32.totalorder %s204, %s206
      %p210 = scmp.eq.s32.totalorder %s18, 0
      %p211 = por %p209, %p210
      %p212 = scmp.ne.s32.totalorder %s204, %s206
      %p213 = scmp.eq.s32.totalorder %s23, 1
      %p214 = por %p212, %p213
      %p215 = scmp.ne.s32.totalorder %s206, %s207
      %p216 = scmp.eq.s32.totalorder %s23, 0
      %p217 = por %p215, %p216
      %p218 = scmp.ne.s32.totalorder %s206, %s207
      %p219 = scmp.eq.s32.totalorder %s24, 1
      %p220 = por %p218, %p219
      %p222 = scmp.ne.s32.totalorder %s207, %s221
      %p223 = scmp.eq.s32.totalorder %s24, 0
      %p224 = por %p222, %p223
      %s226 = sadd.s32 %s225, 1
      %p229 = scmp.eq.s32.totalorder %s18, 1
      %p230 = scmp.ne.s32.totalorder %s225, %s227
      %p231 = scmp.eq.s32.totalorder %s18, 0
      %p232 = por %p230, %p231
      %p233 = scmp.ne.s32.totalorder %s225, %s227
      %p234 = scmp.eq.s32.totalorder %s23, 1
      %p235 = por %p233, %p234
      %p236 = scmp.ne.s32.totalorder %s227, %s228
      %p237 = scmp.eq.s32.totalorder %s23, 0
      %p238 = por %p236, %p237
      %p239 = scmp.ne.s32.totalorder %s227, %s228
      %p240 = scmp.eq.s32.totalorder %s24, 1
      %p241 = por %p239, %p240
      %p243 = scmp.ne.s32.totalorder %s228, %s242
      %p244 = scmp.eq.s32.totalorder %s24, 0
      %p245 = por %p243, %p244
      %s246 = ssub.s32 %s25, %s37
      %s247 = ssub.s32 %s26, %s33
      %s248 = sor.u32 %s246, %s247
      %p249 = scmp.eq.s32.totalorder %s248, 0
      %s251 = sadd.s32 %s250, 1
      %s252 = scalar_select %p249, %s250, %s251
      %p255 = pneg %p249
      %p256 = scmp.eq.s32.totalorder %s18, 1
      %p257 = por %p255, %p256
      %p258 = scmp.ne.s32.totalorder %s250, %s253
      %p259 = scmp.eq.s32.totalorder %s18, 0
      %p260 = por %p258, %p259
      %p261 = scmp.ne.s32.totalorder %s250, %s253
      %p262 = scmp.eq.s32.totalorder %s23, 1
      %p263 = por %p261, %p262
      %p264 = scmp.ne.s32.totalorder %s253, %s254
      %p265 = scmp.eq.s32.totalorder %s23, 0
      %p266 = por %p264, %p265
      %p267 = scmp.ne.s32.totalorder %s253, %s254
      %p268 = scmp.eq.s32.totalorder %s24, 1
      %p269 = por %p267, %p268
      %p271 = scmp.ne.s32.totalorder %s254, %s270
      %p272 = scmp.eq.s32.totalorder %s24, 0
      %p273 = por %p271, %p272
      %p274 = scmp.le.s32.totalorder 1, %s18
      %p275 = scmp.lt.s32.totalorder %s18, 3
      %p276 = pnand %p274, %p275
      %p277 = pneg %p276
      // Predicated region
      $region9: #{res_bottleneck_block.7} parent=5 // pred_check
        _
      $region10: #{res_bottleneck_block.7} parent=5 // pred_check_branch
        %279 = sbr.rel (%p276) target = $region12
      $region11: #{res_bottleneck_block.7} parent=5 // pred_region
        %s280 = ssub.s32 %s18, 1
        // Predicated region
        $region13: #{res_bottleneck_block.7} parent=11 // pred_check
          %p281 = pneg %p133
        $region14: #{res_bottleneck_block.7} parent=11 // pred_check_branch
          %283 = sbr.rel (%p281) target = $region16
        $region15: #{res_bottleneck_block.7} parent=11 // pred_region
          _
        $region16: #{res_bottleneck_block.7} parent=11 // pred_fallthru
          _
        // Predicated region
        $region17: #{res_bottleneck_block.7} parent=11 // pred_check
          %p284 = pneg %p154
        $region18: #{res_bottleneck_block.7} parent=11 // pred_check_branch
          %286 = sbr.rel (%p284) target = $region20
        $region19: #{res_bottleneck_block.7} parent=11 // pred_region
          _
        $region20: #{res_bottleneck_block.7} parent=11 // pred_fallthru
          _
        // Predicated region
        $region21: #{res_bottleneck_block.7} parent=11 // pred_check
          %p287 = pneg %p175
        $region22: #{res_bottleneck_block.7} parent=11 // pred_check_branch
          %289 = sbr.rel (%p287) target = $region24
        $region23: #{res_bottleneck_block.7} parent=11 // pred_region
          _
        $region24: #{res_bottleneck_block.7} parent=11 // pred_fallthru
          _
        // Predicated region
        $region25: #{res_bottleneck_block.7} parent=11 // pred_check
          %p290 = pneg %p196
        $region26: #{res_bottleneck_block.7} parent=11 // pred_check_branch
          %292 = sbr.rel (%p290) target = $region28
        $region27: #{res_bottleneck_block.7} parent=11 // pred_region
          _
        $region28: #{res_bottleneck_block.7} parent=11 // pred_fallthru
          _
        // Predicated region
        $region29: #{res_bottleneck_block.7} parent=11 // pred_check
          %p293 = pneg %p217
        $region30: #{res_bottleneck_block.7} parent=11 // pred_check_branch
          %295 = sbr.rel (%p293) target = $region32
        $region31: #{res_bottleneck_block.7} parent=11 // pred_region
          _
        $region32: #{res_bottleneck_block.7} parent=11 // pred_fallthru
          _
        // Predicated region
        $region33: #{res_bottleneck_block.7} parent=11 // pred_check
          %p296 = pneg %p238
        $region34: #{res_bottleneck_block.7} parent=11 // pred_check_branch
          %298 = sbr.rel (%p296) target = $region36
        $region35: #{res_bottleneck_block.7} parent=11 // pred_region
          _
        $region36: #{res_bottleneck_block.7} parent=11 // pred_fallthru
          _
      $region12: #{res_bottleneck_block.7} parent=5 // pred_fallthru
        _
      %p299 = scmp.lt.s32.totalorder %s18, 2
      // Predicated region
      $region37: #{res_bottleneck_block.7} parent=5 // pred_check
        %p300 = pneg %p299
      $region38: #{res_bottleneck_block.7} parent=5 // pred_check_branch
        %302 = sbr.rel (%p300) target = $region40
      $region39: #{res_bottleneck_block.7} parent=5 // pred_region
        // Predicated region
        $region41: #{res_bottleneck_block.7} parent=39 // pred_check
          %p303 = pneg %p52
        $region42: #{res_bottleneck_block.7} parent=39 // pred_check_branch
          %305 = sbr.rel (%p303) target = $region44
        $region43: #{res_bottleneck_block.7} parent=39 // pred_region
          %s306 = smul.u32 8, %s26
          %p307 = scmp.lt.s32.totalorder %s25, 1
          %s308 = scalar_select %p307, %s25, 1
          %p309 = scmp.lt.s32.totalorder %s306, 7
          %s310 = scalar_select %p309, %s306, 7
          %s311 = smul.addr %s308, 8
          %s312 = sadd.s32 %s310, %s311
          %s313 = smul.addr %s312, 4
          %s314 = scalar_lea.vmem %s0, %s313
          %s315 = smul.u32 8, %s26
        $region44: #{res_bottleneck_block.7} parent=39 // pred_fallthru
          _
        // Predicated region
        $region45: #{res_bottleneck_block.7} parent=39 // pred_check
          %p316 = pneg %p78
        $region46: #{res_bottleneck_block.7} parent=39 // pred_check_branch
          %318 = sbr.rel (%p316) target = $region48
        $region47: #{res_bottleneck_block.7} parent=39 // pred_region
          %p319 = scmp.lt.s32.totalorder %s25, 1
          %s320 = scalar_select %p319, %s25, 1
          %s321 = scalar_lea.vmem %s1, %s320
        $region48: #{res_bottleneck_block.7} parent=39 // pred_fallthru
          _
        // Predicated region
        $region49: #{res_bottleneck_block.7} parent=39 // pred_check
          %p322 = pneg %p106
        $region50: #{res_bottleneck_block.7} parent=39 // pred_check_branch
          %324 = sbr.rel (%p322) target = $region52
        $region51: #{res_bottleneck_block.7} parent=39 // pred_region
          %s325 = smul.u32 8, %s26
          %p326 = scmp.lt.s32.totalorder %s25, 1
          %s327 = scalar_select %p326, %s25, 1
          %p328 = scmp.lt.s32.totalorder %s325, 7
          %s329 = scalar_select %p328, %s325, 7
          %s330 = smul.addr %s327, 8
          %s331 = sadd.s32 %s329, %s330
          %s332 = smul.addr %s331, 4
          %s333 = scalar_lea.vmem %s2, %s332
          %s334 = smul.u32 8, %s26
        $region52: #{res_bottleneck_block.7} parent=39 // pred_fallthru
          _
      $region40: #{res_bottleneck_block.7} parent=5 // pred_fallthru
        _
      %p335 = scmp.le.s32.totalorder 1, %s18
      %p336 = scmp.lt.s32.totalorder %s18, 3
      %p337 = pnand %p335, %p336
      %p338 = pneg %p337
      // Predicated region
      $region53: #{res_bottleneck_block.7} parent=5 // pred_check
        _
      $region54: #{res_bottleneck_block.7} parent=5 // pred_check_branch
        %340 = sbr.rel (%p337) target = $region56
      $region55: #{res_bottleneck_block.7} parent=5 // pred_region
        %s341 = ssub.s32 %s18, 1
        %s342 = smul.u32 8, %s28
        %p343 = scmp.lt.s32.totalorder %s27, 1
        %s344 = scalar_select %p343, %s27, 1
        %p345 = scmp.lt.s32.totalorder %s342, 7
        %s346 = scalar_select %p345, %s342, 7
        %s347 = smul.addr %s344, 8
        %s348 = sadd.s32 %s346, %s347
        %s349 = smul.addr %s348, 4
        %s350 = scalar_lea.vmem %s0, %s349
        %p351 = pneg %p58
        %p352 = pneg %p55
        %p353 = scmp.lt.s32.totalorder %s27, 1
        %s354 = scalar_select %p353, %s27, 1
        %s355 = scalar_lea.vmem %s1, %s354
        %p356 = pneg %p84
        %p357 = pneg %p81
        %s358 = smul.u32 8, %s28
        %p359 = scmp.lt.s32.totalorder %s27, 1
        %s360 = scalar_select %p359, %s27, 1
        %p361 = scmp.lt.s32.totalorder %s358, 7
        %s362 = scalar_select %p361, %s358, 7
        %s363 = smul.addr %s360, 8
        %s364 = sadd.s32 %s362, %s363
        %s365 = smul.addr %s364, 4
        %s366 = scalar_lea.vmem %s2, %s365
        %p367 = pneg %p112
        %p368 = pneg %p109
        %p369 = pneg %p133
        %p370 = pneg %p130
        %p371 = pneg %p154
        %p372 = pneg %p151
        %p373 = pneg %p175
        %p374 = pneg %p172
        %p375 = pneg %p196
        %p376 = pneg %p193
        %p377 = pneg %p217
        %p378 = pneg %p214
        %p379 = pneg %p238
        %p380 = pneg %p235
        %p381 = pneg %p266
        %p382 = pneg %p263
        %s383 = sand.u32 %s253, 1
        %s384 = scalar_lea.sflag [#allocation3], %s383
        %s385 = sand.u32 %s253, 1
        %s386 = smul.addr %s385, 64
        %s387 = scalar_lea.vmem [#allocation2], %s386
        %s388 = smul.u32 8, %s28
        %p389 = scmp.lt.s32.totalorder %s27, 1
        %s390 = scalar_select %p389, %s27, 1
        %p391 = scmp.lt.s32.totalorder %s388, 7
        %s392 = scalar_select %p391, %s388, 7
        %s393 = smul.addr %s390, 8
        %s394 = sadd.s32 %s392, %s393
        %s395 = smul.addr %s394, 4
        %s396 = scalar_lea.vmem %s0, %s395
        %s397 = smul.u32 8, %s28
        %p398 = scmp.lt.s32.totalorder %s27, 1
        %s399 = scalar_select %p398, %s27, 1
        %s400 = scalar_lea.vmem %s1, %s399
        %s401 = smul.u32 8, %s28
        %p402 = scmp.lt.s32.totalorder %s27, 1
        %s403 = scalar_select %p402, %s27, 1
        %p404 = scmp.lt.s32.totalorder %s401, 7
        %s405 = scalar_select %p404, %s401, 7
        %s406 = smul.addr %s403, 8
        %s407 = sadd.s32 %s405, %s406
        %s408 = smul.addr %s407, 4
        %s409 = scalar_lea.vmem %s2, %s408
        %s410 = smul.u32 8, %s28
        %s411 = smul.u32 8, %s28
        %v413 = vld [vmem:[%s396] sm:$0xf]
        %v414 = vld [vmem:[%s396 + $0x4] sm:$0xf]
        %v415 = vld [vmem:[%s396 + $0x8] sm:$0xf]
        %v416 = vld [vmem:[%s396 + $0xc] sm:$0xf]
        %v417 = vld [vmem:[%s396 + $0x10] sm:$0xf]
        %v418 = vld [vmem:[%s396 + $0x14] sm:$0xf]
        %v419 = vld [vmem:[%s396 + $0x18] sm:$0xf]
        %v420 = vld [vmem:[%s396 + $0x1c] sm:$0xf]
        %v421 = vunpack.c.l.bf16 %v413
        %v422 = vunpack.c.l.bf16 %v414
        %v423 = vunpack.c.l.bf16 %v415
        %v424 = vunpack.c.l.bf16 %v416
        %v425 = vunpack.c.l.bf16 %v417
        %v426 = vunpack.c.l.bf16 %v418
        %v427 = vunpack.c.l.bf16 %v419
        %v428 = vunpack.c.l.bf16 %v420
        %v429 = vld [vmem:[%s400] sm:$0x1]
        %v431 = vperm.slane %v429, 0
        %v433 = vmul.f32 %v421, %v431
        %v434 = vmul.f32 %v422, %v431
        %v435 = vmul.f32 %v423, %v431
        %v436 = vmul.f32 %v424, %v431
        %v437 = vmul.f32 %v425, %v431
        %v438 = vmul.f32 %v426, %v431
        %v439 = vmul.f32 %v427, %v431
        %v440 = vmul.f32 %v428, %v431
        %v441 = vpack.c.bf16 %v434, %v433
        %v442 = vpack.c.bf16 %v436, %v435
        %v443 = vpack.c.bf16 %v438, %v437
        %v444 = vpack.c.bf16 %v440, %v439
        %v445 = vld [vmem:[%s3] sm:$0xf]
        %v446 = vld [vmem:[%s3 + $0x4] sm:$0xf]
        %v447 = vld [vmem:[%s3 + $0x8] sm:$0xf]
        %v448 = vld [vmem:[%s3 + $0xc] sm:$0xf]
        %v449 = vld [vmem:[%s3 + $0x10] sm:$0xf]
        %v450 = vld [vmem:[%s3 + $0x14] sm:$0xf]
        %v451 = vld [vmem:[%s3 + $0x18] sm:$0xf]
        %v452 = vld [vmem:[%s3 + $0x1c] sm:$0xf]
        %v461 = vunpack.c.l.b16 %v445
        %v462 = vunpack.c.l.b16 %v446
        %v463 = vunpack.c.l.b16 %v447
        %v464 = vunpack.c.l.b16 %v448
        %v465 = vunpack.c.l.b16 %v449
        %v466 = vunpack.c.l.b16 %v450
        %v467 = vunpack.c.l.b16 %v451
        %v468 = vunpack.c.l.b16 %v452
        %v469 = vpack.c.b16 %v462, %v461
        %v470 = vpack.c.b16 %v464, %v463
        %v471 = vpack.c.b16 %v466, %v465
        %v472 = vpack.c.b16 %v468, %v467
        %vm477 = vcmask 523264
        %v479 = vsel %vm477, %v441, 0
        %v482 = vsel %vm477, %v442, 0
        %v485 = vsel %vm477, %v443, 0
        %v488 = vsel %vm477, %v444, 0
        %490 = vmatpush.bf16.msra.mxu0 0
        %491 = vmatpush.bf16.msra.mxu0 0
        %492 = vmatpush.bf16.msra.mxu0 0
        %493 = vmatpush.bf16.msra.mxu0 0
        %494 = vmatpush.bf16.msra.mxu0 %v472
        %495 = vmatpush.bf16.msra.mxu0 %v471
        %496 = vmatpush.bf16.msra.mxu0 %v470
        %497 = vmatpush.bf16.msra.mxu0 %v469
        %498 = vmatmul.bf16.gmra.mxu0 %v479
        %v499 = vpop.f32.mrf.mxu0
        %v500 = vadd.f32 0.0, %v499
        %v501 = vpop.f32.mrf.mxu0
        %v502 = vadd.f32 0.0, %v501
        %503 = vmatmul.bf16.gmra.mxu0 %v482
        %v504 = vpop.f32.mrf.mxu0
        %v505 = vadd.f32 0.0, %v504
        %v506 = vpop.f32.mrf.mxu0
        %v507 = vadd.f32 0.0, %v506
        %508 = vmatmul.bf16.gmra.mxu0 %v485
        %v509 = vpop.f32.mrf.mxu0
        %v510 = vadd.f32 0.0, %v509
        %v511 = vpop.f32.mrf.mxu0
        %v512 = vadd.f32 0.0, %v511
        %513 = vmatmul.bf16.gmra.mxu0 %v488
        %v514 = vpop.f32.mrf.mxu0
        %v515 = vadd.f32 0.0, %v514
        %v516 = vpop.f32.mrf.mxu0
        %v517 = vadd.f32 0.0, %v516
        %518 = vdwg.mxu0
        %v519 = vld [vmem:[%s4] sm:$0x1]
        %v521 = vperm.slane %v519, 0
        %v523 = vmul.f32 %v500, %v521
        %v524 = vmul.f32 %v502, %v521
        %v525 = vmul.f32 %v505, %v521
        %v526 = vmul.f32 %v507, %v521
        %v527 = vmul.f32 %v510, %v521
        %v528 = vmul.f32 %v512, %v521
        %v529 = vmul.f32 %v515, %v521
        %v530 = vmul.f32 %v517, %v521
        %v531 = vld [vmem:[%s5] sm:$0x1]
        %v533 = vperm.slane %v531, 0
        %v535 = vadd.f32 %v523, %v533
        %v536 = vadd.f32 %v524, %v533
        %v537 = vadd.f32 %v525, %v533
        %v538 = vadd.f32 %v526, %v533
        %v539 = vadd.f32 %v527, %v533
        %v540 = vadd.f32 %v528, %v533
        %v541 = vadd.f32 %v529, %v533
        %v542 = vadd.f32 %v530, %v533
        %v543 = vld [vmem:[%s409] sm:$0xf]
        %v544 = vld [vmem:[%s409 + $0x4] sm:$0xf]
        %v545 = vld [vmem:[%s409 + $0x8] sm:$0xf]
        %v546 = vld [vmem:[%s409 + $0xc] sm:$0xf]
        %v547 = vld [vmem:[%s409 + $0x10] sm:$0xf]
        %v548 = vld [vmem:[%s409 + $0x14] sm:$0xf]
        %v549 = vld [vmem:[%s409 + $0x18] sm:$0xf]
        %v550 = vld [vmem:[%s409 + $0x1c] sm:$0xf]
        %v551 = vld [vmem:[%s6] sm:$0xf]
        %v552 = vld [vmem:[%s6 + $0x4] sm:$0xf]
        %v553 = vld [vmem:[%s6 + $0x8] sm:$0xf]
        %v554 = vld [vmem:[%s6 + $0xc] sm:$0xf]
        %v563 = vunpack.c.l.b16 %v543
        %v564 = vunpack.c.l.b16 %v544
        %v565 = vunpack.c.l.b16 %v545
        %v566 = vunpack.c.l.b16 %v546
        %v567 = vunpack.c.l.b16 %v547
        %v568 = vunpack.c.l.b16 %v548
        %v569 = vunpack.c.l.b16 %v549
        %v570 = vunpack.c.l.b16 %v550
        %v571 = vpack.c.b16 %v564, %v563
        %v572 = vpack.c.b16 %v566, %v565
        %v573 = vpack.c.b16 %v568, %v567
        %v574 = vpack.c.b16 %v570, %v569
        %v579 = vunpack.c.l.b16 %v551
        %v580 = vunpack.c.l.b16 %v552
        %v581 = vunpack.c.l.b16 %v553
        %v582 = vunpack.c.l.b16 %v554
        %v583 = vpack.c.b16 %v580, %v579
        %v584 = vpack.c.b16 %v582, %v581
        %vm587 = vcmask 261120
        %v589 = vsel %vm587, %v571, 0
        %v592 = vsel %vm587, %v572, 0
        %v595 = vsel %vm587, %v573, 0
        %v598 = vsel %vm587, %v574, 0
        %600 = vmatpush.bf16.msra.mxu0 0
        %601 = vmatpush.bf16.msra.mxu0 0
        %602 = vmatpush.bf16.msra.mxu0 0
        %603 = vmatpush.bf16.msra.mxu0 0
        %604 = vmatpush.bf16.msra.mxu0 0
        %605 = vmatpush.bf16.msra.mxu0 0
        %606 = vmatpush.bf16.msra.mxu0 %v584
        %607 = vmatpush.bf16.msra.mxu0 %v583
        %608 = vmatmul.bf16.gmra.mxu0 %v589
        %v609 = vpop.f32.mrf.mxu0
        %v610 = vadd.f32 0.0, %v609
        %v611 = vpop.f32.mrf.mxu0
        %v612 = vadd.f32 0.0, %v611
        %613 = vmatmul.bf16.gmra.mxu0 %v592
        %v614 = vpop.f32.mrf.mxu0
        %v615 = vadd.f32 0.0, %v614
        %v616 = vpop.f32.mrf.mxu0
        %v617 = vadd.f32 0.0, %v616
        %618 = vmatmul.bf16.gmra.mxu0 %v595
        %v619 = vpop.f32.mrf.mxu0
        %v620 = vadd.f32 0.0, %v619
        %v621 = vpop.f32.mrf.mxu0
        %v622 = vadd.f32 0.0, %v621
        %623 = vmatmul.bf16.gmra.mxu0 %v598
        %v624 = vpop.f32.mrf.mxu0
        %v625 = vadd.f32 0.0, %v624
        %v626 = vpop.f32.mrf.mxu0
        %v627 = vadd.f32 0.0, %v626
        %628 = vdwg.mxu0
        %v629 = vld [vmem:[%s7] sm:$0x1]
        %v631 = vperm.slane %v629, 0
        %v633 = vmul.f32 %v610, %v631
        %v634 = vmul.f32 %v612, %v631
        %v635 = vmul.f32 %v615, %v631
        %v636 = vmul.f32 %v617, %v631
        %v637 = vmul.f32 %v620, %v631
        %v638 = vmul.f32 %v622, %v631
        %v639 = vmul.f32 %v625, %v631
        %v640 = vmul.f32 %v627, %v631
        %v641 = vld [vmem:[%s8] sm:$0x1]
        %v643 = vperm.slane %v641, 0
        %v645 = vadd.f32 %v633, %v643
        %v646 = vadd.f32 %v634, %v643
        %v647 = vadd.f32 %v635, %v643
        %v648 = vadd.f32 %v636, %v643
        %v649 = vadd.f32 %v637, %v643
        %v650 = vadd.f32 %v638, %v643
        %v651 = vadd.f32 %v639, %v643
        %v652 = vadd.f32 %v640, %v643
        %v653 = vadd.f32 %v535, %v645
        %v654 = vadd.f32 %v536, %v646
        %v655 = vadd.f32 %v537, %v647
        %v656 = vadd.f32 %v538, %v648
        %v657 = vadd.f32 %v539, %v649
        %v658 = vadd.f32 %v540, %v650
        %v659 = vadd.f32 %v541, %v651
        %v660 = vadd.f32 %v542, %v652
        %v661 = vmax.f32 %v653, 0.0
        %v662 = vmax.f32 %v654, 0.0
        %v663 = vmax.f32 %v655, 0.0
        %v664 = vmax.f32 %v656, 0.0
        %v665 = vmax.f32 %v657, 0.0
        %v666 = vmax.f32 %v658, 0.0
        %v667 = vmax.f32 %v659, 0.0
        %v668 = vmax.f32 %v660, 0.0
        %669 = vst.msk [vmem:[%s387] sm:$0xff] %vm477, %v661
        %670 = vst.msk [vmem:[%s387 + $0x8] sm:$0xff] %vm477, %v662
        %671 = vst.msk [vmem:[%s387 + $0x10] sm:$0xff] %vm477, %v663
        %672 = vst.msk [vmem:[%s387 + $0x18] sm:$0xff] %vm477, %v664
        %673 = vst.msk [vmem:[%s387 + $0x20] sm:$0xff] %vm477, %v665
        %674 = vst.msk [vmem:[%s387 + $0x28] sm:$0xff] %vm477, %v666
        %675 = vst.msk [vmem:[%s387 + $0x30] sm:$0xff] %vm477, %v667
        %676 = vst.msk [vmem:[%s387 + $0x38] sm:$0xff] %vm477, %v668
        %s677 = sand.u32 %s253, 1
        %s678 = scalar_lea.sflag [#allocation3], %s677
        %s679 = sand.u32 %s253, 1
        %s680 = smul.addr %s679, 64
        %s681 = scalar_lea.vmem [#allocation2], %s680
        // Predicated region
        $region57: #{res_bottleneck_block.7} parent=55 // pred_check
          %p682 = pneg %p263
        $region58: #{res_bottleneck_block.7} parent=55 // pred_check_branch
          %684 = sbr.rel (%p682) target = $region60
        $region59: #{res_bottleneck_block.7} parent=55 // pred_region
          %s685 = smul.u32 8, %s28
          %687 = vsyncadd %s678, 0
          %s688 = smul.addr %s27, 8
          %s689 = sadd.s32 %s685, %s688
          %s690 = smul.addr %s689, 8
          %s691 = scalar_lea.hbm %s9, %s690
          %s692 = sshll.u32 %s681, 4
          %s693 = int_to_ptr.vmem [resolvable:$true] %s692
          %s694 = sshll.u32 %s691, 4
          %s695 = int_to_ptr.hbm [resolvable:$true] %s694
          %700 = dma.vmem_to_hbm [thread:$0]  %s693, 1024, %s695, %s678, 128, 128, 8
        $region60: #{res_bottleneck_block.7} parent=55 // pred_fallthru
          _
      $region56: #{res_bottleneck_block.7} parent=5 // pred_fallthru
        _
      %p701 = scmp.le.s32.totalorder 2, %s18
      // Predicated region
      $region61: #{res_bottleneck_block.7} parent=5 // pred_check
        %p702 = pneg %p701
      $region62: #{res_bottleneck_block.7} parent=5 // pred_check_branch
        %704 = sbr.rel (%p702) target = $region64
      $region63: #{res_bottleneck_block.7} parent=5 // pred_region
        %s705 = ssub.s32 %s18, 2
        // Predicated region
        $region65: #{res_bottleneck_block.7} parent=63 // pred_check
          %p706 = pneg %p269
        $region66: #{res_bottleneck_block.7} parent=63 // pred_check_branch
          %708 = sbr.rel (%p706) target = $region68
        $region67: #{res_bottleneck_block.7} parent=63 // pred_region
          %s709 = sand.u32 %s254, 1
          %s710 = scalar_lea.sflag [#allocation3], %s709
          %s711 = sand.u32 %s254, 1
          %s712 = smul.addr %s711, 64
          %s713 = scalar_lea.vmem [#allocation2], %s712
          %715 = dma.done %s710, 1024
        $region68: #{res_bottleneck_block.7} parent=63 // pred_fallthru
          _
      $region64: #{res_bottleneck_block.7} parent=5 // pred_fallthru
        _
    $region6: #{res_bottleneck_block.7} parent=1 // loop_footer
      %s22 = sadd.s32 1, %s18
    $region7: #{res_bottleneck_block.7} parent=1 // loop_footer_branch
      %17 = sbr.rel target = $region3
    $region8: #{res_bottleneck_block.7} parent=1 // loop_exit
      _
    %716 = vsyncpa [#allocation3], 1
    %s717 = scalar_lea.sflag [#allocation3], 1
    %718 = vsyncpa %s717, 1

// kernel: res_bottleneck_block.5
$region0: #{res_bottleneck_block.5}
  #allocation0 [shape = 'u32[]', space=smem, size = 0x4, offset = 0x4, fixed_abs, tag = 'smem constant byte address 0x4 - core index']
  #allocation1 [shape = 'u32[72,128]{1,0:T(1,128)}', space=vmem, size = 0x9000, scoped, tag = 'internal scratch']
  %s0 = inlined_call_operand.vmem [shape: bf16[2,36,9,64], index: 0, kind: input, shape index: {}]
  %s1 = inlined_call_operand.vmem [shape: bf16[9,64,64], index: 1, kind: input, shape index: {}]
  %s2 = inlined_call_operand.vmem [shape: f32[1,64], index: 2, kind: input, shape index: {}]
  %s3 = inlined_call_operand.vmem [shape: f32[1,64], index: 3, kind: input, shape index: {}]
  %s4 = inlined_call_operand.vmem [shape: bf16[2,64,64], index: 4, kind: output, shape index: {0}]
  %s5 = inlined_call_operand.vmem [shape: f32[2,1,64], index: 5, kind: output, shape index: {1}]
  %6 = xla_tuple %s4, %s5
  %s7 = sld [smem:[#allocation0]]
  $region57: #{res_bottleneck_block.5} parent=0
    _
  %s9 = ssub.s32 1, %s7
  %s10 = scalar_select 0, %s9, %s7
  loop: start=0, step=1, limit=4
  $region2: #{res_bottleneck_block.5} parent=0 // loop_pre_header
    _
  $region3: #{res_bottleneck_block.5} parent=0 // loop_header
    %s12 = sphi 0, %s16
    %p13 = scmp.ge.s32.totalorder %s12, 4
    %s22 = sphi 0, %s24
    %s25 = sphi 0, %s22
    %s26 = sphi 0, %s25
    %s42 = sphi 0, %s26
    %s46 = sphi 0, %s46
    %s48 = sphi 0, %s46
    %s49 = sphi 0, %s48
    %s63 = sphi 0, %s49
    %s67 = sphi 0, %s67
    %s69 = sphi 0, %s67
    %s70 = sphi 0, %s69
    %s84 = sphi 0, %s70
    %s88 = sphi 0, %s88
    %s90 = sphi 0, %s88
    %s91 = sphi 0, %s90
    %s105 = sphi 0, %s91
    %s111 = sphi 0, %s113
    %s114 = sphi 0, %s111
    %s115 = sphi 0, %s114
    %s131 = sphi 0, %s115
    %s137 = sphi 0, %s139
    %s140 = sphi 0, %s137
    %s141 = sphi 0, %s140
    %s157 = sphi 0, %s141
  $region4: #{res_bottleneck_block.5} parent=0 // loop_header_branch
    %15 = sbr.rel (%p13) target = $region8
  $region5: #{res_bottleneck_block.5} parent=0 // loop_body
    %s17 = ssub.s32 %s12, 1
    %s18 = ssub.s32 %s12, 2
    %s19 = sadd.s32 %s12, 1
    %s20 = ssub.s32 %s12, %s19
    %p21 = scmp.eq.s32.totalorder %s20, 0
    %s23 = sadd.s32 %s22, 1
    %s24 = scalar_select %p21, %s22, %s23
    %p27 = pneg %p21
    %p28 = scmp.eq.s32.totalorder %s12, 1
    %p29 = por %p27, %p28
    %p30 = scmp.ne.s32.totalorder %s22, %s25
    %p31 = scmp.eq.s32.totalorder %s12, 0
    %p32 = por %p30, %p31
    %p33 = scmp.ne.s32.totalorder %s22, %s25
    %p34 = scmp.eq.s32.totalorder %s17, 1
    %p35 = por %p33, %p34
    %p36 = scmp.ne.s32.totalorder %s25, %s26
    %p37 = scmp.eq.s32.totalorder %s17, 0
    %p38 = por %p36, %p37
    %p39 = scmp.ne.s32.totalorder %s25, %s26
    %p40 = scmp.eq.s32.totalorder %s18, 1
    %p41 = por %p39, %p40
    %p43 = scmp.ne.s32.totalorder %s26, %s42
    %p44 = scmp.eq.s32.totalorder %s18, 0
    %p45 = por %p43, %p44
    %s47 = sadd.s32 %s46, 1
    %p50 = scmp.eq.s32.totalorder %s12, 1
    %p51 = scmp.ne.s32.totalorder %s46, %s48
    %p52 = scmp.eq.s32.totalorder %s12, 0
    %p53 = por %p51, %p52
    %p54 = scmp.ne.s32.totalorder %s46, %s48
    %p55 = scmp.eq.s32.totalorder %s17, 1
    %p56 = por %p54, %p55
    %p57 = scmp.ne.s32.totalorder %s48, %s49
    %p58 = scmp.eq.s32.totalorder %s17, 0
    %p59 = por %p57, %p58
    %p60 = scmp.ne.s32.totalorder %s48, %s49
    %p61 = scmp.eq.s32.totalorder %s18, 1
    %p62 = por %p60, %p61
    %p64 = scmp.ne.s32.totalorder %s49, %s63
    %p65 = scmp.eq.s32.totalorder %s18, 0
    %p66 = por %p64, %p65
    %s68 = sadd.s32 %s67, 1
    %p71 = scmp.eq.s32.totalorder %s12, 1
    %p72 = scmp.ne.s32.totalorder %s67, %s69
    %p73 = scmp.eq.s32.totalorder %s12, 0
    %p74 = por %p72, %p73
    %p75 = scmp.ne.s32.totalorder %s67, %s69
    %p76 = scmp.eq.s32.totalorder %s17, 1
    %p77 = por %p75, %p76
    %p78 = scmp.ne.s32.totalorder %s69, %s70
    %p79 = scmp.eq.s32.totalorder %s17, 0
    %p80 = por %p78, %p79
    %p81 = scmp.ne.s32.totalorder %s69, %s70
    %p82 = scmp.eq.s32.totalorder %s18, 1
    %p83 = por %p81, %p82
    %p85 = scmp.ne.s32.totalorder %s70, %s84
    %p86 = scmp.eq.s32.totalorder %s18, 0
    %p87 = por %p85, %p86
    %s89 = sadd.s32 %s88, 1
    %p92 = scmp.eq.s32.totalorder %s12, 1
    %p93 = scmp.ne.s32.totalorder %s88, %s90
    %p94 = scmp.eq.s32.totalorder %s12, 0
    %p95 = por %p93, %p94
    %p96 = scmp.ne.s32.totalorder %s88, %s90
    %p97 = scmp.eq.s32.totalorder %s17, 1
    %p98 = por %p96, %p97
    %p99 = scmp.ne.s32.totalorder %s90, %s91
    %p100 = scmp.eq.s32.totalorder %s17, 0
    %p101 = por %p99, %p100
    %p102 = scmp.ne.s32.totalorder %s90, %s91
    %p103 = scmp.eq.s32.totalorder %s18, 1
    %p104 = por %p102, %p103
    %p106 = scmp.ne.s32.totalorder %s91, %s105
    %p107 = scmp.eq.s32.totalorder %s18, 0
    %p108 = por %p106, %p107
    %s109 = ssub.s32 %s12, %s19
    %p110 = scmp.eq.s32.totalorder %s109, 0
    %s112 = sadd.s32 %s111, 1
    %s113 = scalar_select %p110, %s111, %s112
    %p116 = pneg %p110
    %p117 = scmp.eq.s32.totalorder %s12, 1
    %p118 = por %p116, %p117
    %p119 = scmp.ne.s32.totalorder %s111, %s114
    %p120 = scmp.eq.s32.totalorder %s12, 0
    %p121 = por %p119, %p120
    %p122 = scmp.ne.s32.totalorder %s111, %s114
    %p123 = scmp.eq.s32.totalorder %s17, 1
    %p124 = por %p122, %p123
    %p125 = scmp.ne.s32.totalorder %s114, %s115
    %p126 = scmp.eq.s32.totalorder %s17, 0
    %p127 = por %p125, %p126
    %p128 = scmp.ne.s32.totalorder %s114, %s115
    %p129 = scmp.eq.s32.totalorder %s18, 1
    %p130 = por %p128, %p129
    %p132 = scmp.ne.s32.totalorder %s115, %s131
    %p133 = scmp.eq.s32.totalorder %s18, 0
    %p134 = por %p132, %p133
    %s135 = ssub.s32 %s12, %s19
    %p136 = scmp.eq.s32.totalorder %s135, 0
    %s138 = sadd.s32 %s137, 1
    %s139 = scalar_select %p136, %s137, %s138
    %p142 = pneg %p136
    %p143 = scmp.eq.s32.totalorder %s12, 1
    %p144 = por %p142, %p143
    %p145 = scmp.ne.s32.totalorder %s137, %s140
    %p146 = scmp.eq.s32.totalorder %s12, 0
    %p147 = por %p145, %p146
    %p148 = scmp.ne.s32.totalorder %s137, %s140
    %p149 = scmp.eq.s32.totalorder %s17, 1
    %p150 = por %p148, %p149
    %p151 = scmp.ne.s32.totalorder %s140, %s141
    %p152 = scmp.eq.s32.totalorder %s17, 0
    %p153 = por %p151, %p152
    %p154 = scmp.ne.s32.totalorder %s140, %s141
    %p155 = scmp.eq.s32.totalorder %s18, 1
    %p156 = por %p154, %p155
    %p158 = scmp.ne.s32.totalorder %s141, %s157
    %p159 = scmp.eq.s32.totalorder %s18, 0
    %p160 = por %p158, %p159
    %p161 = scmp.le.s32.totalorder 1, %s12
    %p162 = scmp.lt.s32.totalorder %s12, 3
    %p163 = pnand %p161, %p162
    %p164 = pneg %p163
    // Predicated region
    $region9: #{res_bottleneck_block.5} parent=5 // pred_check
      _
    $region10: #{res_bottleneck_block.5} parent=5 // pred_check_branch
      %166 = sbr.rel (%p163) target = $region12
    $region11: #{res_bottleneck_block.5} parent=5 // pred_region
      %s167 = ssub.s32 %s12, 1
      // Predicated region
      $region13: #{res_bottleneck_block.5} parent=11 // pred_check
        %p168 = pneg %p59
      $region14: #{res_bottleneck_block.5} parent=11 // pred_check_branch
        %170 = sbr.rel (%p168) target = $region16
      $region15: #{res_bottleneck_block.5} parent=11 // pred_region
        _
      $region16: #{res_bottleneck_block.5} parent=11 // pred_fallthru
        _
      // Predicated region
      $region17: #{res_bottleneck_block.5} parent=11 // pred_check
        %p171 = pneg %p80
      $region18: #{res_bottleneck_block.5} parent=11 // pred_check_branch
        %173 = sbr.rel (%p171) target = $region20
      $region19: #{res_bottleneck_block.5} parent=11 // pred_region
        _
      $region20: #{res_bottleneck_block.5} parent=11 // pred_fallthru
        _
      // Predicated region
      $region21: #{res_bottleneck_block.5} parent=11 // pred_check
        %p174 = pneg %p101
      $region22: #{res_bottleneck_block.5} parent=11 // pred_check_branch
        %176 = sbr.rel (%p174) target = $region24
      $region23: #{res_bottleneck_block.5} parent=11 // pred_region
        _
      $region24: #{res_bottleneck_block.5} parent=11 // pred_fallthru
        _
    $region12: #{res_bottleneck_block.5} parent=5 // pred_fallthru
      _
    %p177 = scmp.lt.s32.totalorder %s12, 2
    // Predicated region
    $region25: #{res_bottleneck_block.5} parent=5 // pred_check
      %p178 = pneg %p177
    $region26: #{res_bottleneck_block.5} parent=5 // pred_check_branch
      %180 = sbr.rel (%p178) target = $region28
    $region27: #{res_bottleneck_block.5} parent=5 // pred_region
      // Predicated region
      $region29: #{res_bottleneck_block.5} parent=27 // pred_check
        %p181 = pneg %p32
      $region30: #{res_bottleneck_block.5} parent=27 // pred_check_branch
        %183 = sbr.rel (%p181) target = $region32
      $region31: #{res_bottleneck_block.5} parent=27 // pred_region
        %p184 = scmp.lt.s32.totalorder %s12, 1
        %s185 = scalar_select %p184, %s12, 1
        %s186 = smul.addr %s185, 72
        %s187 = smul.addr %s186, 4
        %s188 = scalar_lea.vmem %s0, %s187
      $region32: #{res_bottleneck_block.5} parent=27 // pred_fallthru
        _
    $region28: #{res_bottleneck_block.5} parent=5 // pred_fallthru
      _
    %p189 = scmp.le.s32.totalorder 1, %s12
    %p190 = scmp.lt.s32.totalorder %s12, 3
    %p191 = pnand %p189, %p190
    %p192 = pneg %p191
    // Predicated region
    $region33: #{res_bottleneck_block.5} parent=5 // pred_check
      _
    $region34: #{res_bottleneck_block.5} parent=5 // pred_check_branch
      %194 = sbr.rel (%p191) target = $region36
    $region35: #{res_bottleneck_block.5} parent=5 // pred_region
      %s195 = ssub.s32 %s12, 1
      %p196 = scmp.lt.s32.totalorder %s17, 1
      %s197 = scalar_select %p196, %s17, 1
      %s198 = smul.addr %s197, 72
      %s199 = smul.addr %s198, 4
      %s200 = scalar_lea.vmem %s0, %s199
      %p201 = pneg %p38
      %p202 = pneg %p35
      %p203 = pneg %p59
      %p204 = pneg %p56
      %p205 = pneg %p80
      %p206 = pneg %p77
      %p207 = pneg %p101
      %p208 = pneg %p98
      %p209 = pneg %p127
      %p210 = pneg %p124
      %p211 = scmp.lt.s32.totalorder %s17, 1
      %s212 = scalar_select %p211, %s17, 1
      %s213 = smul.addr %s212, 8
      %s214 = smul.addr %s213, 4
      %s215 = scalar_lea.vmem %s4, %s214
      %p216 = pneg %p153
      %p217 = pneg %p150
      %p218 = scmp.lt.s32.totalorder %s17, 1
      %s219 = scalar_select %p218, %s17, 1
      %s220 = scalar_lea.vmem %s5, %s219
      %p221 = scmp.lt.s32.totalorder %s17, 1
      %s222 = scalar_select %p221, %s17, 1
      %s223 = smul.addr %s222, 72
      %s224 = smul.addr %s223, 4
      %s225 = scalar_lea.vmem %s0, %s224
      %p226 = scmp.lt.s32.totalorder %s17, 1
      %s227 = scalar_select %p226, %s17, 1
      %s228 = smul.addr %s227, 8
      %s229 = smul.addr %s228, 4
      %s230 = scalar_lea.vmem %s4, %s229
      %p231 = scmp.lt.s32.totalorder %s17, 1
      %s232 = scalar_select %p231, %s17, 1
      %s233 = scalar_lea.vmem %s5, %s232
      %v235 = vld [vmem:[%s225] sm:$0xf]
      %v236 = vld [vmem:[%s225 + $0x8] sm:$0xf]
      %v237 = vld [vmem:[%s225 + $0x10] sm:$0xf]
      %v238 = vld [vmem:[%s225 + $0x18] sm:$0xf]
      %v239 = vld [vmem:[%s225 + $0x20] sm:$0xf]
      %v240 = vld [vmem:[%s225 + $0x28] sm:$0xf]
      %v241 = vld [vmem:[%s225 + $0x30] sm:$0xf]
      %v242 = vld [vmem:[%s225 + $0x38] sm:$0xf]
      %v243 = vld [vmem:[%s1] sm:$0xf]
      %v244 = vld [vmem:[%s1 + $0x4] sm:$0xf]
      %v245 = vld [vmem:[%s1 + $0x8] sm:$0xf]
      %v246 = vld [vmem:[%s1 + $0xc] sm:$0xf]
      %v247 = vld [vmem:[%s1 + $0x10] sm:$0xf]
      %v248 = vld [vmem:[%s1 + $0x14] sm:$0xf]
      %v249 = vld [vmem:[%s1 + $0x18] sm:$0xf]
      %v250 = vld [vmem:[%s1 + $0x1c] sm:$0xf]
      %s251 = scalar_lea.vmem %s225, 72
      %v252 = vld [vmem:[%s251] sm:$0xf]
      %v253 = vld [vmem:[%s251 + $0x8] sm:$0xf]
      %v254 = vld [vmem:[%s251 + $0x10] sm:$0xf]
      %v255 = vld [vmem:[%s251 + $0x18] sm:$0xf]
      %v256 = vld [vmem:[%s251 + $0x20] sm:$0xf]
      %v257 = vld [vmem:[%s251 + $0x28] sm:$0xf]
      %v258 = vld [vmem:[%s251 + $0x30] sm:$0xf]
      %v259 = vld [vmem:[%s251 + $0x38] sm:$0xf]
      %s260 = scalar_lea.vmem %s1, 32
      %v261 = vld [vmem:[%s260] sm:$0xf]
      %v262 = vld [vmem:[%s260 + $0x4] sm:$0xf]
      %v263 = vld [vmem:[%s260 + $0x8] sm:$0xf]
      %v264 = vld [vmem:[%s260 + $0xc] sm:$0xf]
      %v265 = vld [vmem:[%s260 + $0x10] sm:$0xf]
      %v266 = vld [vmem:[%s260 + $0x14] sm:$0xf]
      %v267 = vld [vmem:[%s260 + $0x18] sm:$0xf]
      %v268 = vld [vmem:[%s260 + $0x1c] sm:$0xf]
      %v277 = vunpack.c.l.b16 %v252
      %v278 = vunpack.c.l.b16 %v253
      %v279 = vunpack.c.l.b16 %v254
      %v280 = vunpack.c.l.b16 %v255
      %v281 = vunpack.c.l.b16 %v256
      %v282 = vunpack.c.l.b16 %v257
      %v283 = vunpack.c.l.b16 %v258
      %v284 = vunpack.c.l.b16 %v259
      %v285 = vpack.c.b16 %v278, %v277
      %v286 = vpack.c.b16 %v280, %v279
      %v287 = vpack.c.b16 %v282, %v281
      %v288 = vpack.c.b16 %v284, %v283
      %v297 = vunpack.c.l.b16 %v261
      %v298 = vunpack.c.l.b16 %v262
      %v299 = vunpack.c.l.b16 %v263
      %v300 = vunpack.c.l.b16 %v264
      %v301 = vunpack.c.l.b16 %v265
      %v302 = vunpack.c.l.b16 %v266
      %v303 = vunpack.c.l.b16 %v267
      %v304 = vunpack.c.l.b16 %v268
      %v305 = vpack.c.b16 %v298, %v297
      %v306 = vpack.c.b16 %v300, %v299
      %v307 = vpack.c.b16 %v302, %v301
      %v308 = vpack.c.b16 %v304, %v303
      %vm313 = vcmask 523264
      %v315 = vsel %vm313, %v285, 0
      %v318 = vsel %vm313, %v286, 0
      %v321 = vsel %vm313, %v287, 0
      %v324 = vsel %vm313, %v288, 0
      %326 = vmatpush.bf16.msra.mxu0 0
      %327 = vmatpush.bf16.msra.mxu0 0
      %328 = vmatpush.bf16.msra.mxu0 0
      %329 = vmatpush.bf16.msra.mxu0 0
      %330 = vmatpush.bf16.msra.mxu0 %v308
      %331 = vmatpush.bf16.msra.mxu0 %v307
      %332 = vmatpush.bf16.msra.mxu0 %v306
      %333 = vmatpush.bf16.msra.mxu0 %v305
      %334 = vmatmul.bf16.gmra.mxu0 %v315
      %v335 = vpop.f32.mrf.mxu0
      %v336 = vadd.f32 0.0, %v335
      %v337 = vpop.f32.mrf.mxu0
      %v338 = vadd.f32 0.0, %v337
      %339 = vmatmul.bf16.gmra.mxu0 %v318
      %v340 = vpop.f32.mrf.mxu0
      %v341 = vadd.f32 0.0, %v340
      %v342 = vpop.f32.mrf.mxu0
      %v343 = vadd.f32 0.0, %v342
      %344 = vmatmul.bf16.gmra.mxu0 %v321
      %v345 = vpop.f32.mrf.mxu0
      %v346 = vadd.f32 0.0, %v345
      %v347 = vpop.f32.mrf.mxu0
      %v348 = vadd.f32 0.0, %v347
      %349 = vmatmul.bf16.gmra.mxu0 %v324
      %v350 = vpop.f32.mrf.mxu0
      %v351 = vadd.f32 0.0, %v350
      %v352 = vpop.f32.mrf.mxu0
      %v353 = vadd.f32 0.0, %v352
      %354 = vdwg.mxu0
      %v363 = vunpack.c.l.b16 %v235
      %v364 = vunpack.c.l.b16 %v236
      %v365 = vunpack.c.l.b16 %v237
      %v366 = vunpack.c.l.b16 %v238
      %v367 = vunpack.c.l.b16 %v239
      %v368 = vunpack.c.l.b16 %v240
      %v369 = vunpack.c.l.b16 %v241
      %v370 = vunpack.c.l.b16 %v242
      %v371 = vpack.c.b16 %v364, %v363
      %v372 = vpack.c.b16 %v366, %v365
      %v373 = vpack.c.b16 %v368, %v367
      %v374 = vpack.c.b16 %v370, %v369
      %v383 = vunpack.c.l.b16 %v243
      %v384 = vunpack.c.l.b16 %v244
      %v385 = vunpack.c.l.b16 %v245
      %v386 = vunpack.c.l.b16 %v246
      %v387 = vunpack.c.l.b16 %v247
      %v388 = vunpack.c.l.b16 %v248
      %v389 = vunpack.c.l.b16 %v249
      %v390 = vunpack.c.l.b16 %v250
      %v391 = vpack.c.b16 %v384, %v383
      %v392 = vpack.c.b16 %v386, %v385
      %v393 = vpack.c.b16 %v388, %v387
      %v394 = vpack.c.b16 %v390, %v389
      %v400 = vsel %vm313, %v371, 0
      %v403 = vsel %vm313, %v372, 0
      %v406 = vsel %vm313, %v373, 0
      %v409 = vsel %vm313, %v374, 0
      %411 = vmatpush.bf16.msra.mxu0 0
      %412 = vmatpush.bf16.msra.mxu0 0
      %413 = vmatpush.bf16.msra.mxu0 0
      %414 = vmatpush.bf16.msra.mxu0 0
      %415 = vmatpush.bf16.msra.mxu0 %v394
      %416 = vmatpush.bf16.msra.mxu0 %v393
      %417 = vmatpush.bf16.msra.mxu0 %v392
      %418 = vmatpush.bf16.msra.mxu0 %v391
      %419 = vmatmul.bf16.gmra.mxu0 %v400
      %v420 = vpop.f32.mrf.mxu0
      %v421 = vadd.f32 %v336, %v420
      %v422 = vpop.f32.mrf.mxu0
      %v423 = vadd.f32 %v338, %v422
      %424 = vmatmul.bf16.gmra.mxu0 %v403
      %v425 = vpop.f32.mrf.mxu0
      %v426 = vadd.f32 %v341, %v425
      %v427 = vpop.f32.mrf.mxu0
      %v428 = vadd.f32 %v343, %v427
      %429 = vmatmul.bf16.gmra.mxu0 %v406
      %v430 = vpop.f32.mrf.mxu0
      %v431 = vadd.f32 %v346, %v430
      %v432 = vpop.f32.mrf.mxu0
      %v433 = vadd.f32 %v348, %v432
      %434 = vmatmul.bf16.gmra.mxu0 %v409
      %v435 = vpop.f32.mrf.mxu0
      %v436 = vadd.f32 %v351, %v435
      %v437 = vpop.f32.mrf.mxu0
      %v438 = vadd.f32 %v353, %v437
      %439 = vdwg.mxu0
      %v440 = vld [vmem:[%s225] sm:$0xf]
      %v441 = vld [vmem:[%s225 + $0x4] sm:$0x1]
      %v442 = vld [vmem:[%s225 + $0x8] sm:$0xf]
      %v443 = vld [vmem:[%s225 + $0xc] sm:$0x1]
      %v444 = vld [vmem:[%s225 + $0x10] sm:$0xf]
      %v445 = vld [vmem:[%s225 + $0x14] sm:$0x1]
      %v446 = vld [vmem:[%s225 + $0x18] sm:$0xf]
      %v447 = vld [vmem:[%s225 + $0x1c] sm:$0x1]
      %v448 = vld [vmem:[%s225 + $0x20] sm:$0xf]
      %v449 = vld [vmem:[%s225 + $0x24] sm:$0x1]
      %v450 = vld [vmem:[%s225 + $0x28] sm:$0xf]
      %v451 = vld [vmem:[%s225 + $0x2c] sm:$0x1]
      %v452 = vld [vmem:[%s225 + $0x30] sm:$0xf]
      %v453 = vld [vmem:[%s225 + $0x34] sm:$0x1]
      %v454 = vld [vmem:[%s225 + $0x38] sm:$0xf]
      %v455 = vld [vmem:[%s225 + $0x3c] sm:$0x1]
      %vm456 = vsmask.f32 3328
      %vm457 = vsmask.f32 7440
      %vm458 = vmor %vm456, %vm457
      %v460 = vshrl.u32 %v440, 16
      %v462 = vrot.slane %v460, 4
      %v463 = vshll.u32 %v440, 16
      %v465 = vrot.slane %v463, 5
      %v466 = vor.u32 %v462, %v465
      %v467 = vrot.slane %v466, 4
      %v469 = vshll.u32 %v441, 16
      %v471 = vrot.slane %v469, 5
      %v472 = vsel %vm458, %v467, %v471
      %v474 = vshrl.u32 %v442, 16
      %v476 = vrot.slane %v474, 4
      %v477 = vshll.u32 %v442, 16
      %v479 = vrot.slane %v477, 5
      %v480 = vor.u32 %v476, %v479
      %v481 = vrot.slane %v480, 4
      %v483 = vshll.u32 %v443, 16
      %v485 = vrot.slane %v483, 5
      %v486 = vsel %vm458, %v481, %v485
      %v488 = vshrl.u32 %v444, 16
      %v490 = vrot.slane %v488, 4
      %v491 = vshll.u32 %v444, 16
      %v493 = vrot.slane %v491, 5
      %v494 = vor.u32 %v490, %v493
      %v495 = vrot.slane %v494, 4
      %v497 = vshll.u32 %v445, 16
      %v499 = vrot.slane %v497, 5
      %v500 = vsel %vm458, %v495, %v499
      %v502 = vshrl.u32 %v446, 16
      %v504 = vrot.slane %v502, 4
      %v505 = vshll.u32 %v446, 16
      %v507 = vrot.slane %v505, 5
      %v508 = vor.u32 %v504, %v507
      %v509 = vrot.slane %v508, 4
      %v511 = vshll.u32 %v447, 16
      %v513 = vrot.slane %v511, 5
      %v514 = vsel %vm458, %v509, %v513
      %v516 = vshrl.u32 %v448, 16
      %v518 = vrot.slane %v516, 4
      %v519 = vshll.u32 %v448, 16
      %v521 = vrot.slane %v519, 5
      %v522 = vor.u32 %v518, %v521
      %v523 = vrot.slane %v522, 4
      %v525 = vshll.u32 %v449, 16
      %v527 = vrot.slane %v525, 5
      %v528 = vsel %vm458, %v523, %v527
      %v530 = vshrl.u32 %v450, 16
      %v532 = vrot.slane %v530, 4
      %v533 = vshll.u32 %v450, 16
      %v535 = vrot.slane %v533, 5
      %v536 = vor.u32 %v532, %v535
      %v537 = vrot.slane %v536, 4
      %v539 = vshll.u32 %v451, 16
      %v541 = vrot.slane %v539, 5
      %v542 = vsel %vm458, %v537, %v541
      %v544 = vshrl.u32 %v452, 16
      %v546 = vrot.slane %v544, 4
      %v547 = vshll.u32 %v452, 16
      %v549 = vrot.slane %v547, 5
      %v550 = vor.u32 %v546, %v549
      %v551 = vrot.slane %v550, 4
      %v553 = vshll.u32 %v453, 16
      %v555 = vrot.slane %v553, 5
      %v556 = vsel %vm458, %v551, %v555
      %v558 = vshrl.u32 %v454, 16
      %v560 = vrot.slane %v558, 4
      %v561 = vshll.u32 %v454, 16
      %v563 = vrot.slane %v561, 5
      %v564 = vor.u32 %v560, %v563
      %v565 = vrot.slane %v564, 4
      %v567 = vshll.u32 %v455, 16
      %v569 = vrot.slane %v567, 5
      %v570 = vsel %vm458, %v565, %v569
      %s571 = scalar_lea.vmem %s1, 64
      %v572 = vld [vmem:[%s571] sm:$0xf]
      %v573 = vld [vmem:[%s571 + $0x4] sm:$0xf]
      %v574 = vld [vmem:[%s571 + $0x8] sm:$0xf]
      %v575 = vld [vmem:[%s571 + $0xc] sm:$0xf]
      %v576 = vld [vmem:[%s571 + $0x10] sm:$0xf]
      %v577 = vld [vmem:[%s571 + $0x14] sm:$0xf]
      %v578 = vld [vmem:[%s571 + $0x18] sm:$0xf]
      %v579 = vld [vmem:[%s571 + $0x1c] sm:$0xf]
      %v580 = vunpack.c.l.b16 %v472
      %v581 = vunpack.c.l.b16 %v486
      %v582 = vunpack.c.l.b16 %v500
      %v583 = vunpack.c.l.b16 %v514
      %v584 = vunpack.c.l.b16 %v528
      %v585 = vunpack.c.l.b16 %v542
      %v586 = vunpack.c.l.b16 %v556
      %v587 = vunpack.c.l.b16 %v570
      %v588 = vpack.c.b16 %v581, %v580
      %v589 = vpack.c.b16 %v583, %v582
      %v590 = vpack.c.b16 %v585, %v584
      %v591 = vpack.c.b16 %v587, %v586
      %v600 = vunpack.c.l.b16 %v572
      %v601 = vunpack.c.l.b16 %v573
      %v602 = vunpack.c.l.b16 %v574
      %v603 = vunpack.c.l.b16 %v575
      %v604 = vunpack.c.l.b16 %v576
      %v605 = vunpack.c.l.b16 %v577
      %v606 = vunpack.c.l.b16 %v578
      %v607 = vunpack.c.l.b16 %v579
      %v608 = vpack.c.b16 %v601, %v600
      %v609 = vpack.c.b16 %v603, %v602
      %v610 = vpack.c.b16 %v605, %v604
      %v611 = vpack.c.b16 %v607, %v606
      %v617 = vsel %vm313, %v588, 0
      %v620 = vsel %vm313, %v589, 0
      %v623 = vsel %vm313, %v590, 0
      %v626 = vsel %vm313, %v591, 0
      %628 = vmatpush.bf16.msra.mxu0 0
      %629 = vmatpush.bf16.msra.mxu0 0
      %630 = vmatpush.bf16.msra.mxu0 0
      %631 = vmatpush.bf16.msra.mxu0 0
      %632 = vmatpush.bf16.msra.mxu0 %v611
      %633 = vmatpush.bf16.msra.mxu0 %v610
      %634 = vmatpush.bf16.msra.mxu0 %v609
      %635 = vmatpush.bf16.msra.mxu0 %v608
      %636 = vmatmul.bf16.gmra.mxu0 %v617
      %v637 = vpop.f32.mrf.mxu0
      %v638 = vadd.f32 0.0, %v637
      %v639 = vpop.f32.mrf.mxu0
      %v640 = vadd.f32 0.0, %v639
      %641 = vmatmul.bf16.gmra.mxu0 %v620
      %v642 = vpop.f32.mrf.mxu0
      %v643 = vadd.f32 0.0, %v642
      %v644 = vpop.f32.mrf.mxu0
      %v645 = vadd.f32 0.0, %v644
      %646 = vmatmul.bf16.gmra.mxu0 %v623
      %v647 = vpop.f32.mrf.mxu0
      %v648 = vadd.f32 0.0, %v647
      %v649 = vpop.f32.mrf.mxu0
      %v650 = vadd.f32 0.0, %v649
      %651 = vmatmul.bf16.gmra.mxu0 %v626
      %v652 = vpop.f32.mrf.mxu0
      %v653 = vadd.f32 0.0, %v652
      %v654 = vpop.f32.mrf.mxu0
      %v655 = vadd.f32 0.0, %v654
      %656 = vdwg.mxu0
      %v657 = vadd.f32 %v421, %v638
      %v658 = vadd.f32 %v423, %v640
      %v659 = vadd.f32 %v426, %v643
      %v660 = vadd.f32 %v428, %v645
      %v661 = vadd.f32 %v431, %v648
      %v662 = vadd.f32 %v433, %v650
      %v663 = vadd.f32 %v436, %v653
      %v664 = vadd.f32 %v438, %v655
      %s665 = scalar_lea.vmem %s225, 144
      %v666 = vld [vmem:[%s665] sm:$0xf]
      %v667 = vld [vmem:[%s665 + $0x8] sm:$0xf]
      %v668 = vld [vmem:[%s665 + $0x10] sm:$0xf]
      %v669 = vld [vmem:[%s665 + $0x18] sm:$0xf]
      %v670 = vld [vmem:[%s665 + $0x20] sm:$0xf]
      %v671 = vld [vmem:[%s665 + $0x28] sm:$0xf]
      %v672 = vld [vmem:[%s665 + $0x30] sm:$0xf]
      %v673 = vld [vmem:[%s665 + $0x38] sm:$0xf]
      %s674 = scalar_lea.vmem %s1, 96
      %v675 = vld [vmem:[%s674] sm:$0xf]
      %v676 = vld [vmem:[%s674 + $0x4] sm:$0xf]
      %v677 = vld [vmem:[%s674 + $0x8] sm:$0xf]
      %v678 = vld [vmem:[%s674 + $0xc] sm:$0xf]
      %v679 = vld [vmem:[%s674 + $0x10] sm:$0xf]
      %v680 = vld [vmem:[%s674 + $0x14] sm:$0xf]
      %v681 = vld [vmem:[%s674 + $0x18] sm:$0xf]
      %v682 = vld [vmem:[%s674 + $0x1c] sm:$0xf]
      %v691 = vunpack.c.l.b16 %v666
      %v692 = vunpack.c.l.b16 %v667
      %v693 = vunpack.c.l.b16 %v668
      %v694 = vunpack.c.l.b16 %v669
      %v695 = vunpack.c.l.b16 %v670
      %v696 = vunpack.c.l.b16 %v671
      %v697 = vunpack.c.l.b16 %v672
      %v698 = vunpack.c.l.b16 %v673
      %v699 = vpack.c.b16 %v692, %v691
      %v700 = vpack.c.b16 %v694, %v693
      %v701 = vpack.c.b16 %v696, %v695
      %v702 = vpack.c.b16 %v698, %v697
      %v711 = vunpack.c.l.b16 %v675
      %v712 = vunpack.c.l.b16 %v676
      %v713 = vunpack.c.l.b16 %v677
      %v714 = vunpack.c.l.b16 %v678
      %v715 = vunpack.c.l.b16 %v679
      %v716 = vunpack.c.l.b16 %v680
      %v717 = vunpack.c.l.b16 %v681
      %v718 = vunpack.c.l.b16 %v682
      %v719 = vpack.c.b16 %v712, %v711
      %v720 = vpack.c.b16 %v714, %v713
      %v721 = vpack.c.b16 %v716, %v715
      %v722 = vpack.c.b16 %v718, %v717
      %v728 = vsel %vm313, %v699, 0
      %v731 = vsel %vm313, %v700, 0
      %v734 = vsel %vm313, %v701, 0
      %v737 = vsel %vm313, %v702, 0
      %739 = vmatpush.bf16.msra.mxu0 0
      %740 = vmatpush.bf16.msra.mxu0 0
      %741 = vmatpush.bf16.msra.mxu0 0
      %742 = vmatpush.bf16.msra.mxu0 0
      %743 = vmatpush.bf16.msra.mxu0 %v722
      %744 = vmatpush.bf16.msra.mxu0 %v721
      %745 = vmatpush.bf16.msra.mxu0 %v720
      %746 = vmatpush.bf16.msra.mxu0 %v719
      %747 = vmatmul.bf16.gmra.mxu0 %v728
      %v748 = vpop.f32.mrf.mxu0
      %v749 = vadd.f32 0.0, %v748
      %v750 = vpop.f32.mrf.mxu0
      %v751 = vadd.f32 0.0, %v750
      %752 = vmatmul.bf16.gmra.mxu0 %v731
      %v753 = vpop.f32.mrf.mxu0
      %v754 = vadd.f32 0.0, %v753
      %v755 = vpop.f32.mrf.mxu0
      %v756 = vadd.f32 0.0, %v755
      %757 = vmatmul.bf16.gmra.mxu0 %v734
      %v758 = vpop.f32.mrf.mxu0
      %v759 = vadd.f32 0.0, %v758
      %v760 = vpop.f32.mrf.mxu0
      %v761 = vadd.f32 0.0, %v760
      %762 = vmatmul.bf16.gmra.mxu0 %v737
      %v763 = vpop.f32.mrf.mxu0
      %v764 = vadd.f32 0.0, %v763
      %v765 = vpop.f32.mrf.mxu0
      %v766 = vadd.f32 0.0, %v765
      %767 = vdwg.mxu0
      %v768 = vadd.f32 %v657, %v749
      %v769 = vadd.f32 %v658, %v751
      %v770 = vadd.f32 %v659, %v754
      %v771 = vadd.f32 %v660, %v756
      %v772 = vadd.f32 %v661, %v759
      %v773 = vadd.f32 %v662, %v761
      %v774 = vadd.f32 %v663, %v764
      %v775 = vadd.f32 %v664, %v766
      %s776 = scalar_lea.vmem %s225, 216
      %v777 = vld [vmem:[%s776] sm:$0xf]
      %v778 = vld [vmem:[%s776 + $0x8] sm:$0xf]
      %v779 = vld [vmem:[%s776 + $0x10] sm:$0xf]
      %v780 = vld [vmem:[%s776 + $0x18] sm:$0xf]
      %v781 = vld [vmem:[%s776 + $0x20] sm:$0xf]
      %v782 = vld [vmem:[%s776 + $0x28] sm:$0xf]
      %v783 = vld [vmem:[%s776 + $0x30] sm:$0xf]
      %v784 = vld [vmem:[%s776 + $0x38] sm:$0xf]
      %s785 = scalar_lea.vmem %s1, 128
      %v786 = vld [vmem:[%s785] sm:$0xf]
      %v787 = vld [vmem:[%s785 + $0x4] sm:$0xf]
      %v788 = vld [vmem:[%s785 + $0x8] sm:$0xf]
      %v789 = vld [vmem:[%s785 + $0xc] sm:$0xf]
      %v790 = vld [vmem:[%s785 + $0x10] sm:$0xf]
      %v791 = vld [vmem:[%s785 + $0x14] sm:$0xf]
      %v792 = vld [vmem:[%s785 + $0x18] sm:$0xf]
      %v793 = vld [vmem:[%s785 + $0x1c] sm:$0xf]
      %v802 = vunpack.c.l.b16 %v777
      %v803 = vunpack.c.l.b16 %v778
      %v804 = vunpack.c.l.b16 %v779
      %v805 = vunpack.c.l.b16 %v780
      %v806 = vunpack.c.l.b16 %v781
      %v807 = vunpack.c.l.b16 %v782
      %v808 = vunpack.c.l.b16 %v783
      %v809 = vunpack.c.l.b16 %v784
      %v810 = vpack.c.b16 %v803, %v802
      %v811 = vpack.c.b16 %v805, %v804
      %v812 = vpack.c.b16 %v807, %v806
      %v813 = vpack.c.b16 %v809, %v808
      %v822 = vunpack.c.l.b16 %v786
      %v823 = vunpack.c.l.b16 %v787
      %v824 = vunpack.c.l.b16 %v788
      %v825 = vunpack.c.l.b16 %v789
      %v826 = vunpack.c.l.b16 %v790
      %v827 = vunpack.c.l.b16 %v791
      %v828 = vunpack.c.l.b16 %v792
      %v829 = vunpack.c.l.b16 %v793
      %v830 = vpack.c.b16 %v823, %v822
      %v831 = vpack.c.b16 %v825, %v824
      %v832 = vpack.c.b16 %v827, %v826
      %v833 = vpack.c.b16 %v829, %v828
      %v839 = vsel %vm313, %v810, 0
      %v842 = vsel %vm313, %v811, 0
      %v845 = vsel %vm313, %v812, 0
      %v848 = vsel %vm313, %v813, 0
      %850 = vmatpush.bf16.msra.mxu0 0
      %851 = vmatpush.bf16.msra.mxu0 0
      %852 = vmatpush.bf16.msra.mxu0 0
      %853 = vmatpush.bf16.msra.mxu0 0
      %854 = vmatpush.bf16.msra.mxu0 %v833
      %855 = vmatpush.bf16.msra.mxu0 %v832
      %856 = vmatpush.bf16.msra.mxu0 %v831
      %857 = vmatpush.bf16.msra.mxu0 %v830
      %858 = vmatmul.bf16.gmra.mxu0 %v839
      %v859 = vpop.f32.mrf.mxu0
      %v860 = vadd.f32 0.0, %v859
      %v861 = vpop.f32.mrf.mxu0
      %v862 = vadd.f32 0.0, %v861
      %863 = vmatmul.bf16.gmra.mxu0 %v842
      %v864 = vpop.f32.mrf.mxu0
      %v865 = vadd.f32 0.0, %v864
      %v866 = vpop.f32.mrf.mxu0
      %v867 = vadd.f32 0.0, %v866
      %868 = vmatmul.bf16.gmra.mxu0 %v845
      %v869 = vpop.f32.mrf.mxu0
      %v870 = vadd.f32 0.0, %v869
      %v871 = vpop.f32.mrf.mxu0
      %v872 = vadd.f32 0.0, %v871
      %873 = vmatmul.bf16.gmra.mxu0 %v848
      %v874 = vpop.f32.mrf.mxu0
      %v875 = vadd.f32 0.0, %v874
      %v876 = vpop.f32.mrf.mxu0
      %v877 = vadd.f32 0.0, %v876
      %878 = vdwg.mxu0
      %v879 = vadd.f32 %v768, %v860
      %v880 = vadd.f32 %v769, %v862
      %v881 = vadd.f32 %v770, %v865
      %v882 = vadd.f32 %v771, %v867
      %v883 = vadd.f32 %v772, %v870
      %v884 = vadd.f32 %v773, %v872
      %v885 = vadd.f32 %v774, %v875
      %v886 = vadd.f32 %v775, %v877
      %v887 = vld [vmem:[%s665] sm:$0xf]
      %v888 = vld [vmem:[%s665 + $0x4] sm:$0x1]
      %v889 = vld [vmem:[%s665 + $0x8] sm:$0xf]
      %v890 = vld [vmem:[%s665 + $0xc] sm:$0x1]
      %v891 = vld [vmem:[%s665 + $0x10] sm:$0xf]
      %v892 = vld [vmem:[%s665 + $0x14] sm:$0x1]
      %v893 = vld [vmem:[%s665 + $0x18] sm:$0xf]
      %v894 = vld [vmem:[%s665 + $0x1c] sm:$0x1]
      %v895 = vld [vmem:[%s665 + $0x20] sm:$0xf]
      %v896 = vld [vmem:[%s665 + $0x24] sm:$0x1]
      %v897 = vld [vmem:[%s665 + $0x28] sm:$0xf]
      %v898 = vld [vmem:[%s665 + $0x2c] sm:$0x1]
      %v899 = vld [vmem:[%s665 + $0x30] sm:$0xf]
      %v900 = vld [vmem:[%s665 + $0x34] sm:$0x1]
      %v901 = vld [vmem:[%s665 + $0x38] sm:$0xf]
      %v902 = vld [vmem:[%s665 + $0x3c] sm:$0x1]
      %v904 = vshrl.u32 %v887, 16
      %v906 = vrot.slane %v904, 4
      %v907 = vshll.u32 %v887, 16
      %v909 = vrot.slane %v907, 5
      %v910 = vor.u32 %v906, %v909
      %v911 = vrot.slane %v910, 4
      %v913 = vshll.u32 %v888, 16
      %v915 = vrot.slane %v913, 5
      %v916 = vsel %vm458, %v911, %v915
      %v918 = vshrl.u32 %v889, 16
      %v920 = vrot.slane %v918, 4
      %v921 = vshll.u32 %v889, 16
      %v923 = vrot.slane %v921, 5
      %v924 = vor.u32 %v920, %v923
      %v925 = vrot.slane %v924, 4
      %v927 = vshll.u32 %v890, 16
      %v929 = vrot.slane %v927, 5
      %v930 = vsel %vm458, %v925, %v929
      %v932 = vshrl.u32 %v891, 16
      %v934 = vrot.slane %v932, 4
      %v935 = vshll.u32 %v891, 16
      %v937 = vrot.slane %v935, 5
      %v938 = vor.u32 %v934, %v937
      %v939 = vrot.slane %v938, 4
      %v941 = vshll.u32 %v892, 16
      %v943 = vrot.slane %v941, 5
      %v944 = vsel %vm458, %v939, %v943
      %v946 = vshrl.u32 %v893, 16
      %v948 = vrot.slane %v946, 4
      %v949 = vshll.u32 %v893, 16
      %v951 = vrot.slane %v949, 5
      %v952 = vor.u32 %v948, %v951
      %v953 = vrot.slane %v952, 4
      %v955 = vshll.u32 %v894, 16
      %v957 = vrot.slane %v955, 5
      %v958 = vsel %vm458, %v953, %v957
      %v960 = vshrl.u32 %v895, 16
      %v962 = vrot.slane %v960, 4
      %v963 = vshll.u32 %v895, 16
      %v965 = vrot.slane %v963, 5
      %v966 = vor.u32 %v962, %v965
      %v967 = vrot.slane %v966, 4
      %v969 = vshll.u32 %v896, 16
      %v971 = vrot.slane %v969, 5
      %v972 = vsel %vm458, %v967, %v971
      %v974 = vshrl.u32 %v897, 16
      %v976 = vrot.slane %v974, 4
      %v977 = vshll.u32 %v897, 16
      %v979 = vrot.slane %v977, 5
      %v980 = vor.u32 %v976, %v979
      %v981 = vrot.slane %v980, 4
      %v983 = vshll.u32 %v898, 16
      %v985 = vrot.slane %v983, 5
      %v986 = vsel %vm458, %v981, %v985
      %v988 = vshrl.u32 %v899, 16
      %v990 = vrot.slane %v988, 4
      %v991 = vshll.u32 %v899, 16
      %v993 = vrot.slane %v991, 5
      %v994 = vor.u32 %v990, %v993
      %v995 = vrot.slane %v994, 4
      %v997 = vshll.u32 %v900, 16
      %v999 = vrot.slane %v997, 5
      %v1000 = vsel %vm458, %v995, %v999
      %v1002 = vshrl.u32 %v901, 16
      %v1004 = vrot.slane %v1002, 4
      %v1005 = vshll.u32 %v901, 16
      %v1007 = vrot.slane %v1005, 5
      %v1008 = vor.u32 %v1004, %v1007
      %v1009 = vrot.slane %v1008, 4
      %v1011 = vshll.u32 %v902, 16
      %v1013 = vrot.slane %v1011, 5
      %v1014 = vsel %vm458, %v1009, %v1013
      %s1015 = scalar_lea.vmem %s1, 160
      %v1016 = vld [vmem:[%s1015] sm:$0xf]
      %v1017 = vld [vmem:[%s1015 + $0x4] sm:$0xf]
      %v1018 = vld [vmem:[%s1015 + $0x8] sm:$0xf]
      %v1019 = vld [vmem:[%s1015 + $0xc] sm:$0xf]
      %v1020 = vld [vmem:[%s1015 + $0x10] sm:$0xf]
      %v1021 = vld [vmem:[%s1015 + $0x14] sm:$0xf]
      %v1022 = vld [vmem:[%s1015 + $0x18] sm:$0xf]
      %v1023 = vld [vmem:[%s1015 + $0x1c] sm:$0xf]
      %v1024 = vunpack.c.l.b16 %v916
      %v1025 = vunpack.c.l.b16 %v930
      %v1026 = vunpack.c.l.b16 %v944
      %v1027 = vunpack.c.l.b16 %v958
      %v1028 = vunpack.c.l.b16 %v972
      %v1029 = vunpack.c.l.b16 %v986
      %v1030 = vunpack.c.l.b16 %v1000
      %v1031 = vunpack.c.l.b16 %v1014
      %v1032 = vpack.c.b16 %v1025, %v1024
      %v1033 = vpack.c.b16 %v1027, %v1026
      %v1034 = vpack.c.b16 %v1029, %v1028
      %v1035 = vpack.c.b16 %v1031, %v1030
      %v1044 = vunpack.c.l.b16 %v1016
      %v1045 = vunpack.c.l.b16 %v1017
      %v1046 = vunpack.c.l.b16 %v1018
      %v1047 = vunpack.c.l.b16 %v1019
      %v1048 = vunpack.c.l.b16 %v1020
      %v1049 = vunpack.c.l.b16 %v1021
      %v1050 = vunpack.c.l.b16 %v1022
      %v1051 = vunpack.c.l.b16 %v1023
      %v1052 = vpack.c.b16 %v1045, %v1044
      %v1053 = vpack.c.b16 %v1047, %v1046
      %v1054 = vpack.c.b16 %v1049, %v1048
      %v1055 = vpack.c.b16 %v1051, %v1050
      %v1061 = vsel %vm313, %v1032, 0
      %v1064 = vsel %vm313, %v1033, 0
      %v1067 = vsel %vm313, %v1034, 0
      %v1070 = vsel %vm313, %v1035, 0
      %1072 = vmatpush.bf16.msra.mxu0 0
      %1073 = vmatpush.bf16.msra.mxu0 0
      %1074 = vmatpush.bf16.msra.mxu0 0
      %1075 = vmatpush.bf16.msra.mxu0 0
      %1076 = vmatpush.bf16.msra.mxu0 %v1055
      %1077 = vmatpush.bf16.msra.mxu0 %v1054
      %1078 = vmatpush.bf16.msra.mxu0 %v1053
      %1079 = vmatpush.bf16.msra.mxu0 %v1052
      %1080 = vmatmul.bf16.gmra.mxu0 %v1061
      %v1081 = vpop.f32.mrf.mxu0
      %v1082 = vadd.f32 0.0, %v1081
      %v1083 = vpop.f32.mrf.mxu0
      %v1084 = vadd.f32 0.0, %v1083
      %1085 = vmatmul.bf16.gmra.mxu0 %v1064
      %v1086 = vpop.f32.mrf.mxu0
      %v1087 = vadd.f32 0.0, %v1086
      %v1088 = vpop.f32.mrf.mxu0
      %v1089 = vadd.f32 0.0, %v1088
      %1090 = vmatmul.bf16.gmra.mxu0 %v1067
      %v1091 = vpop.f32.mrf.mxu0
      %v1092 = vadd.f32 0.0, %v1091
      %v1093 = vpop.f32.mrf.mxu0
      %v1094 = vadd.f32 0.0, %v1093
      %1095 = vmatmul.bf16.gmra.mxu0 %v1070
      %v1096 = vpop.f32.mrf.mxu0
      %v1097 = vadd.f32 0.0, %v1096
      %v1098 = vpop.f32.mrf.mxu0
      %v1099 = vadd.f32 0.0, %v1098
      %1100 = vdwg.mxu0
      %v1101 = vadd.f32 %v879, %v1082
      %v1102 = vadd.f32 %v880, %v1084
      %v1103 = vadd.f32 %v881, %v1087
      %v1104 = vadd.f32 %v882, %v1089
      %v1105 = vadd.f32 %v883, %v1092
      %v1106 = vadd.f32 %v884, %v1094
      %v1107 = vadd.f32 %v885, %v1097
      %v1108 = vadd.f32 %v886, %v1099
      %s1109 = scalar_lea.vmem %s225, 8
      %v1110 = vld [vmem:[%s1109] sm:$0xf]
      %v1111 = vld [vmem:[%s1109 + $0x8] sm:$0xf]
      %v1112 = vld [vmem:[%s1109 + $0x10] sm:$0xf]
      %v1113 = vld [vmem:[%s1109 + $0x18] sm:$0xf]
      %v1114 = vld [vmem:[%s1109 + $0x20] sm:$0xf]
      %v1115 = vld [vmem:[%s1109 + $0x28] sm:$0xf]
      %v1116 = vld [vmem:[%s1109 + $0x30] sm:$0xf]
      %v1117 = vld [vmem:[%s1109 + $0x38] sm:$0xf]
      %s1118 = scalar_lea.vmem %s1, 192
      %v1119 = vld [vmem:[%s1118] sm:$0xf]
      %v1120 = vld [vmem:[%s1118 + $0x4] sm:$0xf]
      %v1121 = vld [vmem:[%s1118 + $0x8] sm:$0xf]
      %v1122 = vld [vmem:[%s1118 + $0xc] sm:$0xf]
      %v1123 = vld [vmem:[%s1118 + $0x10] sm:$0xf]
      %v1124 = vld [vmem:[%s1118 + $0x14] sm:$0xf]
      %v1125 = vld [vmem:[%s1118 + $0x18] sm:$0xf]
      %v1126 = vld [vmem:[%s1118 + $0x1c] sm:$0xf]
      %v1135 = vunpack.c.l.b16 %v1110
      %v1136 = vunpack.c.l.b16 %v1111
      %v1137 = vunpack.c.l.b16 %v1112
      %v1138 = vunpack.c.l.b16 %v1113
      %v1139 = vunpack.c.l.b16 %v1114
      %v1140 = vunpack.c.l.b16 %v1115
      %v1141 = vunpack.c.l.b16 %v1116
      %v1142 = vunpack.c.l.b16 %v1117
      %v1143 = vpack.c.b16 %v1136, %v1135
      %v1144 = vpack.c.b16 %v1138, %v1137
      %v1145 = vpack.c.b16 %v1140, %v1139
      %v1146 = vpack.c.b16 %v1142, %v1141
      %v1155 = vunpack.c.l.b16 %v1119
      %v1156 = vunpack.c.l.b16 %v1120
      %v1157 = vunpack.c.l.b16 %v1121
      %v1158 = vunpack.c.l.b16 %v1122
      %v1159 = vunpack.c.l.b16 %v1123
      %v1160 = vunpack.c.l.b16 %v1124
      %v1161 = vunpack.c.l.b16 %v1125
      %v1162 = vunpack.c.l.b16 %v1126
      %v1163 = vpack.c.b16 %v1156, %v1155
      %v1164 = vpack.c.b16 %v1158, %v1157
      %v1165 = vpack.c.b16 %v1160, %v1159
      %v1166 = vpack.c.b16 %v1162, %v1161
      %v1172 = vsel %vm313, %v1143, 0
      %v1175 = vsel %vm313, %v1144, 0
      %v1178 = vsel %vm313, %v1145, 0
      %v1181 = vsel %vm313, %v1146, 0
      %1183 = vmatpush.bf16.msra.mxu0 0
      %1184 = vmatpush.bf16.msra.mxu0 0
      %1185 = vmatpush.bf16.msra.mxu0 0
      %1186 = vmatpush.bf16.msra.mxu0 0
      %1187 = vmatpush.bf16.msra.mxu0 %v1166
      %1188 = vmatpush.bf16.msra.mxu0 %v1165
      %1189 = vmatpush.bf16.msra.mxu0 %v1164
      %1190 = vmatpush.bf16.msra.mxu0 %v1163
      %1191 = vmatmul.bf16.gmra.mxu0 %v1172
      %v1192 = vpop.f32.mrf.mxu0
      %v1193 = vadd.f32 0.0, %v1192
      %v1194 = vpop.f32.mrf.mxu0
      %v1195 = vadd.f32 0.0, %v1194
      %1196 = vmatmul.bf16.gmra.mxu0 %v1175
      %v1197 = vpop.f32.mrf.mxu0
      %v1198 = vadd.f32 0.0, %v1197
      %v1199 = vpop.f32.mrf.mxu0
      %v1200 = vadd.f32 0.0, %v1199
      %1201 = vmatmul.bf16.gmra.mxu0 %v1178
      %v1202 = vpop.f32.mrf.mxu0
      %v1203 = vadd.f32 0.0, %v1202
      %v1204 = vpop.f32.mrf.mxu0
      %v1205 = vadd.f32 0.0, %v1204
      %1206 = vmatmul.bf16.gmra.mxu0 %v1181
      %v1207 = vpop.f32.mrf.mxu0
      %v1208 = vadd.f32 0.0, %v1207
      %v1209 = vpop.f32.mrf.mxu0
      %v1210 = vadd.f32 0.0, %v1209
      %1211 = vdwg.mxu0
      %v1212 = vadd.f32 %v1101, %v1193
      %v1213 = vadd.f32 %v1102, %v1195
      %v1214 = vadd.f32 %v1103, %v1198
      %v1215 = vadd.f32 %v1104, %v1200
      %v1216 = vadd.f32 %v1105, %v1203
      %v1217 = vadd.f32 %v1106, %v1205
      %v1218 = vadd.f32 %v1107, %v1208
      %v1219 = vadd.f32 %v1108, %v1210
      %s1220 = scalar_lea.vmem %s225, 80
      %v1221 = vld [vmem:[%s1220] sm:$0xf]
      %v1222 = vld [vmem:[%s1220 + $0x8] sm:$0xf]
      %v1223 = vld [vmem:[%s1220 + $0x10] sm:$0xf]
      %v1224 = vld [vmem:[%s1220 + $0x18] sm:$0xf]
      %v1225 = vld [vmem:[%s1220 + $0x20] sm:$0xf]
      %v1226 = vld [vmem:[%s1220 + $0x28] sm:$0xf]
      %v1227 = vld [vmem:[%s1220 + $0x30] sm:$0xf]
      %v1228 = vld [vmem:[%s1220 + $0x38] sm:$0xf]
      %s1229 = scalar_lea.vmem %s1, 224
      %v1230 = vld [vmem:[%s1229] sm:$0xf]
      %v1231 = vld [vmem:[%s1229 + $0x4] sm:$0xf]
      %v1232 = vld [vmem:[%s1229 + $0x8] sm:$0xf]
      %v1233 = vld [vmem:[%s1229 + $0xc] sm:$0xf]
      %v1234 = vld [vmem:[%s1229 + $0x10] sm:$0xf]
      %v1235 = vld [vmem:[%s1229 + $0x14] sm:$0xf]
      %v1236 = vld [vmem:[%s1229 + $0x18] sm:$0xf]
      %v1237 = vld [vmem:[%s1229 + $0x1c] sm:$0xf]
      %v1246 = vunpack.c.l.b16 %v1221
      %v1247 = vunpack.c.l.b16 %v1222
      %v1248 = vunpack.c.l.b16 %v1223
      %v1249 = vunpack.c.l.b16 %v1224
      %v1250 = vunpack.c.l.b16 %v1225
      %v1251 = vunpack.c.l.b16 %v1226
      %v1252 = vunpack.c.l.b16 %v1227
      %v1253 = vunpack.c.l.b16 %v1228
      %v1254 = vpack.c.b16 %v1247, %v1246
      %v1255 = vpack.c.b16 %v1249, %v1248
      %v1256 = vpack.c.b16 %v1251, %v1250
      %v1257 = vpack.c.b16 %v1253, %v1252
      %v1266 = vunpack.c.l.b16 %v1230
      %v1267 = vunpack.c.l.b16 %v1231
      %v1268 = vunpack.c.l.b16 %v1232
      %v1269 = vunpack.c.l.b16 %v1233
      %v1270 = vunpack.c.l.b16 %v1234
      %v1271 = vunpack.c.l.b16 %v1235
      %v1272 = vunpack.c.l.b16 %v1236
      %v1273 = vunpack.c.l.b16 %v1237
      %v1274 = vpack.c.b16 %v1267, %v1266
      %v1275 = vpack.c.b16 %v1269, %v1268
      %v1276 = vpack.c.b16 %v1271, %v1270
      %v1277 = vpack.c.b16 %v1273, %v1272
      %v1283 = vsel %vm313, %v1254, 0
      %v1286 = vsel %vm313, %v1255, 0
      %v1289 = vsel %vm313, %v1256, 0
      %v1292 = vsel %vm313, %v1257, 0
      %1294 = vmatpush.bf16.msra.mxu0 0
      %1295 = vmatpush.bf16.msra.mxu0 0
      %1296 = vmatpush.bf16.msra.mxu0 0
      %1297 = vmatpush.bf16.msra.mxu0 0
      %1298 = vmatpush.bf16.msra.mxu0 %v1277
      %1299 = vmatpush.bf16.msra.mxu0 %v1276
      %1300 = vmatpush.bf16.msra.mxu0 %v1275
      %1301 = vmatpush.bf16.msra.mxu0 %v1274
      %1302 = vmatmul.bf16.gmra.mxu0 %v1283
      %v1303 = vpop.f32.mrf.mxu0
      %v1304 = vadd.f32 0.0, %v1303
      %v1305 = vpop.f32.mrf.mxu0
      %v1306 = vadd.f32 0.0, %v1305
      %1307 = vmatmul.bf16.gmra.mxu0 %v1286
      %v1308 = vpop.f32.mrf.mxu0
      %v1309 = vadd.f32 0.0, %v1308
      %v1310 = vpop.f32.mrf.mxu0
      %v1311 = vadd.f32 0.0, %v1310
      %1312 = vmatmul.bf16.gmra.mxu0 %v1289
      %v1313 = vpop.f32.mrf.mxu0
      %v1314 = vadd.f32 0.0, %v1313
      %v1315 = vpop.f32.mrf.mxu0
      %v1316 = vadd.f32 0.0, %v1315
      %1317 = vmatmul.bf16.gmra.mxu0 %v1292
      %v1318 = vpop.f32.mrf.mxu0
      %v1319 = vadd.f32 0.0, %v1318
      %v1320 = vpop.f32.mrf.mxu0
      %v1321 = vadd.f32 0.0, %v1320
      %1322 = vdwg.mxu0
      %v1323 = vadd.f32 %v1212, %v1304
      %v1324 = vadd.f32 %v1213, %v1306
      %v1325 = vadd.f32 %v1214, %v1309
      %v1326 = vadd.f32 %v1215, %v1311
      %v1327 = vadd.f32 %v1216, %v1314
      %v1328 = vadd.f32 %v1217, %v1316
      %v1329 = vadd.f32 %v1218, %v1319
      %v1330 = vadd.f32 %v1219, %v1321
      %v1331 = vld [vmem:[%s1109] sm:$0xf]
      %v1332 = vld [vmem:[%s1109 + $0x4] sm:$0x1]
      %v1333 = vld [vmem:[%s1109 + $0x8] sm:$0xf]
      %v1334 = vld [vmem:[%s1109 + $0xc] sm:$0x1]
      %v1335 = vld [vmem:[%s1109 + $0x10] sm:$0xf]
      %v1336 = vld [vmem:[%s1109 + $0x14] sm:$0x1]
      %v1337 = vld [vmem:[%s1109 + $0x18] sm:$0xf]
      %v1338 = vld [vmem:[%s1109 + $0x1c] sm:$0x1]
      %v1339 = vld [vmem:[%s1109 + $0x20] sm:$0xf]
      %v1340 = vld [vmem:[%s1109 + $0x24] sm:$0x1]
      %v1341 = vld [vmem:[%s1109 + $0x28] sm:$0xf]
      %v1342 = vld [vmem:[%s1109 + $0x2c] sm:$0x1]
      %v1343 = vld [vmem:[%s1109 + $0x30] sm:$0xf]
      %v1344 = vld [vmem:[%s1109 + $0x34] sm:$0x1]
      %v1345 = vld [vmem:[%s1109 + $0x38] sm:$0xf]
      %v1346 = vld [vmem:[%s1109 + $0x3c] sm:$0x1]
      %v1348 = vshrl.u32 %v1331, 16
      %v1350 = vrot.slane %v1348, 4
      %v1351 = vshll.u32 %v1331, 16
      %v1353 = vrot.slane %v1351, 5
      %v1354 = vor.u32 %v1350, %v1353
      %v1355 = vrot.slane %v1354, 4
      %v1357 = vshll.u32 %v1332, 16
      %v1359 = vrot.slane %v1357, 5
      %v1360 = vsel %vm458, %v1355, %v1359
      %v1362 = vshrl.u32 %v1333, 16
      %v1364 = vrot.slane %v1362, 4
      %v1365 = vshll.u32 %v1333, 16
      %v1367 = vrot.slane %v1365, 5
      %v1368 = vor.u32 %v1364, %v1367
      %v1369 = vrot.slane %v1368, 4
      %v1371 = vshll.u32 %v1334, 16
      %v1373 = vrot.slane %v1371, 5
      %v1374 = vsel %vm458, %v1369, %v1373
      %v1376 = vshrl.u32 %v1335, 16
      %v1378 = vrot.slane %v1376, 4
      %v1379 = vshll.u32 %v1335, 16
      %v1381 = vrot.slane %v1379, 5
      %v1382 = vor.u32 %v1378, %v1381
      %v1383 = vrot.slane %v1382, 4
      %v1385 = vshll.u32 %v1336, 16
      %v1387 = vrot.slane %v1385, 5
      %v1388 = vsel %vm458, %v1383, %v1387
      %v1390 = vshrl.u32 %v1337, 16
      %v1392 = vrot.slane %v1390, 4
      %v1393 = vshll.u32 %v1337, 16
      %v1395 = vrot.slane %v1393, 5
      %v1396 = vor.u32 %v1392, %v1395
      %v1397 = vrot.slane %v1396, 4
      %v1399 = vshll.u32 %v1338, 16
      %v1401 = vrot.slane %v1399, 5
      %v1402 = vsel %vm458, %v1397, %v1401
      %v1404 = vshrl.u32 %v1339, 16
      %v1406 = vrot.slane %v1404, 4
      %v1407 = vshll.u32 %v1339, 16
      %v1409 = vrot.slane %v1407, 5
      %v1410 = vor.u32 %v1406, %v1409
      %v1411 = vrot.slane %v1410, 4
      %v1413 = vshll.u32 %v1340, 16
      %v1415 = vrot.slane %v1413, 5
      %v1416 = vsel %vm458, %v1411, %v1415
      %v1418 = vshrl.u32 %v1341, 16
      %v1420 = vrot.slane %v1418, 4
      %v1421 = vshll.u32 %v1341, 16
      %v1423 = vrot.slane %v1421, 5
      %v1424 = vor.u32 %v1420, %v1423
      %v1425 = vrot.slane %v1424, 4
      %v1427 = vshll.u32 %v1342, 16
      %v1429 = vrot.slane %v1427, 5
      %v1430 = vsel %vm458, %v1425, %v1429
      %v1432 = vshrl.u32 %v1343, 16
      %v1434 = vrot.slane %v1432, 4
      %v1435 = vshll.u32 %v1343, 16
      %v1437 = vrot.slane %v1435, 5
      %v1438 = vor.u32 %v1434, %v1437
      %v1439 = vrot.slane %v1438, 4
      %v1441 = vshll.u32 %v1344, 16
      %v1443 = vrot.slane %v1441, 5
      %v1444 = vsel %vm458, %v1439, %v1443
      %v1446 = vshrl.u32 %v1345, 16
      %v1448 = vrot.slane %v1446, 4
      %v1449 = vshll.u32 %v1345, 16
      %v1451 = vrot.slane %v1449, 5
      %v1452 = vor.u32 %v1448, %v1451
      %v1453 = vrot.slane %v1452, 4
      %v1455 = vshll.u32 %v1346, 16
      %v1457 = vrot.slane %v1455, 5
      %v1458 = vsel %vm458, %v1453, %v1457
      %s1459 = scalar_lea.vmem %s1, 256
      %v1460 = vld [vmem:[%s1459] sm:$0xf]
      %v1461 = vld [vmem:[%s1459 + $0x4] sm:$0xf]
      %v1462 = vld [vmem:[%s1459 + $0x8] sm:$0xf]
      %v1463 = vld [vmem:[%s1459 + $0xc] sm:$0xf]
      %v1464 = vld [vmem:[%s1459 + $0x10] sm:$0xf]
      %v1465 = vld [vmem:[%s1459 + $0x14] sm:$0xf]
      %v1466 = vld [vmem:[%s1459 + $0x18] sm:$0xf]
      %v1467 = vld [vmem:[%s1459 + $0x1c] sm:$0xf]
      %v1468 = vunpack.c.l.b16 %v1360
      %v1469 = vunpack.c.l.b16 %v1374
      %v1470 = vunpack.c.l.b16 %v1388
      %v1471 = vunpack.c.l.b16 %v1402
      %v1472 = vunpack.c.l.b16 %v1416
      %v1473 = vunpack.c.l.b16 %v1430
      %v1474 = vunpack.c.l.b16 %v1444
      %v1475 = vunpack.c.l.b16 %v1458
      %v1476 = vpack.c.b16 %v1469, %v1468
      %v1477 = vpack.c.b16 %v1471, %v1470
      %v1478 = vpack.c.b16 %v1473, %v1472
      %v1479 = vpack.c.b16 %v1475, %v1474
      %v1488 = vunpack.c.l.b16 %v1460
      %v1489 = vunpack.c.l.b16 %v1461
      %v1490 = vunpack.c.l.b16 %v1462
      %v1491 = vunpack.c.l.b16 %v1463
      %v1492 = vunpack.c.l.b16 %v1464
      %v1493 = vunpack.c.l.b16 %v1465
      %v1494 = vunpack.c.l.b16 %v1466
      %v1495 = vunpack.c.l.b16 %v1467
      %v1496 = vpack.c.b16 %v1489, %v1488
      %v1497 = vpack.c.b16 %v1491, %v1490
      %v1498 = vpack.c.b16 %v1493, %v1492
      %v1499 = vpack.c.b16 %v1495, %v1494
      %v1505 = vsel %vm313, %v1476, 0
      %v1508 = vsel %vm313, %v1477, 0
      %v1511 = vsel %vm313, %v1478, 0
      %v1514 = vsel %vm313, %v1479, 0
      %1516 = vmatpush.bf16.msra.mxu0 0
      %1517 = vmatpush.bf16.msra.mxu0 0
      %1518 = vmatpush.bf16.msra.mxu0 0
      %1519 = vmatpush.bf16.msra.mxu0 0
      %1520 = vmatpush.bf16.msra.mxu0 %v1499
      %1521 = vmatpush.bf16.msra.mxu0 %v1498
      %1522 = vmatpush.bf16.msra.mxu0 %v1497
      %1523 = vmatpush.bf16.msra.mxu0 %v1496
      %1524 = vmatmul.bf16.gmra.mxu0 %v1505
      %v1525 = vpop.f32.mrf.mxu0
      %v1526 = vadd.f32 0.0, %v1525
      %v1527 = vpop.f32.mrf.mxu0
      %v1528 = vadd.f32 0.0, %v1527
      %1529 = vmatmul.bf16.gmra.mxu0 %v1508
      %v1530 = vpop.f32.mrf.mxu0
      %v1531 = vadd.f32 0.0, %v1530
      %v1532 = vpop.f32.mrf.mxu0
      %v1533 = vadd.f32 0.0, %v1532
      %1534 = vmatmul.bf16.gmra.mxu0 %v1511
      %v1535 = vpop.f32.mrf.mxu0
      %v1536 = vadd.f32 0.0, %v1535
      %v1537 = vpop.f32.mrf.mxu0
      %v1538 = vadd.f32 0.0, %v1537
      %1539 = vmatmul.bf16.gmra.mxu0 %v1514
      %v1540 = vpop.f32.mrf.mxu0
      %v1541 = vadd.f32 0.0, %v1540
      %v1542 = vpop.f32.mrf.mxu0
      %v1543 = vadd.f32 0.0, %v1542
      %1544 = vdwg.mxu0
      %v1545 = vadd.f32 %v1323, %v1526
      %v1546 = vadd.f32 %v1324, %v1528
      %v1547 = vadd.f32 %v1325, %v1531
      %v1548 = vadd.f32 %v1326, %v1533
      %v1549 = vadd.f32 %v1327, %v1536
      %v1550 = vadd.f32 %v1328, %v1538
      %v1551 = vadd.f32 %v1329, %v1541
      %v1552 = vadd.f32 %v1330, %v1543
      %v1553 = vld [vmem:[%s2] sm:$0x1]
      %v1555 = vperm.slane %v1553, 0
      %v1557 = vmul.f32 %v1545, %v1555
      %v1558 = vmul.f32 %v1546, %v1555
      %v1559 = vmul.f32 %v1547, %v1555
      %v1560 = vmul.f32 %v1548, %v1555
      %v1561 = vmul.f32 %v1549, %v1555
      %v1562 = vmul.f32 %v1550, %v1555
      %v1563 = vmul.f32 %v1551, %v1555
      %v1564 = vmul.f32 %v1552, %v1555
      %v1565 = vld [vmem:[%s3] sm:$0x1]
      %v1567 = vperm.slane %v1565, 0
      %v1569 = vadd.f32 %v1557, %v1567
      %v1570 = vadd.f32 %v1558, %v1567
      %v1571 = vadd.f32 %v1559, %v1567
      %v1572 = vadd.f32 %v1560, %v1567
      %v1573 = vadd.f32 %v1561, %v1567
      %v1574 = vadd.f32 %v1562, %v1567
      %v1575 = vadd.f32 %v1563, %v1567
      %v1576 = vadd.f32 %v1564, %v1567
      %v1577 = vmax.f32 %v1569, 0.0
      %v1578 = vmax.f32 %v1570, 0.0
      %v1579 = vmax.f32 %v1571, 0.0
      %v1580 = vmax.f32 %v1572, 0.0
      %v1581 = vmax.f32 %v1573, 0.0
      %v1582 = vmax.f32 %v1574, 0.0
      %v1583 = vmax.f32 %v1575, 0.0
      %v1584 = vmax.f32 %v1576, 0.0
      %v1585 = vpack.c.bf16 %v1577, %v1577
      %v1586 = vpack.c.bf16 %v1578, %v1578
      %v1587 = vpack.c.bf16 %v1579, %v1579
      %v1588 = vpack.c.bf16 %v1580, %v1580
      %v1589 = vpack.c.bf16 %v1581, %v1581
      %v1590 = vpack.c.bf16 %v1582, %v1582
      %v1591 = vpack.c.bf16 %v1583, %v1583
      %v1592 = vpack.c.bf16 %v1584, %v1584
      %vm1593 = vcmask 519168
      %1594 = vst.msk [vmem:[%s230] sm:$0xf] %vm1593, %v1585
      %1595 = vst.msk [vmem:[%s230 + $0x4] sm:$0xf] %vm1593, %v1586
      %1596 = vst.msk [vmem:[%s230 + $0x8] sm:$0xf] %vm1593, %v1587
      %1597 = vst.msk [vmem:[%s230 + $0xc] sm:$0xf] %vm1593, %v1588
      %1598 = vst.msk [vmem:[%s230 + $0x10] sm:$0xf] %vm1593, %v1589
      %1599 = vst.msk [vmem:[%s230 + $0x14] sm:$0xf] %vm1593, %v1590
      %1600 = vst.msk [vmem:[%s230 + $0x18] sm:$0xf] %vm1593, %v1591
      %1601 = vst.msk [vmem:[%s230 + $0x1c] sm:$0xf] %vm1593, %v1592
      %v1602 = vsel %vm313, %v1577, 0.0
      %v1603 = vsel %vm313, %v1578, 0.0
      %v1604 = vadd.f32 %v1602, %v1603
      %v1605 = vsel %vm313, %v1579, 0.0
      %v1606 = vadd.f32 %v1604, %v1605
      %v1607 = vsel %vm313, %v1580, 0.0
      %v1608 = vadd.f32 %v1606, %v1607
      %v1609 = vsel %vm313, %v1581, 0.0
      %v1610 = vadd.f32 %v1608, %v1609
      %v1611 = vsel %vm313, %v1582, 0.0
      %v1612 = vadd.f32 %v1610, %v1611
      %v1613 = vsel %vm313, %v1583, 0.0
      %v1614 = vadd.f32 %v1612, %v1613
      %v1615 = vsel %vm313, %v1584, 0.0
      %v1616 = vadd.f32 %v1614, %v1615
      %v1617 = vrot.slane %v1616, 4
      %v1618 = vadd.f32 %v1616, %v1617
      %v1619 = vrot.slane %v1618, 2
      %v1620 = vadd.f32 %v1618, %v1619
      %v1621 = vrot.slane %v1620, 1
      %v1622 = vadd.f32 %v1620, %v1621
      %vm1623 = vcmask 516096
      %1624 = vst.msk [vmem:[%s233] sm:$0x1] %vm1623, %v1622
      %p1625 = scmp.lt.s32.totalorder %s17, 1
      %s1626 = scalar_select %p1625, %s17, 1
      %s1627 = smul.addr %s1626, 8
      %s1628 = smul.addr %s1627, 4
      %s1629 = scalar_lea.vmem %s4, %s1628
      %p1630 = scmp.lt.s32.totalorder %s17, 1
      %s1631 = scalar_select %p1630, %s17, 1
      %s1632 = scalar_lea.vmem %s5, %s1631
      // Predicated region
      $region37: #{res_bottleneck_block.5} parent=35 // pred_check
        %p1633 = pneg %p124
      $region38: #{res_bottleneck_block.5} parent=35 // pred_check_branch
        %1635 = sbr.rel (%p1633) target = $region40
      $region39: #{res_bottleneck_block.5} parent=35 // pred_region
        _
      $region40: #{res_bottleneck_block.5} parent=35 // pred_fallthru
        _
      // Predicated region
      $region41: #{res_bottleneck_block.5} parent=35 // pred_check
        %p1636 = pneg %p150
      $region42: #{res_bottleneck_block.5} parent=35 // pred_check_branch
        %1638 = sbr.rel (%p1636) target = $region44
      $region43: #{res_bottleneck_block.5} parent=35 // pred_region
        _
      $region44: #{res_bottleneck_block.5} parent=35 // pred_fallthru
        _
    $region36: #{res_bottleneck_block.5} parent=5 // pred_fallthru
      _
    %p1639 = scmp.le.s32.totalorder 2, %s12
    // Predicated region
    $region45: #{res_bottleneck_block.5} parent=5 // pred_check
      %p1640 = pneg %p1639
    $region46: #{res_bottleneck_block.5} parent=5 // pred_check_branch
      %1642 = sbr.rel (%p1640) target = $region48
    $region47: #{res_bottleneck_block.5} parent=5 // pred_region
      %s1643 = ssub.s32 %s12, 2
      // Predicated region
      $region49: #{res_bottleneck_block.5} parent=47 // pred_check
        %p1644 = pneg %p130
      $region50: #{res_bottleneck_block.5} parent=47 // pred_check_branch
        %1646 = sbr.rel (%p1644) target = $region52
      $region51: #{res_bottleneck_block.5} parent=47 // pred_region
        %p1647 = scmp.lt.s32.totalorder %s18, 1
        %s1648 = scalar_select %p1647, %s18, 1
        %s1649 = smul.addr %s1648, 8
        %s1650 = smul.addr %s1649, 4
        %s1651 = scalar_lea.vmem %s4, %s1650
      $region52: #{res_bottleneck_block.5} parent=47 // pred_fallthru
        _
      // Predicated region
      $region53: #{res_bottleneck_block.5} parent=47 // pred_check
        %p1652 = pneg %p156
      $region54: #{res_bottleneck_block.5} parent=47 // pred_check_branch
        %1654 = sbr.rel (%p1652) target = $region56
      $region55: #{res_bottleneck_block.5} parent=47 // pred_region
        %p1655 = scmp.lt.s32.totalorder %s18, 1
        %s1656 = scalar_select %p1655, %s18, 1
        %s1657 = scalar_lea.vmem %s5, %s1656
      $region56: #{res_bottleneck_block.5} parent=47 // pred_fallthru
        _
    $region48: #{res_bottleneck_block.5} parent=5 // pred_fallthru
      _
  $region6: #{res_bottleneck_block.5} parent=0 // loop_footer
    %s16 = sadd.s32 1, %s12
  $region7: #{res_bottleneck_block.5} parent=0 // loop_footer_branch
    %11 = sbr.rel target = $region3
  $region8: #{res_bottleneck_block.5} parent=0 // loop_exit
    _

</llo_original>
